<compile_context>
chip_gen: v7x
topology: tpu7x:2x2x1
jax: 0.10.0
libtpu: 0.0.40
codegen_flags: <defaults>
</compile_context>

<pallas_src>
import functools
import math

import jax
import jax.numpy as jnp
import numpy as np
from jax import lax
from jax.experimental import pallas as pl
from jax.experimental.pallas import tpu as pltpu


# dtype for the (N,N)-sized adjacency / attention / pooling matmuls (bf16 MXU, f32 acc).
_MXU_DTYPE = jnp.bfloat16


def _vmem_spec():
    return pl.BlockSpec(memory_space=pltpu.MemorySpace.VMEM)


def _smem_spec():
    return pl.BlockSpec(memory_space=pltpu.MemorySpace.SMEM)


def _compiler_params(operands, out_shapes):
    """vmem_limit_bytes from the actual footprint, capped generation-aware (<75% physical)."""
    def nbytes(a):
        dt = jnp.dtype(a.dtype) if hasattr(a, "dtype") else jnp.dtype(jnp.float32)
        return int(np.prod(a.shape)) * dt.itemsize

    footprint = sum(nbytes(a) for a in operands) + sum(nbytes(s) for s in out_shapes)
    try:
        cap = int(pltpu.get_tpu_info().vmem_capacity_bytes)
    except Exception:  # pragma: no cover - conservative fallback (v7x-sized)
        cap = 64 * 2**20
    # ~8x headroom for live f32/bf16 intermediates (edge, cin, att, bf16 copies).
    limit = int(min(int(0.75 * cap), max(4 * 2**20, 8 * footprint)))
    return pltpu.CompilerParams(vmem_limit_bytes=limit)


# --------------------------------- fused kernel --------------------------------

def _make_fused_kernel(num_layers, inv_temperature):
    """Builds the single fused forward kernel (layer loop unrolled at trace time)."""

    def kernel(*refs):
        sc_ref = refs[0]                       # SMEM scalars: [es1, es2, scale, (6 per layer)]
        x_ref, adj_ref = refs[1], refs[2]
        w1, b1, w2, b2 = refs[3], refs[4], refs[5], refs[6]
        lrefs = refs[7:7 + 8 * num_layers]
        outs = refs[7 + 8 * num_layers:]
        z_outs = outs[:1 + num_layers]         # encoder z + one coarsened z per layer
        root_out = outs[1 + num_layers]
        ass_outs = outs[2 + num_layers:]

        # ---- trace-time-cached time-lane mask (iota built once per distinct shape) ----
        mask_cache = {}

        def tmask(shape):
            if shape not in mask_cache:
                mask_cache[shape] = lax.broadcasted_iota(jnp.int32, shape, 1) == 0
            return mask_cache[shape]

        def sigmoid(v):
            return 1.0 / (1.0 + jnp.exp(-v))

        def l_normalize(s):
            # s * rsqrt(|<s,s>_L|),  <s,s>_L = -s0^2 + sum_{i>0} s_i^2
            s0 = s[:, :1]
            inner = jnp.sum(s * s, axis=-1, keepdims=True) - 2.0 * s0 * s0
            return s * lax.rsqrt(jnp.maximum(jnp.abs(inner), 1e-8))

        def l_linear(v, w_t_ref, b_ref, exp_scale, use_relu):
            # LorentzLinear: (optional relu) -> affine -> re-project onto the hyperboloid.
            if use_relu:
                v = jnp.maximum(v, 0.0)
            h = jnp.dot(v, w_t_ref[...], preferred_element_type=jnp.float32) + b_ref[...]
            h0 = h[:, :1]
            time = sigmoid(h0) * exp_scale + 1.1
            space_sq = jnp.maximum(jnp.sum(h * h, axis=-1, keepdims=True) - h0 * h0, 1e-8)
            factor = jnp.sqrt(time * time - 1.0) * lax.rsqrt(space_sq)
            return jnp.where(tmask(h.shape), time, h * factor)

        # ------------------------------ GraphEncoder -------------------------------
        x = x_ref[...]                         # (N, F+1), time column is zero
        m_x = tmask(x.shape)

        # Lorentz expmap at the origin (k = 1); time column is zero so sum(x*x) == |space|^2.
        r2 = jnp.maximum(jnp.sum(x * x, axis=-1, keepdims=True), 1e-8)
        inv_r = lax.rsqrt(r2)
        r = r2 * inv_r                         # = sqrt(r2)
        e_pos = jnp.exp(r)
        e_neg = pl.reciprocal(e_pos, approx=True)   # exp(-r) via EUP reciprocal
        x = jnp.where(m_x, 0.5 * (e_pos + e_neg), 0.5 * (e_pos - e_neg) * inv_r * x)

        adj = adj_ref[...]
        adj_bf = adj.astype(_MXU_DTYPE)        # hoisted: reused by both aggs and layer 0

        h = l_linear(x, w1, b1, sc_ref[0], use_relu=False)
        h = l_normalize(jnp.dot(adj_bf, h.astype(_MXU_DTYPE),
                                preferred_element_type=jnp.float32))
        h = l_linear(h, w2, b2, sc_ref[1], use_relu=True)
        z = l_normalize(jnp.dot(adj_bf, h.astype(_MXU_DTYPE),
                                preferred_element_type=jnp.float32))

        # to_poincare -> L2 normalize * clamp(scale) -> from_poincare (k = 1)
        m_z = tmask(z.shape)
        z0 = z[:, :1]
        p = jnp.where(m_z, 0.0, z) * (1.0 / (z0 + 1.0))
        p = p * lax.rsqrt(jnp.maximum(jnp.sum(p * p, axis=-1, keepdims=True), 1e-24))
        p = p * sc_ref[2]
        nsq = jnp.sum(p * p, axis=-1, keepdims=True)
        inv_den = 1.0 / (1.0 - nsq + 1e-6)
        z = jnp.where(m_z, (1.0 + nsq) * inv_den, 2.0 * p * inv_den)
        z_outs[0][...] = z

        # -------------------------------- LSENet layers ------------------------------
        edge = adj
        edge_bf = adj_bf
        for li in range(num_layers):
            wp, bp, wa, ba, wq, bq, wk, bk = lrefs[8 * li: 8 * li + 8]
            s = 3 + 6 * li   # [proj es, assign es, query es, key es, 1/att_scale, att_bias]

            # LorentzAssignment: assign_linear(proj(z)) aggregated over the graph
            proj = l_linear(z, wp, bp, sc_ref[s + 0], use_relu=False)
            a_lin = l_linear(proj, wa, ba, sc_ref[s + 1], use_relu=True)
            a_agg = l_normalize(jnp.dot(edge_bf, a_lin.astype(_MXU_DTYPE),
                                        preferred_element_type=jnp.float32))
            # TODO(synk): large-N path -- keep width c+1 and mask logit lane 0 to -inf
            # instead of this lane-offset slice (fine while c is tiny).
            ass_feat = a_agg[:, 1:]

            # attention over the graph: sigmoid((2 + 2*cinner(q,k)) / s + b) * edge
            q = l_linear(z, wq, bq, sc_ref[s + 2], use_relu=False)
            k = l_linear(z, wk, bk, sc_ref[s + 3], use_relu=False)
            q_m = jnp.where(tmask(q.shape), -q, q)            # negate Lorentz time axis
            cin = lax.dot_general(q_m, k, (((1,), (1,)), ((), ())),       # q @ k^T
                                  preferred_element_type=jnp.float32)
            att = sigmoid((2.0 + 2.0 * cin) * sc_ref[s + 4] + sc_ref[s + 5]) * edge

            # soft assignment: softmax((att @ ass_feat) / temperature)
            logits = jnp.dot(att.astype(_MXU_DTYPE), ass_feat.astype(_MXU_DTYPE),
                             preferred_element_type=jnp.float32) * inv_temperature
            logits = logits - jnp.max(logits, axis=-1, keepdims=True)
            e = jnp.exp(logits)
            ass = e * pl.reciprocal(jnp.sum(e, axis=-1, keepdims=True), approx=True)

            # coarsening: Lorentz midpoint of assigned nodes (small matmul, kept f32)
            z = l_normalize(lax.dot_general(ass, z, (((0,), (0,)), ((), ())),  # ass^T @ z
                                            preferred_element_type=jnp.float32))
            z_outs[li + 1][...] = z
            ass_outs[li][...] = ass

            # adjacency pooling (ass^T @ edge @ ass), skipped for the last layer
            # (the module discards the final coarsened adjacency).
            if li + 1 < num_layers:
                ass_bf = ass.astype(_MXU_DTYPE)               # hoisted: reused below
                tmp = lax.dot_general(ass_bf, edge_bf, (((0,), (0,)), ((), ())),
                                      preferred_element_type=jnp.float32)
                edge = jnp.dot(tmp.astype(_MXU_DTYPE), ass_bf,
                               preferred_element_type=jnp.float32)
                edge_bf = edge.astype(_MXU_DTYPE)

        # Frechet mean of the top level (tree root), computed once.
        root_out[...] = l_normalize(jnp.sum(z, axis=0, keepdims=True))

    return kernel


# ------------------------------ parameter setup -------------------------------

def _init_lorentz_linear(key, in_f, out_f, scale=10.0):
    # LorentzLinear.reset_parameters: U(-1/sqrt(out), 1/sqrt(out)), weight column 0
    # (time input) zeroed, bias = 0.  The learnable scale is stored pre-exponentiated
    # (host fold of exp(log(scale)) = scale).
    stdv = 1.0 / math.sqrt(out_f)
    w = jax.random.uniform(key, (out_f, in_f), jnp.float32, -stdv, stdv)
    w = w.at[:, 0].set(0.0)
    return {
        "w_t": jnp.transpose(w),                         # (in_f, out_f), pre-transposed
        "b": jnp.zeros((1, out_f), jnp.float32),
        "exp_scale": jnp.asarray(scale, jnp.float32),
    }


def init_lsenet_params(key, in_features, hidden_dim_enc, hidden_features,
                       num_nodes, height, embed_dim):
    decay_rate = int(np.exp(np.log(num_nodes) / height))
    max_nums = [int(num_nodes / decay_rate ** i) for i in range(1, height)]
    keys = jax.random.split(key, 2 + 4 * (height - 1))
    params = {
        "scale": jnp.asarray(0.999, jnp.float32),
        "enc1": _init_lorentz_linear(keys[0], in_features + 1, hidden_dim_enc),
        "enc2": _init_lorentz_linear(keys[1], hidden_dim_enc, embed_dim + 1),
        "layers": [],
        "max_nums": max_nums,
    }
    d = embed_dim + 1
    for i in range(height - 1):
        k0, k1, k2, k3 = keys[2 + 4 * i: 6 + 4 * i]
        params["layers"].append({
            "proj": _init_lorentz_linear(k0, d, hidden_features),
            "assign": _init_lorentz_linear(k1, hidden_features, max_nums[i] + 1),
            "query": _init_lorentz_linear(k2, d, d),
            "key": _init_lorentz_linear(k3, d, d),
            "att_bias": jnp.asarray(20.0, jnp.float32),
            "att_scale": jnp.asarray(math.sqrt(d), jnp.float32),
        })
    return params


# ---------------------------------- forward -----------------------------------

def lsenet_forward(params, x, adj, height, temperature):
    num_layers = len(params["layers"])
    inv_temperature = 1.0 / float(temperature)            # folded on the host (static)

    n = x.shape[0]
    x = jnp.concatenate([jnp.zeros((n, 1), x.dtype), x], axis=1)   # zero Lorentz time col

    enc1, enc2 = params["enc1"], params["enc2"]
    d = enc2["w_t"].shape[1]

    scalars = [enc1["exp_scale"], enc2["exp_scale"],
               jnp.clip(params["scale"], 0.01, 0.999)]     # host-folded clamp
    operands = [x, adj, enc1["w_t"], enc1["b"], enc2["w_t"], enc2["b"]]

    out_shapes = [jax.ShapeDtypeStruct((n, d), jnp.float32)]       # encoder z
    sizes = [n]
    for lp in params["layers"]:
        scalars += [lp["proj"]["exp_scale"], lp["assign"]["exp_scale"],
                    lp["query"]["exp_scale"], lp["key"]["exp_scale"],
                    1.0 / lp["att_scale"], lp["att_bias"]]         # host-folded 1/scale
        operands += [lp["proj"]["w_t"], lp["proj"]["b"],
                     lp["assign"]["w_t"], lp["assign"]["b"],
                     lp["query"]["w_t"], lp["query"]["b"],
                     lp["key"]["w_t"], lp["key"]["b"]]
        c = lp["assign"]["w_t"].shape[1] - 1
        out_shapes.append(jax.ShapeDtypeStruct((c, d), jnp.float32))   # coarsened nodes
        sizes.append(c)
    out_shapes.append(jax.ShapeDtypeStruct((1, d), jnp.float32))       # Frechet-mean root
    for i in range(num_layers):
        out_shapes.append(jax.ShapeDtypeStruct((sizes[i], sizes[i + 1]), jnp.float32))

    scalar_vec = jnp.stack([jnp.asarray(s, jnp.float32).reshape(()) for s in scalars])

    kernel = _make_fused_kernel(num_layers, inv_temperature)
    outs = pl.pallas_call(
        kernel,
        out_shape=tuple(out_shapes),
        in_specs=[_smem_spec()] + [_vmem_spec()] * len(operands),
        out_specs=tuple(_vmem_spec() for _ in out_shapes),
        compiler_params=_compiler_params(operands, out_shapes),
    )(scalar_vec, *operands)

    z_levels = outs[:1 + num_layers]
    root = outs[1 + num_layers]
    ass_levels = outs[2 + num_layers:]

    tree = {height: z_levels[0]}
    assignments = {}
    for i in range(num_layers):
        tree[height - i - 1] = z_levels[i + 1]
        assignments[height - i] = ass_levels[i]
    tree[0] = root
    assignments[1] = jnp.ones((sizes[-1], 1), jnp.float32)
    return tree, assignments


# ------------------------------------ main -------------------------------------

if __name__ == "__main__":
    key = jax.random.PRNGKey(0)
    num_nodes, in_features = 32, 16
    hidden_dim_enc, hidden_features, embed_dim = 32, 32, 16
    height, temperature = 3, 0.1

    k_x, k_adj, k_p = jax.random.split(key, 3)
    x = 0.1 * jax.random.normal(k_x, (num_nodes, in_features), jnp.float32)

    a = (jax.random.uniform(k_adj, (num_nodes, num_nodes)) < 0.2).astype(jnp.float32)
    a = jnp.maximum(a, a.T) + jnp.eye(num_nodes, dtype=jnp.float32)
    adj = a / jnp.sum(a, axis=-1, keepdims=True)           # dense row-normalized adjacency

    params = init_lsenet_params(k_p, in_features, hidden_dim_enc, hidden_features,
                                num_nodes, height, embed_dim)

    tree, assignments = lsenet_forward(params, x, adj, height, temperature)
    jax.block_until_ready((tree, assignments))

    # sanity: shapes of the hierarchy
    assert tree[height].shape == (num_nodes, embed_dim + 1)
    assert tree[0].shape == (1, embed_dim + 1)
    assert assignments[height].shape == (num_nodes, params["max_nums"][0])
    assert assignments[1].shape == (params["max_nums"][-1], 1)
    print("KERNEL_OK")
</pallas_src>

<mosaic_0001>
module attributes {stable_mosaic.version = 11 : i64} {
  func.func @kernel(%arg0: memref<15xf32, #tpu.memory_space<smem>>, %arg1: memref<32x17xf32, #tpu.memory_space<vmem>>, %arg2: memref<32x32xf32, #tpu.memory_space<vmem>>, %arg3: memref<17x32xf32, #tpu.memory_space<vmem>>, %arg4: memref<1x32xf32, #tpu.memory_space<vmem>>, %arg5: memref<32x17xf32, #tpu.memory_space<vmem>>, %arg6: memref<1x17xf32, #tpu.memory_space<vmem>>, %arg7: memref<17x32xf32, #tpu.memory_space<vmem>>, %arg8: memref<1x32xf32, #tpu.memory_space<vmem>>, %arg9: memref<32x11xf32, #tpu.memory_space<vmem>>, %arg10: memref<1x11xf32, #tpu.memory_space<vmem>>, %arg11: memref<17x17xf32, #tpu.memory_space<vmem>>, %arg12: memref<1x17xf32, #tpu.memory_space<vmem>>, %arg13: memref<17x17xf32, #tpu.memory_space<vmem>>, %arg14: memref<1x17xf32, #tpu.memory_space<vmem>>, %arg15: memref<17x32xf32, #tpu.memory_space<vmem>>, %arg16: memref<1x32xf32, #tpu.memory_space<vmem>>, %arg17: memref<32x4xf32, #tpu.memory_space<vmem>>, %arg18: memref<1x4xf32, #tpu.memory_space<vmem>>, %arg19: memref<17x17xf32, #tpu.memory_space<vmem>>, %arg20: memref<1x17xf32, #tpu.memory_space<vmem>>, %arg21: memref<17x17xf32, #tpu.memory_space<vmem>>, %arg22: memref<1x17xf32, #tpu.memory_space<vmem>>, %arg23: memref<32x17xf32, #tpu.memory_space<vmem>>, %arg24: memref<10x17xf32, #tpu.memory_space<vmem>>, %arg25: memref<3x17xf32, #tpu.memory_space<vmem>>, %arg26: memref<1x17xf32, #tpu.memory_space<vmem>>, %arg27: memref<32x10xf32, #tpu.memory_space<vmem>>, %arg28: memref<10x3xf32, #tpu.memory_space<vmem>>) attributes {dimension_semantics = [], scalar_prefetch = 0 : i64, scratch_operands = 0 : i64, tpu.core_type = #tpu.core_type<tc>} {
    %c0 = arith.constant 0 : index
    %c0_0 = arith.constant 0 : index
    %0 = vector.load %arg1[%c0, %c0_0] : memref<32x17xf32, #tpu.memory_space<vmem>>, vector<32x17xf32>
    %1 = tpu.iota {dimensions = array<i32: 1>} : vector<32x17xi32>
    %c0_i32 = arith.constant 0 : i32
    %2 = vector.broadcast %c0_i32 : i32 to vector<32x17xi32>
    %3 = arith.cmpi eq, %1, %2 : vector<32x17xi32>
    %4 = arith.mulf %0, %0 : vector<32x17xf32>
    %cst = arith.constant dense<0.000000e+00> : vector<32xf32>
    %5 = vector.multi_reduction <add>, %4, %cst [1] : vector<32x17xf32> to vector<32xf32>
    %6 = vector.shape_cast %5 : vector<32xf32> to vector<32x1xf32>
    %cst_1 = arith.constant 9.99999993E-9 : f32
    %7 = vector.broadcast %cst_1 : f32 to vector<32x1xf32>
    %8 = arith.maximumf %6, %7 : vector<32x1xf32>
    %9 = math.rsqrt %8 : vector<32x1xf32>
    %10 = arith.mulf %8, %9 : vector<32x1xf32>
    %11 = math.exp %10 : vector<32x1xf32>
    %12 = tpu.reciprocal %11 {approx = true} : vector<32x1xf32> -> vector<32x1xf32>
    %13 = arith.addf %11, %12 : vector<32x1xf32>
    %cst_2 = arith.constant 5.000000e-01 : f32
    %14 = vector.broadcast %cst_2 : f32 to vector<32x1xf32>
    %15 = arith.mulf %14, %13 : vector<32x1xf32>
    %16 = arith.subf %11, %12 : vector<32x1xf32>
    %cst_3 = arith.constant 5.000000e-01 : f32
    %17 = vector.broadcast %cst_3 : f32 to vector<32x1xf32>
    %18 = arith.mulf %17, %16 : vector<32x1xf32>
    %19 = arith.mulf %18, %9 : vector<32x1xf32>
    %20 = vector.broadcast %19 : vector<32x1xf32> to vector<32x17xf32>
    %21 = arith.mulf %20, %0 : vector<32x17xf32>
    %22 = vector.shape_cast %15 : vector<32x1xf32> to vector<32x1xf32>
    %23 = vector.broadcast %22 : vector<32x1xf32> to vector<32x17xf32>
    %24 = arith.select %3, %23, %21 : vector<32x17xi1>, vector<32x17xf32>
    %c0_4 = arith.constant 0 : index
    %c0_5 = arith.constant 0 : index
    %25 = vector.load %arg2[%c0_4, %c0_5] : memref<32x32xf32, #tpu.memory_space<vmem>>, vector<32x32xf32>
    %26 = arith.truncf %25 : vector<32x32xf32> to vector<32x32xbf16>
    %c0_6 = arith.constant 0 : index
    %27 = memref.load %arg0[%c0_6] : memref<15xf32, #tpu.memory_space<smem>>
    %c0_7 = arith.constant 0 : index
    %c0_8 = arith.constant 0 : index
    %28 = vector.load %arg3[%c0_7, %c0_8] : memref<17x32xf32, #tpu.memory_space<vmem>>, vector<17x32xf32>
    %cst_9 = arith.constant dense<0.000000e+00> : vector<32x32xf32>
    %29 = tpu.matmul %24, %28, %cst_9 {dimension_numbers = #tpu.dot_dimension_numbers<[1], [0], [0], [1], [0, 0, 1, 1], [], []>} : vector<32x17xf32>, vector<17x32xf32>, vector<32x32xf32> -> vector<32x32xf32>
    %c0_10 = arith.constant 0 : index
    %c0_11 = arith.constant 0 : index
    %30 = vector.load %arg4[%c0_10, %c0_11] : memref<1x32xf32, #tpu.memory_space<vmem>>, vector<1x32xf32>
    %31 = vector.broadcast %30 : vector<1x32xf32> to vector<32x32xf32>
    %32 = arith.addf %29, %31 : vector<32x32xf32>
    %33 = vector.extract_strided_slice %32 {offsets = [0, 0], sizes = [32, 1], strides = [1, 1]} : vector<32x32xf32> to vector<32x1xf32>
    %cst_12 = arith.constant 0.000000e+00 : f32
    %34 = vector.broadcast %cst_12 : f32 to vector<32x1xf32>
    %35 = arith.subf %34, %33 : vector<32x1xf32>
    %36 = math.exp %35 : vector<32x1xf32>
    %cst_13 = arith.constant 1.000000e+00 : f32
    %37 = vector.broadcast %cst_13 : f32 to vector<32x1xf32>
    %38 = arith.addf %37, %36 : vector<32x1xf32>
    %cst_14 = arith.constant 1.000000e+00 : f32
    %39 = vector.broadcast %cst_14 : f32 to vector<32x1xf32>
    %40 = arith.divf %39, %38 : vector<32x1xf32>
    %41 = vector.broadcast %27 : f32 to vector<32x1xf32>
    %42 = arith.mulf %40, %41 : vector<32x1xf32>
    %cst_15 = arith.constant 1.100000e+00 : f32
    %43 = vector.broadcast %cst_15 : f32 to vector<32x1xf32>
    %44 = arith.addf %42, %43 : vector<32x1xf32>
    %45 = arith.mulf %32, %32 : vector<32x32xf32>
    %cst_16 = arith.constant dense<0.000000e+00> : vector<32xf32>
    %46 = vector.multi_reduction <add>, %45, %cst_16 [1] : vector<32x32xf32> to vector<32xf32>
    %47 = vector.shape_cast %46 : vector<32xf32> to vector<32x1xf32>
    %48 = arith.mulf %33, %33 : vector<32x1xf32>
    %49 = arith.subf %47, %48 : vector<32x1xf32>
    %cst_17 = arith.constant 9.99999993E-9 : f32
    %50 = vector.broadcast %cst_17 : f32 to vector<32x1xf32>
    %51 = arith.maximumf %49, %50 : vector<32x1xf32>
    %52 = arith.mulf %44, %44 : vector<32x1xf32>
    %cst_18 = arith.constant 1.000000e+00 : f32
    %53 = vector.broadcast %cst_18 : f32 to vector<32x1xf32>
    %54 = arith.subf %52, %53 : vector<32x1xf32>
    %55 = math.sqrt %54 : vector<32x1xf32>
    %56 = math.rsqrt %51 : vector<32x1xf32>
    %57 = arith.mulf %55, %56 : vector<32x1xf32>
    %58 = tpu.iota {dimensions = array<i32: 1>} : vector<32x32xi32>
    %c0_i32_19 = arith.constant 0 : i32
    %59 = vector.broadcast %c0_i32_19 : i32 to vector<32x32xi32>
    %60 = arith.cmpi eq, %58, %59 : vector<32x32xi32>
    %61 = vector.broadcast %57 : vector<32x1xf32> to vector<32x32xf32>
    %62 = arith.mulf %32, %61 : vector<32x32xf32>
    %63 = vector.shape_cast %44 : vector<32x1xf32> to vector<32x1xf32>
    %64 = vector.broadcast %63 : vector<32x1xf32> to vector<32x32xf32>
    %65 = arith.select %60, %64, %62 : vector<32x32xi1>, vector<32x32xf32>
    %66 = arith.truncf %65 : vector<32x32xf32> to vector<32x32xbf16>
    %cst_20 = arith.constant dense<0.000000e+00> : vector<32x32xf32>
    %67 = tpu.matmul %26, %66, %cst_20 {dimension_numbers = #tpu.dot_dimension_numbers<[1], [0], [0], [1], [0, 0, 1, 1], [], []>} : vector<32x32xbf16>, vector<32x32xbf16>, vector<32x32xf32> -> vector<32x32xf32>
    %68 = vector.extract_strided_slice %67 {offsets = [0, 0], sizes = [32, 1], strides = [1, 1]} : vector<32x32xf32> to vector<32x1xf32>
    %69 = arith.mulf %67, %67 : vector<32x32xf32>
    %cst_21 = arith.constant dense<0.000000e+00> : vector<32xf32>
    %70 = vector.multi_reduction <add>, %69, %cst_21 [1] : vector<32x32xf32> to vector<32xf32>
    %71 = vector.shape_cast %70 : vector<32xf32> to vector<32x1xf32>
    %cst_22 = arith.constant 2.000000e+00 : f32
    %72 = vector.broadcast %cst_22 : f32 to vector<32x1xf32>
    %73 = arith.mulf %72, %68 : vector<32x1xf32>
    %74 = arith.mulf %73, %68 : vector<32x1xf32>
    %75 = arith.subf %71, %74 : vector<32x1xf32>
    %76 = math.absf %75 : vector<32x1xf32>
    %cst_23 = arith.constant 9.99999993E-9 : f32
    %77 = vector.broadcast %cst_23 : f32 to vector<32x1xf32>
    %78 = arith.maximumf %76, %77 : vector<32x1xf32>
    %79 = math.rsqrt %78 : vector<32x1xf32>
    %80 = vector.broadcast %79 : vector<32x1xf32> to vector<32x32xf32>
    %81 = arith.mulf %67, %80 : vector<32x32xf32>
    %c1 = arith.constant 1 : index
    %82 = memref.load %arg0[%c1] : memref<15xf32, #tpu.memory_space<smem>>
    %cst_24 = arith.constant 0.000000e+00 : f32
    %83 = vector.broadcast %cst_24 : f32 to vector<32x32xf32>
    %84 = arith.maximumf %81, %83 : vector<32x32xf32>
    %c0_25 = arith.constant 0 : index
    %c0_26 = arith.constant 0 : index
    %85 = vector.load %arg5[%c0_25, %c0_26] : memref<32x17xf32, #tpu.memory_space<vmem>>, vector<32x17xf32>
    %cst_27 = arith.constant dense<0.000000e+00> : vector<32x17xf32>
    %86 = tpu.matmul %84, %85, %cst_27 {dimension_numbers = #tpu.dot_dimension_numbers<[1], [0], [0], [1], [0, 0, 1, 1], [], []>} : vector<32x32xf32>, vector<32x17xf32>, vector<32x17xf32> -> vector<32x17xf32>
    %c0_28 = arith.constant 0 : index
    %c0_29 = arith.constant 0 : index
    %87 = vector.load %arg6[%c0_28, %c0_29] : memref<1x17xf32, #tpu.memory_space<vmem>>, vector<1x17xf32>
    %88 = vector.broadcast %87 : vector<1x17xf32> to vector<32x17xf32>
    %89 = arith.addf %86, %88 : vector<32x17xf32>
    %90 = vector.extract_strided_slice %89 {offsets = [0, 0], sizes = [32, 1], strides = [1, 1]} : vector<32x17xf32> to vector<32x1xf32>
    %cst_30 = arith.constant 0.000000e+00 : f32
    %91 = vector.broadcast %cst_30 : f32 to vector<32x1xf32>
    %92 = arith.subf %91, %90 : vector<32x1xf32>
    %93 = math.exp %92 : vector<32x1xf32>
    %cst_31 = arith.constant 1.000000e+00 : f32
    %94 = vector.broadcast %cst_31 : f32 to vector<32x1xf32>
    %95 = arith.addf %94, %93 : vector<32x1xf32>
    %cst_32 = arith.constant 1.000000e+00 : f32
    %96 = vector.broadcast %cst_32 : f32 to vector<32x1xf32>
    %97 = arith.divf %96, %95 : vector<32x1xf32>
    %98 = vector.broadcast %82 : f32 to vector<32x1xf32>
    %99 = arith.mulf %97, %98 : vector<32x1xf32>
    %cst_33 = arith.constant 1.100000e+00 : f32
    %100 = vector.broadcast %cst_33 : f32 to vector<32x1xf32>
    %101 = arith.addf %99, %100 : vector<32x1xf32>
    %102 = arith.mulf %89, %89 : vector<32x17xf32>
    %cst_34 = arith.constant dense<0.000000e+00> : vector<32xf32>
    %103 = vector.multi_reduction <add>, %102, %cst_34 [1] : vector<32x17xf32> to vector<32xf32>
    %104 = vector.shape_cast %103 : vector<32xf32> to vector<32x1xf32>
    %105 = arith.mulf %90, %90 : vector<32x1xf32>
    %106 = arith.subf %104, %105 : vector<32x1xf32>
    %cst_35 = arith.constant 9.99999993E-9 : f32
    %107 = vector.broadcast %cst_35 : f32 to vector<32x1xf32>
    %108 = arith.maximumf %106, %107 : vector<32x1xf32>
    %109 = arith.mulf %101, %101 : vector<32x1xf32>
    %cst_36 = arith.constant 1.000000e+00 : f32
    %110 = vector.broadcast %cst_36 : f32 to vector<32x1xf32>
    %111 = arith.subf %109, %110 : vector<32x1xf32>
    %112 = math.sqrt %111 : vector<32x1xf32>
    %113 = math.rsqrt %108 : vector<32x1xf32>
    %114 = arith.mulf %112, %113 : vector<32x1xf32>
    %115 = vector.broadcast %114 : vector<32x1xf32> to vector<32x17xf32>
    %116 = arith.mulf %89, %115 : vector<32x17xf32>
    %117 = vector.shape_cast %101 : vector<32x1xf32> to vector<32x1xf32>
    %118 = vector.broadcast %117 : vector<32x1xf32> to vector<32x17xf32>
    %119 = arith.select %3, %118, %116 : vector<32x17xi1>, vector<32x17xf32>
    %120 = arith.truncf %119 : vector<32x17xf32> to vector<32x17xbf16>
    %cst_37 = arith.constant dense<0.000000e+00> : vector<32x17xf32>
    %121 = tpu.matmul %26, %120, %cst_37 {dimension_numbers = #tpu.dot_dimension_numbers<[1], [0], [0], [1], [0, 0, 1, 1], [], []>} : vector<32x32xbf16>, vector<32x17xbf16>, vector<32x17xf32> -> vector<32x17xf32>
    %122 = vector.extract_strided_slice %121 {offsets = [0, 0], sizes = [32, 1], strides = [1, 1]} : vector<32x17xf32> to vector<32x1xf32>
    %123 = arith.mulf %121, %121 : vector<32x17xf32>
    %cst_38 = arith.constant dense<0.000000e+00> : vector<32xf32>
    %124 = vector.multi_reduction <add>, %123, %cst_38 [1] : vector<32x17xf32> to vector<32xf32>
    %125 = vector.shape_cast %124 : vector<32xf32> to vector<32x1xf32>
    %cst_39 = arith.constant 2.000000e+00 : f32
    %126 = vector.broadcast %cst_39 : f32 to vector<32x1xf32>
    %127 = arith.mulf %126, %122 : vector<32x1xf32>
    %128 = arith.mulf %127, %122 : vector<32x1xf32>
    %129 = arith.subf %125, %128 : vector<32x1xf32>
    %130 = math.absf %129 : vector<32x1xf32>
    %cst_40 = arith.constant 9.99999993E-9 : f32
    %131 = vector.broadcast %cst_40 : f32 to vector<32x1xf32>
    %132 = arith.maximumf %130, %131 : vector<32x1xf32>
    %133 = math.rsqrt %132 : vector<32x1xf32>
    %134 = vector.broadcast %133 : vector<32x1xf32> to vector<32x17xf32>
    %135 = arith.mulf %121, %134 : vector<32x17xf32>
    %136 = vector.extract_strided_slice %135 {offsets = [0, 0], sizes = [32, 1], strides = [1, 1]} : vector<32x17xf32> to vector<32x1xf32>
    %cst_41 = arith.constant 0.000000e+00 : f32
    %137 = vector.broadcast %cst_41 : f32 to vector<32x17xf32>
    %138 = arith.select %3, %137, %135 : vector<32x17xi1>, vector<32x17xf32>
    %cst_42 = arith.constant 1.000000e+00 : f32
    %139 = vector.broadcast %cst_42 : f32 to vector<32x1xf32>
    %140 = arith.addf %136, %139 : vector<32x1xf32>
    %cst_43 = arith.constant 1.000000e+00 : f32
    %141 = vector.broadcast %cst_43 : f32 to vector<32x1xf32>
    %142 = arith.divf %141, %140 : vector<32x1xf32>
    %143 = vector.broadcast %142 : vector<32x1xf32> to vector<32x17xf32>
    %144 = arith.mulf %138, %143 : vector<32x17xf32>
    %145 = arith.mulf %144, %144 : vector<32x17xf32>
    %cst_44 = arith.constant dense<0.000000e+00> : vector<32xf32>
    %146 = vector.multi_reduction <add>, %145, %cst_44 [1] : vector<32x17xf32> to vector<32xf32>
    %147 = vector.shape_cast %146 : vector<32xf32> to vector<32x1xf32>
    %cst_45 = arith.constant 1.000000e-24 : f32
    %148 = vector.broadcast %cst_45 : f32 to vector<32x1xf32>
    %149 = arith.maximumf %147, %148 : vector<32x1xf32>
    %150 = math.rsqrt %149 : vector<32x1xf32>
    %151 = vector.broadcast %150 : vector<32x1xf32> to vector<32x17xf32>
    %152 = arith.mulf %144, %151 : vector<32x17xf32>
    %c2 = arith.constant 2 : index
    %153 = memref.load %arg0[%c2] : memref<15xf32, #tpu.memory_space<smem>>
    %154 = vector.broadcast %153 : f32 to vector<32x17xf32>
    %155 = arith.mulf %152, %154 : vector<32x17xf32>
    %156 = arith.mulf %155, %155 : vector<32x17xf32>
    %cst_46 = arith.constant dense<0.000000e+00> : vector<32xf32>
    %157 = vector.multi_reduction <add>, %156, %cst_46 [1] : vector<32x17xf32> to vector<32xf32>
    %158 = vector.shape_cast %157 : vector<32xf32> to vector<32x1xf32>
    %cst_47 = arith.constant 1.000000e+00 : f32
    %159 = vector.broadcast %cst_47 : f32 to vector<32x1xf32>
    %160 = arith.subf %159, %158 : vector<32x1xf32>
    %cst_48 = arith.constant 9.99999997E-7 : f32
    %161 = vector.broadcast %cst_48 : f32 to vector<32x1xf32>
    %162 = arith.addf %160, %161 : vector<32x1xf32>
    %cst_49 = arith.constant 1.000000e+00 : f32
    %163 = vector.broadcast %cst_49 : f32 to vector<32x1xf32>
    %164 = arith.divf %163, %162 : vector<32x1xf32>
    %cst_50 = arith.constant 1.000000e+00 : f32
    %165 = vector.broadcast %cst_50 : f32 to vector<32x1xf32>
    %166 = arith.addf %165, %158 : vector<32x1xf32>
    %167 = arith.mulf %166, %164 : vector<32x1xf32>
    %cst_51 = arith.constant 2.000000e+00 : f32
    %168 = vector.broadcast %cst_51 : f32 to vector<32x17xf32>
    %169 = arith.mulf %168, %155 : vector<32x17xf32>
    %170 = vector.broadcast %164 : vector<32x1xf32> to vector<32x17xf32>
    %171 = arith.mulf %169, %170 : vector<32x17xf32>
    %172 = vector.shape_cast %167 : vector<32x1xf32> to vector<32x1xf32>
    %173 = vector.broadcast %172 : vector<32x1xf32> to vector<32x17xf32>
    %174 = arith.select %3, %173, %171 : vector<32x17xi1>, vector<32x17xf32>
    %c0_52 = arith.constant 0 : index
    %c0_53 = arith.constant 0 : index
    %175 = vector.load %arg23[%c0_52, %c0_53] : memref<32x17xf32, #tpu.memory_space<vmem>>, vector<32x17xf32>
    tpu.vector_store %arg23[%c0_52, %c0_53], %174 {strides = array<i32>} : memref<32x17xf32, #tpu.memory_space<vmem>>, vector<32x17xf32>,
    %c3 = arith.constant 3 : index
    %176 = memref.load %arg0[%c3] : memref<15xf32, #tpu.memory_space<smem>>
    %c0_54 = arith.constant 0 : index
    %c0_55 = arith.constant 0 : index
    %177 = vector.load %arg7[%c0_54, %c0_55] : memref<17x32xf32, #tpu.memory_space<vmem>>, vector<17x32xf32>
    %cst_56 = arith.constant dense<0.000000e+00> : vector<32x32xf32>
    %178 = tpu.matmul %174, %177, %cst_56 {dimension_numbers = #tpu.dot_dimension_numbers<[1], [0], [0], [1], [0, 0, 1, 1], [], []>} : vector<32x17xf32>, vector<17x32xf32>, vector<32x32xf32> -> vector<32x32xf32>
    %c0_57 = arith.constant 0 : index
    %c0_58 = arith.constant 0 : index
    %179 = vector.load %arg8[%c0_57, %c0_58] : memref<1x32xf32, #tpu.memory_space<vmem>>, vector<1x32xf32>
    %180 = vector.broadcast %179 : vector<1x32xf32> to vector<32x32xf32>
    %181 = arith.addf %178, %180 : vector<32x32xf32>
    %182 = vector.extract_strided_slice %181 {offsets = [0, 0], sizes = [32, 1], strides = [1, 1]} : vector<32x32xf32> to vector<32x1xf32>
    %cst_59 = arith.constant 0.000000e+00 : f32
    %183 = vector.broadcast %cst_59 : f32 to vector<32x1xf32>
    %184 = arith.subf %183, %182 : vector<32x1xf32>
    %185 = math.exp %184 : vector<32x1xf32>
    %cst_60 = arith.constant 1.000000e+00 : f32
    %186 = vector.broadcast %cst_60 : f32 to vector<32x1xf32>
    %187 = arith.addf %186, %185 : vector<32x1xf32>
    %cst_61 = arith.constant 1.000000e+00 : f32
    %188 = vector.broadcast %cst_61 : f32 to vector<32x1xf32>
    %189 = arith.divf %188, %187 : vector<32x1xf32>
    %190 = vector.broadcast %176 : f32 to vector<32x1xf32>
    %191 = arith.mulf %189, %190 : vector<32x1xf32>
    %cst_62 = arith.constant 1.100000e+00 : f32
    %192 = vector.broadcast %cst_62 : f32 to vector<32x1xf32>
    %193 = arith.addf %191, %192 : vector<32x1xf32>
    %194 = arith.mulf %181, %181 : vector<32x32xf32>
    %cst_63 = arith.constant dense<0.000000e+00> : vector<32xf32>
    %195 = vector.multi_reduction <add>, %194, %cst_63 [1] : vector<32x32xf32> to vector<32xf32>
    %196 = vector.shape_cast %195 : vector<32xf32> to vector<32x1xf32>
    %197 = arith.mulf %182, %182 : vector<32x1xf32>
    %198 = arith.subf %196, %197 : vector<32x1xf32>
    %cst_64 = arith.constant 9.99999993E-9 : f32
    %199 = vector.broadcast %cst_64 : f32 to vector<32x1xf32>
    %200 = arith.maximumf %198, %199 : vector<32x1xf32>
    %201 = arith.mulf %193, %193 : vector<32x1xf32>
    %cst_65 = arith.constant 1.000000e+00 : f32
    %202 = vector.broadcast %cst_65 : f32 to vector<32x1xf32>
    %203 = arith.subf %201, %202 : vector<32x1xf32>
    %204 = math.sqrt %203 : vector<32x1xf32>
    %205 = math.rsqrt %200 : vector<32x1xf32>
    %206 = arith.mulf %204, %205 : vector<32x1xf32>
    %207 = vector.broadcast %206 : vector<32x1xf32> to vector<32x32xf32>
    %208 = arith.mulf %181, %207 : vector<32x32xf32>
    %209 = vector.shape_cast %193 : vector<32x1xf32> to vector<32x1xf32>
    %210 = vector.broadcast %209 : vector<32x1xf32> to vector<32x32xf32>
    %211 = arith.select %60, %210, %208 : vector<32x32xi1>, vector<32x32xf32>
    %c4 = arith.constant 4 : index
    %212 = memref.load %arg0[%c4] : memref<15xf32, #tpu.memory_space<smem>>
    %cst_66 = arith.constant 0.000000e+00 : f32
    %213 = vector.broadcast %cst_66 : f32 to vector<32x32xf32>
    %214 = arith.maximumf %211, %213 : vector<32x32xf32>
    %c0_67 = arith.constant 0 : index
    %c0_68 = arith.constant 0 : index
    %215 = vector.load %arg9[%c0_67, %c0_68] : memref<32x11xf32, #tpu.memory_space<vmem>>, vector<32x11xf32>
    %cst_69 = arith.constant dense<0.000000e+00> : vector<32x11xf32>
    %216 = tpu.matmul %214, %215, %cst_69 {dimension_numbers = #tpu.dot_dimension_numbers<[1], [0], [0], [1], [0, 0, 1, 1], [], []>} : vector<32x32xf32>, vector<32x11xf32>, vector<32x11xf32> -> vector<32x11xf32>
    %c0_70 = arith.constant 0 : index
    %c0_71 = arith.constant 0 : index
    %217 = vector.load %arg10[%c0_70, %c0_71] : memref<1x11xf32, #tpu.memory_space<vmem>>, vector<1x11xf32>
    %218 = vector.broadcast %217 : vector<1x11xf32> to vector<32x11xf32>
    %219 = arith.addf %216, %218 : vector<32x11xf32>
    %220 = vector.extract_strided_slice %219 {offsets = [0, 0], sizes = [32, 1], strides = [1, 1]} : vector<32x11xf32> to vector<32x1xf32>
    %cst_72 = arith.constant 0.000000e+00 : f32
    %221 = vector.broadcast %cst_72 : f32 to vector<32x1xf32>
    %222 = arith.subf %221, %220 : vector<32x1xf32>
    %223 = math.exp %222 : vector<32x1xf32>
    %cst_73 = arith.constant 1.000000e+00 : f32
    %224 = vector.broadcast %cst_73 : f32 to vector<32x1xf32>
    %225 = arith.addf %224, %223 : vector<32x1xf32>
    %cst_74 = arith.constant 1.000000e+00 : f32
    %226 = vector.broadcast %cst_74 : f32 to vector<32x1xf32>
    %227 = arith.divf %226, %225 : vector<32x1xf32>
    %228 = vector.broadcast %212 : f32 to vector<32x1xf32>
    %229 = arith.mulf %227, %228 : vector<32x1xf32>
    %cst_75 = arith.constant 1.100000e+00 : f32
    %230 = vector.broadcast %cst_75 : f32 to vector<32x1xf32>
    %231 = arith.addf %229, %230 : vector<32x1xf32>
    %232 = arith.mulf %219, %219 : vector<32x11xf32>
    %cst_76 = arith.constant dense<0.000000e+00> : vector<32xf32>
    %233 = vector.multi_reduction <add>, %232, %cst_76 [1] : vector<32x11xf32> to vector<32xf32>
    %234 = vector.shape_cast %233 : vector<32xf32> to vector<32x1xf32>
    %235 = arith.mulf %220, %220 : vector<32x1xf32>
    %236 = arith.subf %234, %235 : vector<32x1xf32>
    %cst_77 = arith.constant 9.99999993E-9 : f32
    %237 = vector.broadcast %cst_77 : f32 to vector<32x1xf32>
    %238 = arith.maximumf %236, %237 : vector<32x1xf32>
    %239 = arith.mulf %231, %231 : vector<32x1xf32>
    %cst_78 = arith.constant 1.000000e+00 : f32
    %240 = vector.broadcast %cst_78 : f32 to vector<32x1xf32>
    %241 = arith.subf %239, %240 : vector<32x1xf32>
    %242 = math.sqrt %241 : vector<32x1xf32>
    %243 = math.rsqrt %238 : vector<32x1xf32>
    %244 = arith.mulf %242, %243 : vector<32x1xf32>
    %245 = tpu.iota {dimensions = array<i32: 1>} : vector<32x11xi32>
    %c0_i32_79 = arith.constant 0 : i32
    %246 = vector.broadcast %c0_i32_79 : i32 to vector<32x11xi32>
    %247 = arith.cmpi eq, %245, %246 : vector<32x11xi32>
    %248 = vector.broadcast %244 : vector<32x1xf32> to vector<32x11xf32>
    %249 = arith.mulf %219, %248 : vector<32x11xf32>
    %250 = vector.shape_cast %231 : vector<32x1xf32> to vector<32x1xf32>
    %251 = vector.broadcast %250 : vector<32x1xf32> to vector<32x11xf32>
    %252 = arith.select %247, %251, %249 : vector<32x11xi1>, vector<32x11xf32>
    %253 = arith.truncf %252 : vector<32x11xf32> to vector<32x11xbf16>
    %cst_80 = arith.constant dense<0.000000e+00> : vector<32x11xf32>
    %254 = tpu.matmul %26, %253, %cst_80 {dimension_numbers = #tpu.dot_dimension_numbers<[1], [0], [0], [1], [0, 0, 1, 1], [], []>} : vector<32x32xbf16>, vector<32x11xbf16>, vector<32x11xf32> -> vector<32x11xf32>
    %255 = vector.extract_strided_slice %254 {offsets = [0, 0], sizes = [32, 1], strides = [1, 1]} : vector<32x11xf32> to vector<32x1xf32>
    %256 = arith.mulf %254, %254 : vector<32x11xf32>
    %cst_81 = arith.constant dense<0.000000e+00> : vector<32xf32>
    %257 = vector.multi_reduction <add>, %256, %cst_81 [1] : vector<32x11xf32> to vector<32xf32>
    %258 = vector.shape_cast %257 : vector<32xf32> to vector<32x1xf32>
    %cst_82 = arith.constant 2.000000e+00 : f32
    %259 = vector.broadcast %cst_82 : f32 to vector<32x1xf32>
    %260 = arith.mulf %259, %255 : vector<32x1xf32>
    %261 = arith.mulf %260, %255 : vector<32x1xf32>
    %262 = arith.subf %258, %261 : vector<32x1xf32>
    %263 = math.absf %262 : vector<32x1xf32>
    %cst_83 = arith.constant 9.99999993E-9 : f32
    %264 = vector.broadcast %cst_83 : f32 to vector<32x1xf32>
    %265 = arith.maximumf %263, %264 : vector<32x1xf32>
    %266 = math.rsqrt %265 : vector<32x1xf32>
    %267 = vector.broadcast %266 : vector<32x1xf32> to vector<32x11xf32>
    %268 = arith.mulf %254, %267 : vector<32x11xf32>
    %269 = vector.extract_strided_slice %268 {offsets = [0, 1], sizes = [32, 10], strides = [1, 1]} : vector<32x11xf32> to vector<32x10xf32>
    %c5 = arith.constant 5 : index
    %270 = memref.load %arg0[%c5] : memref<15xf32, #tpu.memory_space<smem>>
    %c0_84 = arith.constant 0 : index
    %c0_85 = arith.constant 0 : index
    %271 = vector.load %arg11[%c0_84, %c0_85] : memref<17x17xf32, #tpu.memory_space<vmem>>, vector<17x17xf32>
    %cst_86 = arith.constant dense<0.000000e+00> : vector<32x17xf32>
    %272 = tpu.matmul %174, %271, %cst_86 {dimension_numbers = #tpu.dot_dimension_numbers<[1], [0], [0], [1], [0, 0, 1, 1], [], []>} : vector<32x17xf32>, vector<17x17xf32>, vector<32x17xf32> -> vector<32x17xf32>
    %c0_87 = arith.constant 0 : index
    %c0_88 = arith.constant 0 : index
    %273 = vector.load %arg12[%c0_87, %c0_88] : memref<1x17xf32, #tpu.memory_space<vmem>>, vector<1x17xf32>
    %274 = vector.broadcast %273 : vector<1x17xf32> to vector<32x17xf32>
    %275 = arith.addf %272, %274 : vector<32x17xf32>
    %276 = vector.extract_strided_slice %275 {offsets = [0, 0], sizes = [32, 1], strides = [1, 1]} : vector<32x17xf32> to vector<32x1xf32>
    %cst_89 = arith.constant 0.000000e+00 : f32
    %277 = vector.broadcast %cst_89 : f32 to vector<32x1xf32>
    %278 = arith.subf %277, %276 : vector<32x1xf32>
    %279 = math.exp %278 : vector<32x1xf32>
    %cst_90 = arith.constant 1.000000e+00 : f32
    %280 = vector.broadcast %cst_90 : f32 to vector<32x1xf32>
    %281 = arith.addf %280, %279 : vector<32x1xf32>
    %cst_91 = arith.constant 1.000000e+00 : f32
    %282 = vector.broadcast %cst_91 : f32 to vector<32x1xf32>
    %283 = arith.divf %282, %281 : vector<32x1xf32>
    %284 = vector.broadcast %270 : f32 to vector<32x1xf32>
    %285 = arith.mulf %283, %284 : vector<32x1xf32>
    %cst_92 = arith.constant 1.100000e+00 : f32
    %286 = vector.broadcast %cst_92 : f32 to vector<32x1xf32>
    %287 = arith.addf %285, %286 : vector<32x1xf32>
    %288 = arith.mulf %275, %275 : vector<32x17xf32>
    %cst_93 = arith.constant dense<0.000000e+00> : vector<32xf32>
    %289 = vector.multi_reduction <add>, %288, %cst_93 [1] : vector<32x17xf32> to vector<32xf32>
    %290 = vector.shape_cast %289 : vector<32xf32> to vector<32x1xf32>
    %291 = arith.mulf %276, %276 : vector<32x1xf32>
    %292 = arith.subf %290, %291 : vector<32x1xf32>
    %cst_94 = arith.constant 9.99999993E-9 : f32
    %293 = vector.broadcast %cst_94 : f32 to vector<32x1xf32>
    %294 = arith.maximumf %292, %293 : vector<32x1xf32>
    %295 = arith.mulf %287, %287 : vector<32x1xf32>
    %cst_95 = arith.constant 1.000000e+00 : f32
    %296 = vector.broadcast %cst_95 : f32 to vector<32x1xf32>
    %297 = arith.subf %295, %296 : vector<32x1xf32>
    %298 = math.sqrt %297 : vector<32x1xf32>
    %299 = math.rsqrt %294 : vector<32x1xf32>
    %300 = arith.mulf %298, %299 : vector<32x1xf32>
    %301 = vector.broadcast %300 : vector<32x1xf32> to vector<32x17xf32>
    %302 = arith.mulf %275, %301 : vector<32x17xf32>
    %303 = vector.shape_cast %287 : vector<32x1xf32> to vector<32x1xf32>
    %304 = vector.broadcast %303 : vector<32x1xf32> to vector<32x17xf32>
    %305 = arith.select %3, %304, %302 : vector<32x17xi1>, vector<32x17xf32>
    %c6 = arith.constant 6 : index
    %306 = memref.load %arg0[%c6] : memref<15xf32, #tpu.memory_space<smem>>
    %c0_96 = arith.constant 0 : index
    %c0_97 = arith.constant 0 : index
    %307 = vector.load %arg13[%c0_96, %c0_97] : memref<17x17xf32, #tpu.memory_space<vmem>>, vector<17x17xf32>
    %cst_98 = arith.constant dense<0.000000e+00> : vector<32x17xf32>
    %308 = tpu.matmul %174, %307, %cst_98 {dimension_numbers = #tpu.dot_dimension_numbers<[1], [0], [0], [1], [0, 0, 1, 1], [], []>} : vector<32x17xf32>, vector<17x17xf32>, vector<32x17xf32> -> vector<32x17xf32>
    %c0_99 = arith.constant 0 : index
    %c0_100 = arith.constant 0 : index
    %309 = vector.load %arg14[%c0_99, %c0_100] : memref<1x17xf32, #tpu.memory_space<vmem>>, vector<1x17xf32>
    %310 = vector.broadcast %309 : vector<1x17xf32> to vector<32x17xf32>
    %311 = arith.addf %308, %310 : vector<32x17xf32>
    %312 = vector.extract_strided_slice %311 {offsets = [0, 0], sizes = [32, 1], strides = [1, 1]} : vector<32x17xf32> to vector<32x1xf32>
    %cst_101 = arith.constant 0.000000e+00 : f32
    %313 = vector.broadcast %cst_101 : f32 to vector<32x1xf32>
    %314 = arith.subf %313, %312 : vector<32x1xf32>
    %315 = math.exp %314 : vector<32x1xf32>
    %cst_102 = arith.constant 1.000000e+00 : f32
    %316 = vector.broadcast %cst_102 : f32 to vector<32x1xf32>
    %317 = arith.addf %316, %315 : vector<32x1xf32>
    %cst_103 = arith.constant 1.000000e+00 : f32
    %318 = vector.broadcast %cst_103 : f32 to vector<32x1xf32>
    %319 = arith.divf %318, %317 : vector<32x1xf32>
    %320 = vector.broadcast %306 : f32 to vector<32x1xf32>
    %321 = arith.mulf %319, %320 : vector<32x1xf32>
    %cst_104 = arith.constant 1.100000e+00 : f32
    %322 = vector.broadcast %cst_104 : f32 to vector<32x1xf32>
    %323 = arith.addf %321, %322 : vector<32x1xf32>
    %324 = arith.mulf %311, %311 : vector<32x17xf32>
    %cst_105 = arith.constant dense<0.000000e+00> : vector<32xf32>
    %325 = vector.multi_reduction <add>, %324, %cst_105 [1] : vector<32x17xf32> to vector<32xf32>
    %326 = vector.shape_cast %325 : vector<32xf32> to vector<32x1xf32>
    %327 = arith.mulf %312, %312 : vector<32x1xf32>
    %328 = arith.subf %326, %327 : vector<32x1xf32>
    %cst_106 = arith.constant 9.99999993E-9 : f32
    %329 = vector.broadcast %cst_106 : f32 to vector<32x1xf32>
    %330 = arith.maximumf %328, %329 : vector<32x1xf32>
    %331 = arith.mulf %323, %323 : vector<32x1xf32>
    %cst_107 = arith.constant 1.000000e+00 : f32
    %332 = vector.broadcast %cst_107 : f32 to vector<32x1xf32>
    %333 = arith.subf %331, %332 : vector<32x1xf32>
    %334 = math.sqrt %333 : vector<32x1xf32>
    %335 = math.rsqrt %330 : vector<32x1xf32>
    %336 = arith.mulf %334, %335 : vector<32x1xf32>
    %337 = vector.broadcast %336 : vector<32x1xf32> to vector<32x17xf32>
    %338 = arith.mulf %311, %337 : vector<32x17xf32>
    %339 = vector.shape_cast %323 : vector<32x1xf32> to vector<32x1xf32>
    %340 = vector.broadcast %339 : vector<32x1xf32> to vector<32x17xf32>
    %341 = arith.select %3, %340, %338 : vector<32x17xi1>, vector<32x17xf32>
    %cst_108 = arith.constant 0.000000e+00 : f32
    %342 = vector.broadcast %cst_108 : f32 to vector<32x17xf32>
    %343 = arith.subf %342, %305 : vector<32x17xf32>
    %344 = arith.select %3, %343, %305 : vector<32x17xi1>, vector<32x17xf32>
    %cst_109 = arith.constant dense<0.000000e+00> : vector<32x32xf32>
    %345 = tpu.matmul %344, %341, %cst_109 {dimension_numbers = #tpu.dot_dimension_numbers<[1], [1], [0], [0], [0, 0, 1, 0], [], []>} : vector<32x17xf32>, vector<32x17xf32>, vector<32x32xf32> -> vector<32x32xf32>
    %cst_110 = arith.constant 2.000000e+00 : f32
    %346 = vector.broadcast %cst_110 : f32 to vector<32x32xf32>
    %347 = arith.mulf %346, %345 : vector<32x32xf32>
    %cst_111 = arith.constant 2.000000e+00 : f32
    %348 = vector.broadcast %cst_111 : f32 to vector<32x32xf32>
    %349 = arith.addf %348, %347 : vector<32x32xf32>
    %c7 = arith.constant 7 : index
    %350 = memref.load %arg0[%c7] : memref<15xf32, #tpu.memory_space<smem>>
    %351 = vector.broadcast %350 : f32 to vector<32x32xf32>
    %352 = arith.mulf %349, %351 : vector<32x32xf32>
    %c8 = arith.constant 8 : index
    %353 = memref.load %arg0[%c8] : memref<15xf32, #tpu.memory_space<smem>>
    %354 = vector.broadcast %353 : f32 to vector<32x32xf32>
    %355 = arith.addf %352, %354 : vector<32x32xf32>
    %cst_112 = arith.constant 0.000000e+00 : f32
    %356 = vector.broadcast %cst_112 : f32 to vector<32x32xf32>
    %357 = arith.subf %356, %355 : vector<32x32xf32>
    %358 = math.exp %357 : vector<32x32xf32>
    %cst_113 = arith.constant 1.000000e+00 : f32
    %359 = vector.broadcast %cst_113 : f32 to vector<32x32xf32>
    %360 = arith.addf %359, %358 : vector<32x32xf32>
    %cst_114 = arith.constant 1.000000e+00 : f32
    %361 = vector.broadcast %cst_114 : f32 to vector<32x32xf32>
    %362 = arith.divf %361, %360 : vector<32x32xf32>
    %363 = arith.mulf %362, %25 : vector<32x32xf32>
    %364 = arith.truncf %363 : vector<32x32xf32> to vector<32x32xbf16>
    %365 = arith.truncf %269 : vector<32x10xf32> to vector<32x10xbf16>
    %cst_115 = arith.constant dense<0.000000e+00> : vector<32x10xf32>
    %366 = tpu.matmul %364, %365, %cst_115 {dimension_numbers = #tpu.dot_dimension_numbers<[1], [0], [0], [1], [0, 0, 1, 1], [], []>} : vector<32x32xbf16>, vector<32x10xbf16>, vector<32x10xf32> -> vector<32x10xf32>
    %cst_116 = arith.constant 1.000000e+01 : f32
    %367 = vector.broadcast %cst_116 : f32 to vector<32x10xf32>
    %368 = arith.mulf %366, %367 : vector<32x10xf32>
    %cst_117 = arith.constant dense<0xFF800000> : vector<32xf32>
    %369 = vector.multi_reduction <maximumf>, %368, %cst_117 [1] : vector<32x10xf32> to vector<32xf32>
    %370 = vector.shape_cast %369 : vector<32xf32> to vector<32x1xf32>
    %371 = vector.broadcast %370 : vector<32x1xf32> to vector<32x10xf32>
    %372 = arith.subf %368, %371 : vector<32x10xf32>
    %373 = math.exp %372 : vector<32x10xf32>
    %cst_118 = arith.constant dense<0.000000e+00> : vector<32xf32>
    %374 = vector.multi_reduction <add>, %373, %cst_118 [1] : vector<32x10xf32> to vector<32xf32>
    %375 = vector.shape_cast %374 : vector<32xf32> to vector<32x1xf32>
    %376 = tpu.reciprocal %375 {approx = true} : vector<32x1xf32> -> vector<32x1xf32>
    %377 = vector.broadcast %376 : vector<32x1xf32> to vector<32x10xf32>
    %378 = arith.mulf %373, %377 : vector<32x10xf32>
    %cst_119 = arith.constant dense<0.000000e+00> : vector<10x17xf32>
    %379 = tpu.matmul %378, %174, %cst_119 {dimension_numbers = #tpu.dot_dimension_numbers<[0], [0], [1], [1], [0, 1, 1, 1], [], []>} : vector<32x10xf32>, vector<32x17xf32>, vector<10x17xf32> -> vector<10x17xf32>
    %380 = vector.extract_strided_slice %379 {offsets = [0, 0], sizes = [10, 1], strides = [1, 1]} : vector<10x17xf32> to vector<10x1xf32>
    %381 = arith.mulf %379, %379 : vector<10x17xf32>
    %cst_120 = arith.constant dense<0.000000e+00> : vector<10xf32>
    %382 = vector.multi_reduction <add>, %381, %cst_120 [1] : vector<10x17xf32> to vector<10xf32>
    %383 = vector.shape_cast %382 : vector<10xf32> to vector<10x1xf32>
    %cst_121 = arith.constant 2.000000e+00 : f32
    %384 = vector.broadcast %cst_121 : f32 to vector<10x1xf32>
    %385 = arith.mulf %384, %380 : vector<10x1xf32>
    %386 = arith.mulf %385, %380 : vector<10x1xf32>
    %387 = arith.subf %383, %386 : vector<10x1xf32>
    %388 = math.absf %387 : vector<10x1xf32>
    %cst_122 = arith.constant 9.99999993E-9 : f32
    %389 = vector.broadcast %cst_122 : f32 to vector<10x1xf32>
    %390 = arith.maximumf %388, %389 : vector<10x1xf32>
    %391 = math.rsqrt %390 : vector<10x1xf32>
    %392 = vector.broadcast %391 : vector<10x1xf32> to vector<10x17xf32>
    %393 = arith.mulf %379, %392 : vector<10x17xf32>
    %c0_123 = arith.constant 0 : index
    %c0_124 = arith.constant 0 : index
    %394 = vector.load %arg24[%c0_123, %c0_124] : memref<10x17xf32, #tpu.memory_space<vmem>>, vector<10x17xf32>
    tpu.vector_store %arg24[%c0_123, %c0_124], %393 {strides = array<i32>} : memref<10x17xf32, #tpu.memory_space<vmem>>, vector<10x17xf32>,
    %c0_125 = arith.constant 0 : index
    %c0_126 = arith.constant 0 : index
    %395 = vector.load %arg27[%c0_125, %c0_126] : memref<32x10xf32, #tpu.memory_space<vmem>>, vector<32x10xf32>
    tpu.vector_store %arg27[%c0_125, %c0_126], %378 {strides = array<i32>} : memref<32x10xf32, #tpu.memory_space<vmem>>, vector<32x10xf32>,
    %396 = arith.truncf %378 : vector<32x10xf32> to vector<32x10xbf16>
    %cst_127 = arith.constant dense<0.000000e+00> : vector<10x32xf32>
    %397 = tpu.matmul %396, %26, %cst_127 {dimension_numbers = #tpu.dot_dimension_numbers<[0], [0], [1], [1], [0, 1, 1, 1], [], []>} : vector<32x10xbf16>, vector<32x32xbf16>, vector<10x32xf32> -> vector<10x32xf32>
    %398 = arith.truncf %397 : vector<10x32xf32> to vector<10x32xbf16>
    %cst_128 = arith.constant dense<0.000000e+00> : vector<10x10xf32>
    %399 = tpu.matmul %398, %396, %cst_128 {dimension_numbers = #tpu.dot_dimension_numbers<[1], [0], [0], [1], [0, 0, 1, 1], [], []>} : vector<10x32xbf16>, vector<32x10xbf16>, vector<10x10xf32> -> vector<10x10xf32>
    %400 = arith.truncf %399 : vector<10x10xf32> to vector<10x10xbf16>
    %c9 = arith.constant 9 : index
    %401 = memref.load %arg0[%c9] : memref<15xf32, #tpu.memory_space<smem>>
    %c0_129 = arith.constant 0 : index
    %c0_130 = arith.constant 0 : index
    %402 = vector.load %arg15[%c0_129, %c0_130] : memref<17x32xf32, #tpu.memory_space<vmem>>, vector<17x32xf32>
    %cst_131 = arith.constant dense<0.000000e+00> : vector<10x32xf32>
    %403 = tpu.matmul %393, %402, %cst_131 {dimension_numbers = #tpu.dot_dimension_numbers<[1], [0], [0], [1], [0, 0, 1, 1], [], []>} : vector<10x17xf32>, vector<17x32xf32>, vector<10x32xf32> -> vector<10x32xf32>
    %c0_132 = arith.constant 0 : index
    %c0_133 = arith.constant 0 : index
    %404 = vector.load %arg16[%c0_132, %c0_133] : memref<1x32xf32, #tpu.memory_space<vmem>>, vector<1x32xf32>
    %405 = vector.broadcast %404 : vector<1x32xf32> to vector<10x32xf32>
    %406 = arith.addf %403, %405 : vector<10x32xf32>
    %407 = vector.extract_strided_slice %406 {offsets = [0, 0], sizes = [10, 1], strides = [1, 1]} : vector<10x32xf32> to vector<10x1xf32>
    %cst_134 = arith.constant 0.000000e+00 : f32
    %408 = vector.broadcast %cst_134 : f32 to vector<10x1xf32>
    %409 = arith.subf %408, %407 : vector<10x1xf32>
    %410 = math.exp %409 : vector<10x1xf32>
    %cst_135 = arith.constant 1.000000e+00 : f32
    %411 = vector.broadcast %cst_135 : f32 to vector<10x1xf32>
    %412 = arith.addf %411, %410 : vector<10x1xf32>
    %cst_136 = arith.constant 1.000000e+00 : f32
    %413 = vector.broadcast %cst_136 : f32 to vector<10x1xf32>
    %414 = arith.divf %413, %412 : vector<10x1xf32>
    %415 = vector.broadcast %401 : f32 to vector<10x1xf32>
    %416 = arith.mulf %414, %415 : vector<10x1xf32>
    %cst_137 = arith.constant 1.100000e+00 : f32
    %417 = vector.broadcast %cst_137 : f32 to vector<10x1xf32>
    %418 = arith.addf %416, %417 : vector<10x1xf32>
    %419 = arith.mulf %406, %406 : vector<10x32xf32>
    %cst_138 = arith.constant dense<0.000000e+00> : vector<10xf32>
    %420 = vector.multi_reduction <add>, %419, %cst_138 [1] : vector<10x32xf32> to vector<10xf32>
    %421 = vector.shape_cast %420 : vector<10xf32> to vector<10x1xf32>
    %422 = arith.mulf %407, %407 : vector<10x1xf32>
    %423 = arith.subf %421, %422 : vector<10x1xf32>
    %cst_139 = arith.constant 9.99999993E-9 : f32
    %424 = vector.broadcast %cst_139 : f32 to vector<10x1xf32>
    %425 = arith.maximumf %423, %424 : vector<10x1xf32>
    %426 = arith.mulf %418, %418 : vector<10x1xf32>
    %cst_140 = arith.constant 1.000000e+00 : f32
    %427 = vector.broadcast %cst_140 : f32 to vector<10x1xf32>
    %428 = arith.subf %426, %427 : vector<10x1xf32>
    %429 = math.sqrt %428 : vector<10x1xf32>
    %430 = math.rsqrt %425 : vector<10x1xf32>
    %431 = arith.mulf %429, %430 : vector<10x1xf32>
    %432 = tpu.iota {dimensions = array<i32: 1>} : vector<10x32xi32>
    %c0_i32_141 = arith.constant 0 : i32
    %433 = vector.broadcast %c0_i32_141 : i32 to vector<10x32xi32>
    %434 = arith.cmpi eq, %432, %433 : vector<10x32xi32>
    %435 = vector.broadcast %431 : vector<10x1xf32> to vector<10x32xf32>
    %436 = arith.mulf %406, %435 : vector<10x32xf32>
    %437 = vector.shape_cast %418 : vector<10x1xf32> to vector<10x1xf32>
    %438 = vector.broadcast %437 : vector<10x1xf32> to vector<10x32xf32>
    %439 = arith.select %434, %438, %436 : vector<10x32xi1>, vector<10x32xf32>
    %c10 = arith.constant 10 : index
    %440 = memref.load %arg0[%c10] : memref<15xf32, #tpu.memory_space<smem>>
    %cst_142 = arith.constant 0.000000e+00 : f32
    %441 = vector.broadcast %cst_142 : f32 to vector<10x32xf32>
    %442 = arith.maximumf %439, %441 : vector<10x32xf32>
    %c0_143 = arith.constant 0 : index
    %c0_144 = arith.constant 0 : index
    %443 = vector.load %arg17[%c0_143, %c0_144] : memref<32x4xf32, #tpu.memory_space<vmem>>, vector<32x4xf32>
    %cst_145 = arith.constant dense<0.000000e+00> : vector<10x4xf32>
    %444 = tpu.matmul %442, %443, %cst_145 {dimension_numbers = #tpu.dot_dimension_numbers<[1], [0], [0], [1], [0, 0, 1, 1], [], []>} : vector<10x32xf32>, vector<32x4xf32>, vector<10x4xf32> -> vector<10x4xf32>
    %c0_146 = arith.constant 0 : index
    %c0_147 = arith.constant 0 : index
    %445 = vector.load %arg18[%c0_146, %c0_147] : memref<1x4xf32, #tpu.memory_space<vmem>>, vector<1x4xf32>
    %446 = vector.broadcast %445 : vector<1x4xf32> to vector<10x4xf32>
    %447 = arith.addf %444, %446 : vector<10x4xf32>
    %448 = vector.extract_strided_slice %447 {offsets = [0, 0], sizes = [10, 1], strides = [1, 1]} : vector<10x4xf32> to vector<10x1xf32>
    %cst_148 = arith.constant 0.000000e+00 : f32
    %449 = vector.broadcast %cst_148 : f32 to vector<10x1xf32>
    %450 = arith.subf %449, %448 : vector<10x1xf32>
    %451 = math.exp %450 : vector<10x1xf32>
    %cst_149 = arith.constant 1.000000e+00 : f32
    %452 = vector.broadcast %cst_149 : f32 to vector<10x1xf32>
    %453 = arith.addf %452, %451 : vector<10x1xf32>
    %cst_150 = arith.constant 1.000000e+00 : f32
    %454 = vector.broadcast %cst_150 : f32 to vector<10x1xf32>
    %455 = arith.divf %454, %453 : vector<10x1xf32>
    %456 = vector.broadcast %440 : f32 to vector<10x1xf32>
    %457 = arith.mulf %455, %456 : vector<10x1xf32>
    %cst_151 = arith.constant 1.100000e+00 : f32
    %458 = vector.broadcast %cst_151 : f32 to vector<10x1xf32>
    %459 = arith.addf %457, %458 : vector<10x1xf32>
    %460 = arith.mulf %447, %447 : vector<10x4xf32>
    %cst_152 = arith.constant dense<0.000000e+00> : vector<10xf32>
    %461 = vector.multi_reduction <add>, %460, %cst_152 [1] : vector<10x4xf32> to vector<10xf32>
    %462 = vector.shape_cast %461 : vector<10xf32> to vector<10x1xf32>
    %463 = arith.mulf %448, %448 : vector<10x1xf32>
    %464 = arith.subf %462, %463 : vector<10x1xf32>
    %cst_153 = arith.constant 9.99999993E-9 : f32
    %465 = vector.broadcast %cst_153 : f32 to vector<10x1xf32>
    %466 = arith.maximumf %464, %465 : vector<10x1xf32>
    %467 = arith.mulf %459, %459 : vector<10x1xf32>
    %cst_154 = arith.constant 1.000000e+00 : f32
    %468 = vector.broadcast %cst_154 : f32 to vector<10x1xf32>
    %469 = arith.subf %467, %468 : vector<10x1xf32>
    %470 = math.sqrt %469 : vector<10x1xf32>
    %471 = math.rsqrt %466 : vector<10x1xf32>
    %472 = arith.mulf %470, %471 : vector<10x1xf32>
    %473 = tpu.iota {dimensions = array<i32: 1>} : vector<10x4xi32>
    %c0_i32_155 = arith.constant 0 : i32
    %474 = vector.broadcast %c0_i32_155 : i32 to vector<10x4xi32>
    %475 = arith.cmpi eq, %473, %474 : vector<10x4xi32>
    %476 = vector.broadcast %472 : vector<10x1xf32> to vector<10x4xf32>
    %477 = arith.mulf %447, %476 : vector<10x4xf32>
    %478 = vector.shape_cast %459 : vector<10x1xf32> to vector<10x1xf32>
    %479 = vector.broadcast %478 : vector<10x1xf32> to vector<10x4xf32>
    %480 = arith.select %475, %479, %477 : vector<10x4xi1>, vector<10x4xf32>
    %481 = arith.truncf %480 : vector<10x4xf32> to vector<10x4xbf16>
    %cst_156 = arith.constant dense<0.000000e+00> : vector<10x4xf32>
    %482 = tpu.matmul %400, %481, %cst_156 {dimension_numbers = #tpu.dot_dimension_numbers<[1], [0], [0], [1], [0, 0, 1, 1], [], []>} : vector<10x10xbf16>, vector<10x4xbf16>, vector<10x4xf32> -> vector<10x4xf32>
    %483 = vector.extract_strided_slice %482 {offsets = [0, 0], sizes = [10, 1], strides = [1, 1]} : vector<10x4xf32> to vector<10x1xf32>
    %484 = arith.mulf %482, %482 : vector<10x4xf32>
    %cst_157 = arith.constant dense<0.000000e+00> : vector<10xf32>
    %485 = vector.multi_reduction <add>, %484, %cst_157 [1] : vector<10x4xf32> to vector<10xf32>
    %486 = vector.shape_cast %485 : vector<10xf32> to vector<10x1xf32>
    %cst_158 = arith.constant 2.000000e+00 : f32
    %487 = vector.broadcast %cst_158 : f32 to vector<10x1xf32>
    %488 = arith.mulf %487, %483 : vector<10x1xf32>
    %489 = arith.mulf %488, %483 : vector<10x1xf32>
    %490 = arith.subf %486, %489 : vector<10x1xf32>
    %491 = math.absf %490 : vector<10x1xf32>
    %cst_159 = arith.constant 9.99999993E-9 : f32
    %492 = vector.broadcast %cst_159 : f32 to vector<10x1xf32>
    %493 = arith.maximumf %491, %492 : vector<10x1xf32>
    %494 = math.rsqrt %493 : vector<10x1xf32>
    %495 = vector.broadcast %494 : vector<10x1xf32> to vector<10x4xf32>
    %496 = arith.mulf %482, %495 : vector<10x4xf32>
    %497 = vector.extract_strided_slice %496 {offsets = [0, 1], sizes = [10, 3], strides = [1, 1]} : vector<10x4xf32> to vector<10x3xf32>
    %c11 = arith.constant 11 : index
    %498 = memref.load %arg0[%c11] : memref<15xf32, #tpu.memory_space<smem>>
    %c0_160 = arith.constant 0 : index
    %c0_161 = arith.constant 0 : index
    %499 = vector.load %arg19[%c0_160, %c0_161] : memref<17x17xf32, #tpu.memory_space<vmem>>, vector<17x17xf32>
    %cst_162 = arith.constant dense<0.000000e+00> : vector<10x17xf32>
    %500 = tpu.matmul %393, %499, %cst_162 {dimension_numbers = #tpu.dot_dimension_numbers<[1], [0], [0], [1], [0, 0, 1, 1], [], []>} : vector<10x17xf32>, vector<17x17xf32>, vector<10x17xf32> -> vector<10x17xf32>
    %c0_163 = arith.constant 0 : index
    %c0_164 = arith.constant 0 : index
    %501 = vector.load %arg20[%c0_163, %c0_164] : memref<1x17xf32, #tpu.memory_space<vmem>>, vector<1x17xf32>
    %502 = vector.broadcast %501 : vector<1x17xf32> to vector<10x17xf32>
    %503 = arith.addf %500, %502 : vector<10x17xf32>
    %504 = vector.extract_strided_slice %503 {offsets = [0, 0], sizes = [10, 1], strides = [1, 1]} : vector<10x17xf32> to vector<10x1xf32>
    %cst_165 = arith.constant 0.000000e+00 : f32
    %505 = vector.broadcast %cst_165 : f32 to vector<10x1xf32>
    %506 = arith.subf %505, %504 : vector<10x1xf32>
    %507 = math.exp %506 : vector<10x1xf32>
    %cst_166 = arith.constant 1.000000e+00 : f32
    %508 = vector.broadcast %cst_166 : f32 to vector<10x1xf32>
    %509 = arith.addf %508, %507 : vector<10x1xf32>
    %cst_167 = arith.constant 1.000000e+00 : f32
    %510 = vector.broadcast %cst_167 : f32 to vector<10x1xf32>
    %511 = arith.divf %510, %509 : vector<10x1xf32>
    %512 = vector.broadcast %498 : f32 to vector<10x1xf32>
    %513 = arith.mulf %511, %512 : vector<10x1xf32>
    %cst_168 = arith.constant 1.100000e+00 : f32
    %514 = vector.broadcast %cst_168 : f32 to vector<10x1xf32>
    %515 = arith.addf %513, %514 : vector<10x1xf32>
    %516 = arith.mulf %503, %503 : vector<10x17xf32>
    %cst_169 = arith.constant dense<0.000000e+00> : vector<10xf32>
    %517 = vector.multi_reduction <add>, %516, %cst_169 [1] : vector<10x17xf32> to vector<10xf32>
    %518 = vector.shape_cast %517 : vector<10xf32> to vector<10x1xf32>
    %519 = arith.mulf %504, %504 : vector<10x1xf32>
    %520 = arith.subf %518, %519 : vector<10x1xf32>
    %cst_170 = arith.constant 9.99999993E-9 : f32
    %521 = vector.broadcast %cst_170 : f32 to vector<10x1xf32>
    %522 = arith.maximumf %520, %521 : vector<10x1xf32>
    %523 = arith.mulf %515, %515 : vector<10x1xf32>
    %cst_171 = arith.constant 1.000000e+00 : f32
    %524 = vector.broadcast %cst_171 : f32 to vector<10x1xf32>
    %525 = arith.subf %523, %524 : vector<10x1xf32>
    %526 = math.sqrt %525 : vector<10x1xf32>
    %527 = math.rsqrt %522 : vector<10x1xf32>
    %528 = arith.mulf %526, %527 : vector<10x1xf32>
    %529 = tpu.iota {dimensions = array<i32: 1>} : vector<10x17xi32>
    %c0_i32_172 = arith.constant 0 : i32
    %530 = vector.broadcast %c0_i32_172 : i32 to vector<10x17xi32>
    %531 = arith.cmpi eq, %529, %530 : vector<10x17xi32>
    %532 = vector.broadcast %528 : vector<10x1xf32> to vector<10x17xf32>
    %533 = arith.mulf %503, %532 : vector<10x17xf32>
    %534 = vector.shape_cast %515 : vector<10x1xf32> to vector<10x1xf32>
    %535 = vector.broadcast %534 : vector<10x1xf32> to vector<10x17xf32>
    %536 = arith.select %531, %535, %533 : vector<10x17xi1>, vector<10x17xf32>
    %c12 = arith.constant 12 : index
    %537 = memref.load %arg0[%c12] : memref<15xf32, #tpu.memory_space<smem>>
    %c0_173 = arith.constant 0 : index
    %c0_174 = arith.constant 0 : index
    %538 = vector.load %arg21[%c0_173, %c0_174] : memref<17x17xf32, #tpu.memory_space<vmem>>, vector<17x17xf32>
    %cst_175 = arith.constant dense<0.000000e+00> : vector<10x17xf32>
    %539 = tpu.matmul %393, %538, %cst_175 {dimension_numbers = #tpu.dot_dimension_numbers<[1], [0], [0], [1], [0, 0, 1, 1], [], []>} : vector<10x17xf32>, vector<17x17xf32>, vector<10x17xf32> -> vector<10x17xf32>
    %c0_176 = arith.constant 0 : index
    %c0_177 = arith.constant 0 : index
    %540 = vector.load %arg22[%c0_176, %c0_177] : memref<1x17xf32, #tpu.memory_space<vmem>>, vector<1x17xf32>
    %541 = vector.broadcast %540 : vector<1x17xf32> to vector<10x17xf32>
    %542 = arith.addf %539, %541 : vector<10x17xf32>
    %543 = vector.extract_strided_slice %542 {offsets = [0, 0], sizes = [10, 1], strides = [1, 1]} : vector<10x17xf32> to vector<10x1xf32>
    %cst_178 = arith.constant 0.000000e+00 : f32
    %544 = vector.broadcast %cst_178 : f32 to vector<10x1xf32>
    %545 = arith.subf %544, %543 : vector<10x1xf32>
    %546 = math.exp %545 : vector<10x1xf32>
    %cst_179 = arith.constant 1.000000e+00 : f32
    %547 = vector.broadcast %cst_179 : f32 to vector<10x1xf32>
    %548 = arith.addf %547, %546 : vector<10x1xf32>
    %cst_180 = arith.constant 1.000000e+00 : f32
    %549 = vector.broadcast %cst_180 : f32 to vector<10x1xf32>
    %550 = arith.divf %549, %548 : vector<10x1xf32>
    %551 = vector.broadcast %537 : f32 to vector<10x1xf32>
    %552 = arith.mulf %550, %551 : vector<10x1xf32>
    %cst_181 = arith.constant 1.100000e+00 : f32
    %553 = vector.broadcast %cst_181 : f32 to vector<10x1xf32>
    %554 = arith.addf %552, %553 : vector<10x1xf32>
    %555 = arith.mulf %542, %542 : vector<10x17xf32>
    %cst_182 = arith.constant dense<0.000000e+00> : vector<10xf32>
    %556 = vector.multi_reduction <add>, %555, %cst_182 [1] : vector<10x17xf32> to vector<10xf32>
    %557 = vector.shape_cast %556 : vector<10xf32> to vector<10x1xf32>
    %558 = arith.mulf %543, %543 : vector<10x1xf32>
    %559 = arith.subf %557, %558 : vector<10x1xf32>
    %cst_183 = arith.constant 9.99999993E-9 : f32
    %560 = vector.broadcast %cst_183 : f32 to vector<10x1xf32>
    %561 = arith.maximumf %559, %560 : vector<10x1xf32>
    %562 = arith.mulf %554, %554 : vector<10x1xf32>
    %cst_184 = arith.constant 1.000000e+00 : f32
    %563 = vector.broadcast %cst_184 : f32 to vector<10x1xf32>
    %564 = arith.subf %562, %563 : vector<10x1xf32>
    %565 = math.sqrt %564 : vector<10x1xf32>
    %566 = math.rsqrt %561 : vector<10x1xf32>
    %567 = arith.mulf %565, %566 : vector<10x1xf32>
    %568 = vector.broadcast %567 : vector<10x1xf32> to vector<10x17xf32>
    %569 = arith.mulf %542, %568 : vector<10x17xf32>
    %570 = vector.shape_cast %554 : vector<10x1xf32> to vector<10x1xf32>
    %571 = vector.broadcast %570 : vector<10x1xf32> to vector<10x17xf32>
    %572 = arith.select %531, %571, %569 : vector<10x17xi1>, vector<10x17xf32>
    %cst_185 = arith.constant 0.000000e+00 : f32
    %573 = vector.broadcast %cst_185 : f32 to vector<10x17xf32>
    %574 = arith.subf %573, %536 : vector<10x17xf32>
    %575 = arith.select %531, %574, %536 : vector<10x17xi1>, vector<10x17xf32>
    %cst_186 = arith.constant dense<0.000000e+00> : vector<10x10xf32>
    %576 = tpu.matmul %575, %572, %cst_186 {dimension_numbers = #tpu.dot_dimension_numbers<[1], [1], [0], [0], [0, 0, 1, 0], [], []>} : vector<10x17xf32>, vector<10x17xf32>, vector<10x10xf32> -> vector<10x10xf32>
    %cst_187 = arith.constant 2.000000e+00 : f32
    %577 = vector.broadcast %cst_187 : f32 to vector<10x10xf32>
    %578 = arith.mulf %577, %576 : vector<10x10xf32>
    %cst_188 = arith.constant 2.000000e+00 : f32
    %579 = vector.broadcast %cst_188 : f32 to vector<10x10xf32>
    %580 = arith.addf %579, %578 : vector<10x10xf32>
    %c13 = arith.constant 13 : index
    %581 = memref.load %arg0[%c13] : memref<15xf32, #tpu.memory_space<smem>>
    %582 = vector.broadcast %581 : f32 to vector<10x10xf32>
    %583 = arith.mulf %580, %582 : vector<10x10xf32>
    %c14 = arith.constant 14 : index
    %584 = memref.load %arg0[%c14] : memref<15xf32, #tpu.memory_space<smem>>
    %585 = vector.broadcast %584 : f32 to vector<10x10xf32>
    %586 = arith.addf %583, %585 : vector<10x10xf32>
    %cst_189 = arith.constant 0.000000e+00 : f32
    %587 = vector.broadcast %cst_189 : f32 to vector<10x10xf32>
    %588 = arith.subf %587, %586 : vector<10x10xf32>
    %589 = math.exp %588 : vector<10x10xf32>
    %cst_190 = arith.constant 1.000000e+00 : f32
    %590 = vector.broadcast %cst_190 : f32 to vector<10x10xf32>
    %591 = arith.addf %590, %589 : vector<10x10xf32>
    %cst_191 = arith.constant 1.000000e+00 : f32
    %592 = vector.broadcast %cst_191 : f32 to vector<10x10xf32>
    %593 = arith.divf %592, %591 : vector<10x10xf32>
    %594 = arith.mulf %593, %399 : vector<10x10xf32>
    %595 = arith.truncf %594 : vector<10x10xf32> to vector<10x10xbf16>
    %596 = arith.truncf %497 : vector<10x3xf32> to vector<10x3xbf16>
    %cst_192 = arith.constant dense<0.000000e+00> : vector<10x3xf32>
    %597 = tpu.matmul %595, %596, %cst_192 {dimension_numbers = #tpu.dot_dimension_numbers<[1], [0], [0], [1], [0, 0, 1, 1], [], []>} : vector<10x10xbf16>, vector<10x3xbf16>, vector<10x3xf32> -> vector<10x3xf32>
    %cst_193 = arith.constant 1.000000e+01 : f32
    %598 = vector.broadcast %cst_193 : f32 to vector<10x3xf32>
    %599 = arith.mulf %597, %598 : vector<10x3xf32>
    %cst_194 = arith.constant dense<0xFF800000> : vector<10xf32>
    %600 = vector.multi_reduction <maximumf>, %599, %cst_194 [1] : vector<10x3xf32> to vector<10xf32>
    %601 = vector.shape_cast %600 : vector<10xf32> to vector<10x1xf32>
    %602 = vector.broadcast %601 : vector<10x1xf32> to vector<10x3xf32>
    %603 = arith.subf %599, %602 : vector<10x3xf32>
    %604 = math.exp %603 : vector<10x3xf32>
    %cst_195 = arith.constant dense<0.000000e+00> : vector<10xf32>
    %605 = vector.multi_reduction <add>, %604, %cst_195 [1] : vector<10x3xf32> to vector<10xf32>
    %606 = vector.shape_cast %605 : vector<10xf32> to vector<10x1xf32>
    %607 = tpu.reciprocal %606 {approx = true} : vector<10x1xf32> -> vector<10x1xf32>
    %608 = vector.broadcast %607 : vector<10x1xf32> to vector<10x3xf32>
    %609 = arith.mulf %604, %608 : vector<10x3xf32>
    %cst_196 = arith.constant dense<0.000000e+00> : vector<3x17xf32>
    %610 = tpu.matmul %609, %393, %cst_196 {dimension_numbers = #tpu.dot_dimension_numbers<[0], [0], [1], [1], [0, 1, 1, 1], [], []>} : vector<10x3xf32>, vector<10x17xf32>, vector<3x17xf32> -> vector<3x17xf32>
    %611 = vector.extract_strided_slice %610 {offsets = [0, 0], sizes = [3, 1], strides = [1, 1]} : vector<3x17xf32> to vector<3x1xf32>
    %612 = arith.mulf %610, %610 : vector<3x17xf32>
    %cst_197 = arith.constant dense<0.000000e+00> : vector<3xf32>
    %613 = vector.multi_reduction <add>, %612, %cst_197 [1] : vector<3x17xf32> to vector<3xf32>
    %614 = vector.shape_cast %613 : vector<3xf32> to vector<3x1xf32>
    %cst_198 = arith.constant 2.000000e+00 : f32
    %615 = vector.broadcast %cst_198 : f32 to vector<3x1xf32>
    %616 = arith.mulf %615, %611 : vector<3x1xf32>
    %617 = arith.mulf %616, %611 : vector<3x1xf32>
    %618 = arith.subf %614, %617 : vector<3x1xf32>
    %619 = math.absf %618 : vector<3x1xf32>
    %cst_199 = arith.constant 9.99999993E-9 : f32
    %620 = vector.broadcast %cst_199 : f32 to vector<3x1xf32>
    %621 = arith.maximumf %619, %620 : vector<3x1xf32>
    %622 = math.rsqrt %621 : vector<3x1xf32>
    %623 = vector.broadcast %622 : vector<3x1xf32> to vector<3x17xf32>
    %624 = arith.mulf %610, %623 : vector<3x17xf32>
    %c0_200 = arith.constant 0 : index
    %c0_201 = arith.constant 0 : index
    %625 = vector.load %arg25[%c0_200, %c0_201] : memref<3x17xf32, #tpu.memory_space<vmem>>, vector<3x17xf32>
    tpu.vector_store %arg25[%c0_200, %c0_201], %624 {strides = array<i32>} : memref<3x17xf32, #tpu.memory_space<vmem>>, vector<3x17xf32>,
    %c0_202 = arith.constant 0 : index
    %c0_203 = arith.constant 0 : index
    %626 = vector.load %arg28[%c0_202, %c0_203] : memref<10x3xf32, #tpu.memory_space<vmem>>, vector<10x3xf32>
    tpu.vector_store %arg28[%c0_202, %c0_203], %609 {strides = array<i32>} : memref<10x3xf32, #tpu.memory_space<vmem>>, vector<10x3xf32>,
    %cst_204 = arith.constant dense<0.000000e+00> : vector<17xf32>
    %627 = vector.multi_reduction <add>, %624, %cst_204 [0] : vector<3x17xf32> to vector<17xf32>
    %628 = vector.shape_cast %627 : vector<17xf32> to vector<1x17xf32>
    %629 = vector.extract_strided_slice %628 {offsets = [0, 0], sizes = [1, 1], strides = [1, 1]} : vector<1x17xf32> to vector<1x1xf32>
    %630 = arith.mulf %628, %628 : vector<1x17xf32>
    %cst_205 = arith.constant dense<0.000000e+00> : vector<1xf32>
    %631 = vector.multi_reduction <add>, %630, %cst_205 [1] : vector<1x17xf32> to vector<1xf32>
    %632 = vector.shape_cast %631 : vector<1xf32> to vector<1x1xf32>
    %cst_206 = arith.constant 2.000000e+00 : f32
    %633 = vector.broadcast %cst_206 : f32 to vector<1x1xf32>
    %634 = arith.mulf %633, %629 : vector<1x1xf32>
    %635 = arith.mulf %634, %629 : vector<1x1xf32>
    %636 = arith.subf %632, %635 : vector<1x1xf32>
    %637 = math.absf %636 : vector<1x1xf32>
    %cst_207 = arith.constant 9.99999993E-9 : f32
    %638 = vector.broadcast %cst_207 : f32 to vector<1x1xf32>
    %639 = arith.maximumf %637, %638 : vector<1x1xf32>
    %640 = math.rsqrt %639 : vector<1x1xf32>
    %641 = vector.broadcast %640 : vector<1x1xf32> to vector<1x17xf32>
    %642 = arith.mulf %628, %641 : vector<1x17xf32>
    %c0_208 = arith.constant 0 : index
    %c0_209 = arith.constant 0 : index
    %643 = vector.load %arg26[%c0_208, %c0_209] : memref<1x17xf32, #tpu.memory_space<vmem>>, vector<1x17xf32>
    tpu.vector_store %arg26[%c0_208, %c0_209], %642 {strides = array<i32>} : memref<1x17xf32, #tpu.memory_space<vmem>>, vector<1x17xf32>,
    return
  }
}

</mosaic_0001>

<llo_original>
// kernel: tpu_custom_call.1
$region0: #{tpu_custom_call.1}
  #allocation0 [shape = 'u32[]', space=smem, size = 0x4, offset = 0x4, fixed_abs, tag = 'smem constant byte address 0x4 - core index']
  #allocation1 [shape = 'u32[144,128]{1,0:T(1,128)}', space=vmem, size = 0x12000, scoped, tag = 'internal scratch']
  %s0 = inlined_call_operand.vmem [shape: f32[15], index: 0, kind: input, shape index: {}]
  %s1 = inlined_call_operand.vmem [shape: f32[32,17], index: 1, kind: input, shape index: {}]
  %s2 = inlined_call_operand.vmem [shape: f32[32,32], index: 2, kind: input, shape index: {}]
  %s3 = inlined_call_operand.vmem [shape: f32[17,32], index: 3, kind: input, shape index: {}]
  %s4 = inlined_call_operand.vmem [shape: f32[1,32], index: 4, kind: input, shape index: {}]
  %s5 = inlined_call_operand.vmem [shape: f32[32,17], index: 5, kind: input, shape index: {}]
  %s6 = inlined_call_operand.hbm [shape: f32[1,17], index: 6, kind: input, shape index: {}]
  %s7 = inlined_call_operand.vmem [shape: f32[17,32], index: 7, kind: input, shape index: {}]
  %s8 = inlined_call_operand.hbm [shape: f32[1,32], index: 8, kind: input, shape index: {}]
  %s9 = inlined_call_operand.vmem [shape: f32[32,11], index: 9, kind: input, shape index: {}]
  %s10 = inlined_call_operand.vmem [shape: f32[1,11], index: 10, kind: input, shape index: {}]
  %s11 = inlined_call_operand.vmem [shape: f32[17,17], index: 11, kind: input, shape index: {}]
  %s12 = inlined_call_operand.vmem [shape: f32[1,17], index: 12, kind: input, shape index: {}]
  %s13 = inlined_call_operand.vmem [shape: f32[17,17], index: 13, kind: input, shape index: {}]
  %s14 = inlined_call_operand.vmem [shape: f32[1,17], index: 14, kind: input, shape index: {}]
  %s15 = inlined_call_operand.vmem [shape: f32[17,32], index: 15, kind: input, shape index: {}]
  %s16 = inlined_call_operand.vmem [shape: f32[1,32], index: 16, kind: input, shape index: {}]
  %s17 = inlined_call_operand.vmem [shape: f32[32,4], index: 17, kind: input, shape index: {}]
  %s18 = inlined_call_operand.vmem [shape: f32[1,4], index: 18, kind: input, shape index: {}]
  %s19 = inlined_call_operand.vmem [shape: f32[17,17], index: 19, kind: input, shape index: {}]
  %s20 = inlined_call_operand.vmem [shape: f32[1,17], index: 20, kind: input, shape index: {}]
  %s21 = inlined_call_operand.vmem [shape: f32[17,17], index: 21, kind: input, shape index: {}]
  %s22 = inlined_call_operand.vmem [shape: f32[1,17], index: 22, kind: input, shape index: {}]
  %s23 = inlined_call_operand.vmem [shape: f32[32,17], index: 23, kind: output, shape index: {0}]
  %s24 = inlined_call_operand.hbm [shape: f32[10,17], index: 24, kind: output, shape index: {1}]
  %s25 = inlined_call_operand.hbm [shape: f32[3,17], index: 25, kind: output, shape index: {2}]
  %s26 = inlined_call_operand.hbm [shape: f32[1,17], index: 26, kind: output, shape index: {3}]
  %s27 = inlined_call_operand.vmem [shape: f32[32,10], index: 27, kind: output, shape index: {4}]
  %s28 = inlined_call_operand.vmem [shape: f32[10,3], index: 28, kind: output, shape index: {5}]
  %29 = xla_tuple %s23, %s24, %s25, %s26, %s27, %s28
  %s30 = sld [smem:[#allocation0]]
  $region154: #{tpu_custom_call.1} parent=0
    _
  %s32 = ssub.s32 1, %s30
  %s33 = scalar_select 0, %s32, %s30
  $region1: #{tpu_custom_call.1} parent=0
    #allocation2 [shape = 'u8[512]{0}', space=smem, size = 0x200, scoped, tag = 'input window, operand 0, single buffered']
    #allocation3 [shape = 's32[1]{0}', space=sflag, size = 0x4, scoped, tag = 'scoped memory for tpu_custom_call.1']
    #allocation4 [shape = 's32[1]{0}', space=sflag, size = 0x4, scoped, tag = 'scoped memory for tpu_custom_call.1']
    #allocation5 [shape = 's32[1]{0}', space=sflag, size = 0x4, scoped, tag = 'scoped memory for tpu_custom_call.1']
    #allocation6 [shape = 'u8[512]{0}', space=vmem, size = 0x400, scoped, tag = 'input window, operand 6, single buffered']
    #allocation7 [shape = 'u8[512]{0}', space=vmem, size = 0x400, scoped, tag = 'input window, operand 8, single buffered']
    #allocation8 [shape = 's32[1]{0}', space=sflag, size = 0x4, scoped, tag = 'scoped memory for tpu_custom_call.1']
    #allocation9 [shape = 'u8[8192]{0}', space=vmem, size = 0x2000, scoped, tag = 'output window, operand 1, single buffered']
    #allocation10 [shape = 'u8[2048]{0}', space=vmem, size = 0x800, scoped, tag = 'output window, operand 2, single buffered']
    #allocation11 [shape = 's32[1]{0}', space=sflag, size = 0x4, scoped, tag = 'scoped memory for tpu_custom_call.1']
    #allocation12 [shape = 'u8[512]{0}', space=vmem, size = 0x400, scoped, tag = 'output window, operand 3, single buffered']
    %34 = vsyncpa [#allocation5], 0
    %35 = vsyncpa [#allocation3], 0
    %36 = vsyncpa [#allocation8], 0
    %37 = vsyncpa [#allocation4], 0
    %38 = vsyncpa [#allocation11], 0
    // Predicated region
    $region2: #{tpu_custom_call.1} parent=1 // pred_check
      _
    $region3: #{tpu_custom_call.1} parent=1 // pred_check_branch
      %40 = sbr.rel (0) target = $region5
    $region4: #{tpu_custom_call.1} parent=1 // pred_region
      %s42 = ssub.s32 16, 16
      %43 = vsyncadd [#allocation5], %s42
      %s45 = sshll.u32 %s0, 4
      %s46 = int_to_ptr.vmem [resolvable:$true] %s45
      %48 = dma.vmem_to_smem %s46, 16, [#allocation2], [#allocation5]
    $region5: #{tpu_custom_call.1} parent=1 // pred_fallthru
      _
    // Predicated region
    $region6: #{tpu_custom_call.1} parent=1 // pred_check
      _
    $region7: #{tpu_custom_call.1} parent=1 // pred_check_branch
      %50 = sbr.rel (0) target = $region9
    $region8: #{tpu_custom_call.1} parent=1 // pred_region
      _
    $region9: #{tpu_custom_call.1} parent=1 // pred_fallthru
      _
    // Predicated region
    $region10: #{tpu_custom_call.1} parent=1 // pred_check
      _
    $region11: #{tpu_custom_call.1} parent=1 // pred_check_branch
      %52 = sbr.rel (0) target = $region13
    $region12: #{tpu_custom_call.1} parent=1 // pred_region
      _
    $region13: #{tpu_custom_call.1} parent=1 // pred_fallthru
      _
    // Predicated region
    $region14: #{tpu_custom_call.1} parent=1 // pred_check
      _
    $region15: #{tpu_custom_call.1} parent=1 // pred_check_branch
      %54 = sbr.rel (0) target = $region17
    $region16: #{tpu_custom_call.1} parent=1 // pred_region
      _
    $region17: #{tpu_custom_call.1} parent=1 // pred_fallthru
      _
    // Predicated region
    $region18: #{tpu_custom_call.1} parent=1 // pred_check
      _
    $region19: #{tpu_custom_call.1} parent=1 // pred_check_branch
      %56 = sbr.rel (0) target = $region21
    $region20: #{tpu_custom_call.1} parent=1 // pred_region
      _
    $region21: #{tpu_custom_call.1} parent=1 // pred_fallthru
      _
    // Predicated region
    $region22: #{tpu_custom_call.1} parent=1 // pred_check
      _
    $region23: #{tpu_custom_call.1} parent=1 // pred_check_branch
      %58 = sbr.rel (0) target = $region25
    $region24: #{tpu_custom_call.1} parent=1 // pred_region
      _
    $region25: #{tpu_custom_call.1} parent=1 // pred_fallthru
      _
    // Predicated region
    $region26: #{tpu_custom_call.1} parent=1 // pred_check
      _
    $region27: #{tpu_custom_call.1} parent=1 // pred_check_branch
      %60 = sbr.rel (0) target = $region29
    $region28: #{tpu_custom_call.1} parent=1 // pred_region
      %s62 = ssub.s32 16, 16
      %63 = vsyncadd [#allocation3], %s62
      %s65 = sshll.u32 [#allocation6], 4
      %s66 = int_to_ptr.vmem [resolvable:$true] %s65
      %68 = dma.hbm_to_vmem [thread:$0]  %s6, 16, %s66, [#allocation3]
    $region29: #{tpu_custom_call.1} parent=1 // pred_fallthru
      _
    // Predicated region
    $region30: #{tpu_custom_call.1} parent=1 // pred_check
      _
    $region31: #{tpu_custom_call.1} parent=1 // pred_check_branch
      %70 = sbr.rel (0) target = $region33
    $region32: #{tpu_custom_call.1} parent=1 // pred_region
      _
    $region33: #{tpu_custom_call.1} parent=1 // pred_fallthru
      _
    // Predicated region
    $region34: #{tpu_custom_call.1} parent=1 // pred_check
      _
    $region35: #{tpu_custom_call.1} parent=1 // pred_check_branch
      %72 = sbr.rel (0) target = $region37
    $region36: #{tpu_custom_call.1} parent=1 // pred_region
      %s74 = ssub.s32 16, 16
      %75 = vsyncadd [#allocation8], %s74
      %s77 = sshll.u32 [#allocation7], 4
      %s78 = int_to_ptr.vmem [resolvable:$true] %s77
      %80 = dma.hbm_to_vmem [thread:$0]  %s8, 16, %s78, [#allocation8]
    $region37: #{tpu_custom_call.1} parent=1 // pred_fallthru
      _
    // Predicated region
    $region38: #{tpu_custom_call.1} parent=1 // pred_check
      _
    $region39: #{tpu_custom_call.1} parent=1 // pred_check_branch
      %82 = sbr.rel (0) target = $region41
    $region40: #{tpu_custom_call.1} parent=1 // pred_region
      _
    $region41: #{tpu_custom_call.1} parent=1 // pred_fallthru
      _
    // Predicated region
    $region42: #{tpu_custom_call.1} parent=1 // pred_check
      _
    $region43: #{tpu_custom_call.1} parent=1 // pred_check_branch
      %84 = sbr.rel (0) target = $region45
    $region44: #{tpu_custom_call.1} parent=1 // pred_region
      _
    $region45: #{tpu_custom_call.1} parent=1 // pred_fallthru
      _
    // Predicated region
    $region46: #{tpu_custom_call.1} parent=1 // pred_check
      _
    $region47: #{tpu_custom_call.1} parent=1 // pred_check_branch
      %86 = sbr.rel (0) target = $region49
    $region48: #{tpu_custom_call.1} parent=1 // pred_region
      _
    $region49: #{tpu_custom_call.1} parent=1 // pred_fallthru
      _
    // Predicated region
    $region50: #{tpu_custom_call.1} parent=1 // pred_check
      _
    $region51: #{tpu_custom_call.1} parent=1 // pred_check_branch
      %88 = sbr.rel (0) target = $region53
    $region52: #{tpu_custom_call.1} parent=1 // pred_region
      _
    $region53: #{tpu_custom_call.1} parent=1 // pred_fallthru
      _
    // Predicated region
    $region54: #{tpu_custom_call.1} parent=1 // pred_check
      _
    $region55: #{tpu_custom_call.1} parent=1 // pred_check_branch
      %90 = sbr.rel (0) target = $region57
    $region56: #{tpu_custom_call.1} parent=1 // pred_region
      _
    $region57: #{tpu_custom_call.1} parent=1 // pred_fallthru
      _
    // Predicated region
    $region58: #{tpu_custom_call.1} parent=1 // pred_check
      _
    $region59: #{tpu_custom_call.1} parent=1 // pred_check_branch
      %92 = sbr.rel (0) target = $region61
    $region60: #{tpu_custom_call.1} parent=1 // pred_region
      _
    $region61: #{tpu_custom_call.1} parent=1 // pred_fallthru
      _
    // Predicated region
    $region62: #{tpu_custom_call.1} parent=1 // pred_check
      _
    $region63: #{tpu_custom_call.1} parent=1 // pred_check_branch
      %94 = sbr.rel (0) target = $region65
    $region64: #{tpu_custom_call.1} parent=1 // pred_region
      _
    $region65: #{tpu_custom_call.1} parent=1 // pred_fallthru
      _
    // Predicated region
    $region66: #{tpu_custom_call.1} parent=1 // pred_check
      _
    $region67: #{tpu_custom_call.1} parent=1 // pred_check_branch
      %96 = sbr.rel (0) target = $region69
    $region68: #{tpu_custom_call.1} parent=1 // pred_region
      _
    $region69: #{tpu_custom_call.1} parent=1 // pred_fallthru
      _
    // Predicated region
    $region70: #{tpu_custom_call.1} parent=1 // pred_check
      _
    $region71: #{tpu_custom_call.1} parent=1 // pred_check_branch
      %98 = sbr.rel (0) target = $region73
    $region72: #{tpu_custom_call.1} parent=1 // pred_region
      _
    $region73: #{tpu_custom_call.1} parent=1 // pred_fallthru
      _
    // Predicated region
    $region74: #{tpu_custom_call.1} parent=1 // pred_check
      _
    $region75: #{tpu_custom_call.1} parent=1 // pred_check_branch
      %100 = sbr.rel (0) target = $region77
    $region76: #{tpu_custom_call.1} parent=1 // pred_region
      _
    $region77: #{tpu_custom_call.1} parent=1 // pred_fallthru
      _
    // Predicated region
    $region78: #{tpu_custom_call.1} parent=1 // pred_check
      _
    $region79: #{tpu_custom_call.1} parent=1 // pred_check_branch
      %102 = sbr.rel (0) target = $region81
    $region80: #{tpu_custom_call.1} parent=1 // pred_region
      _
    $region81: #{tpu_custom_call.1} parent=1 // pred_fallthru
      _
    // Predicated region
    $region82: #{tpu_custom_call.1} parent=1 // pred_check
      _
    $region83: #{tpu_custom_call.1} parent=1 // pred_check_branch
      %104 = sbr.rel (0) target = $region85
    $region84: #{tpu_custom_call.1} parent=1 // pred_region
      _
    $region85: #{tpu_custom_call.1} parent=1 // pred_fallthru
      _
    // Predicated region
    $region86: #{tpu_custom_call.1} parent=1 // pred_check
      _
    $region87: #{tpu_custom_call.1} parent=1 // pred_check_branch
      %106 = sbr.rel (0) target = $region89
    $region88: #{tpu_custom_call.1} parent=1 // pred_region
      _
    $region89: #{tpu_custom_call.1} parent=1 // pred_fallthru
      _
    // Predicated region
    $region90: #{tpu_custom_call.1} parent=1 // pred_check
      _
    $region91: #{tpu_custom_call.1} parent=1 // pred_check_branch
      %108 = sbr.rel (0) target = $region93
    $region92: #{tpu_custom_call.1} parent=1 // pred_region
      _
    $region93: #{tpu_custom_call.1} parent=1 // pred_fallthru
      _
    // Predicated region
    $region94: #{tpu_custom_call.1} parent=1 // pred_check
      _
    $region95: #{tpu_custom_call.1} parent=1 // pred_check_branch
      %110 = sbr.rel (0) target = $region97
    $region96: #{tpu_custom_call.1} parent=1 // pred_region
      %111 = dma.done [#allocation5], 16
    $region97: #{tpu_custom_call.1} parent=1 // pred_fallthru
      _
    // Predicated region
    $region98: #{tpu_custom_call.1} parent=1 // pred_check
      _
    $region99: #{tpu_custom_call.1} parent=1 // pred_check_branch
      %113 = sbr.rel (0) target = $region101
    $region100: #{tpu_custom_call.1} parent=1 // pred_region
      %114 = dma.done [#allocation3], 16
    $region101: #{tpu_custom_call.1} parent=1 // pred_fallthru
      _
    // Predicated region
    $region102: #{tpu_custom_call.1} parent=1 // pred_check
      _
    $region103: #{tpu_custom_call.1} parent=1 // pred_check_branch
      %116 = sbr.rel (0) target = $region105
    $region104: #{tpu_custom_call.1} parent=1 // pred_region
      %117 = dma.done [#allocation8], 16
    $region105: #{tpu_custom_call.1} parent=1 // pred_fallthru
      _
    %118 = sfence
    %v120 = vld [vmem:[%s1] sm:$0xff]
    %v121 = vld [vmem:[%s1 + $0x8] sm:$0xff]
    %v122 = vld [vmem:[%s1 + $0x10] sm:$0xff]
    %v123 = vld [vmem:[%s1 + $0x18] sm:$0xff]
    %v124 = vlaneseq
    %v125 = vand.u32 %v124, 127
    %vm126 = vcmp.eq.s32.totalorder %v125, 0
    %v127 = vmul.f32 %v120, %v120
    %v128 = vmul.f32 %v121, %v121
    %v129 = vmul.f32 %v122, %v122
    %v130 = vmul.f32 %v123, %v123
    %vm131 = vcmask 138240
    %v132 = vsel %vm131, %v127, 0.0
    %133 = vadd.xlane.f32.xlu0 %v132
    %v134 = vpop.xlane.xlu0 %133
    %v135 = vsel %vm131, %v128, 0.0
    %136 = vadd.xlane.f32.xlu0 %v135
    %v137 = vpop.xlane.xlu0 %136
    %v138 = vsel %vm131, %v129, 0.0
    %139 = vadd.xlane.f32.xlu0 %v138
    %v140 = vpop.xlane.xlu0 %139
    %v141 = vsel %vm131, %v130, 0.0
    %142 = vadd.xlane.f32.xlu0 %v141
    %v143 = vpop.xlane.xlu0 %142
    %v144 = vmax.f32 %v134, 1e-08
    %v145 = vmax.f32 %v137, 1e-08
    %v146 = vmax.f32 %v140, 1e-08
    %v147 = vmax.f32 %v143, 1e-08
    %v148 = vrsqrt.pop %v144
    %v149 = vrsqrt.pop %v145
    %v150 = vrsqrt.pop %v146
    %v151 = vrsqrt.pop %v147
    %v152 = vmul.f32 %v144, %v148
    %v153 = vmul.f32 %v145, %v149
    %v154 = vmul.f32 %v146, %v150
    %v155 = vmul.f32 %v147, %v151
    %v156 = vmul.f32 %v152, 1.442695
    %v157 = vpow.pop %v156
    %v158 = vmul.f32 %v153, 1.442695
    %v159 = vpow.pop %v158
    %v160 = vmul.f32 %v154, 1.442695
    %v161 = vpow.pop %v160
    %v162 = vmul.f32 %v155, 1.442695
    %v163 = vpow.pop %v162
    %v164 = vrcp.pop %v157
    %v165 = vrcp.pop %v159
    %v166 = vrcp.pop %v161
    %v167 = vrcp.pop %v163
    %v168 = vadd.f32 %v157, %v164
    %v169 = vadd.f32 %v159, %v165
    %v170 = vadd.f32 %v161, %v166
    %v171 = vadd.f32 %v163, %v167
    %v172 = vmul.f32 %v168, 0.5
    %v173 = vmul.f32 %v169, 0.5
    %v174 = vmul.f32 %v170, 0.5
    %v175 = vmul.f32 %v171, 0.5
    %v176 = vsub.f32 %v157, %v164
    %v177 = vsub.f32 %v159, %v165
    %v178 = vsub.f32 %v161, %v166
    %v179 = vsub.f32 %v163, %v167
    %v180 = vmul.f32 %v176, 0.5
    %v181 = vmul.f32 %v177, 0.5
    %v182 = vmul.f32 %v178, 0.5
    %v183 = vmul.f32 %v179, 0.5
    %v184 = vmul.f32 %v180, %v148
    %v185 = vmul.f32 %v181, %v149
    %v186 = vmul.f32 %v182, %v150
    %v187 = vmul.f32 %v183, %v151
    %v188 = vmul.f32 %v184, %v120
    %v189 = vmul.f32 %v185, %v121
    %v190 = vmul.f32 %v186, %v122
    %v191 = vmul.f32 %v187, %v123
    %v192 = vsel %vm126, %v172, %v188
    %v193 = vsel %vm126, %v173, %v189
    %v194 = vsel %vm126, %v174, %v190
    %v195 = vsel %vm126, %v175, %v191
    %v196 = vld [vmem:[%s2] sm:$0xff]
    %v197 = vld [vmem:[%s2 + $0x8] sm:$0xff]
    %v198 = vld [vmem:[%s2 + $0x10] sm:$0xff]
    %v199 = vld [vmem:[%s2 + $0x18] sm:$0xff]
    %v200 = vpack.c.bf16 %v197, %v196
    %v201 = vpack.c.bf16 %v199, %v198
    %s202 = sld [smem:[#allocation2]]
    %v203 = vld [vmem:[%s3] sm:$0xff]
    %v204 = vld [vmem:[%s3 + $0x8] sm:$0xff]
    %v205 = vld [vmem:[%s3 + $0x10] sm:$0x1]
    %v206 = vld [vmem:[%s4] sm:$0x1]
    %v208 = vlaneseq
    %v209 = vshrl.u32 %v208, 7
    %v210 = vsub.s32 0, %v209
    %v211 = vrot.slane %v206, %v210
    %v214 = vsel %vm131, %v192, 0
    %v217 = vsel %vm131, %v193, 0
    %v220 = vsel %vm131, %v194, 0
    %v223 = vsel %vm131, %v195, 0
    %vm225 = vcmask 1040384
    %v227 = vsel %vm225, %v205, 0
    %229 = vmatprep.subr.mxu0 0.0
    %230 = vmatpush1.msra.mxu0 %v203
    %231 = vmatprep.subr.mxu0 0.0
    %232 = vmatpush1.msra.mxu0 %v204
    %233 = vmatprep.subr.mxu0 0.0
    %234 = vmatpush1.msra.mxu0 %v227
    %235 = vmatprep.subr.mxu0 0.0
    %236 = vmatpush1.msra.mxu0 0.0
    %237 = vmatprep.subr.mxu0 0.0
    %238 = vmatpush1.msra.mxu0 0.0
    %239 = vmatprep.subr.mxu0 0.0
    %240 = vmatpush1.msra.mxu0 0.0
    %241 = vmatprep.subr.mxu0 0.0
    %242 = vmatpush1.msra.mxu0 0.0
    %243 = vmatprep.subr.mxu0 0.0
    %244 = vmatpush1.msra.mxu0 0.0
    %245 = vmatprep.subr.mxu0 0.0
    %246 = vmatpush1.msra.mxu0 0.0
    %247 = vmatprep.subr.mxu0 0.0
    %248 = vmatpush1.msra.mxu0 0.0
    %249 = vmatprep.subr.mxu0 0.0
    %250 = vmatpush1.msra.mxu0 0.0
    %251 = vmatprep.subr.mxu0 0.0
    %252 = vmatpush1.msra.mxu0 0.0
    %253 = vmatprep.subr.mxu0 0.0
    %254 = vmatpush1.msra.mxu0 0.0
    %255 = vmatprep.subr.mxu0 0.0
    %256 = vmatpush1.msra.mxu0 0.0
    %257 = vmatprep.subr.mxu0 0.0
    %258 = vmatpush1.msra.mxu0 0.0
    %259 = vmatprep.subr.mxu0 0.0
    %260 = vmatpush1.msra.mxu0 0.0
    %261 = vmatprep.subr.mxu0 0.0
    %262 = vmatpush1.msra.mxu0 0.0
    %263 = vmatprep.subr.mxu0 0.0
    %264 = vmatpush1.msra.mxu0 0.0
    %265 = vmatprep.subr.mxu0 0.0
    %266 = vmatpush1.msra.mxu0 0.0
    %267 = vmatprep.subr.mxu0 0.0
    %268 = vmatpush1.msra.mxu0 0.0
    %269 = vmatprep.subr.mxu0 0.0
    %270 = vmatpush1.msra.mxu0 0.0
    %271 = vmatprep.subr.mxu0 0.0
    %272 = vmatpush1.msra.mxu0 0.0
    %273 = vmatprep.subr.mxu0 0.0
    %274 = vmatpush1.msra.mxu0 0.0
    %275 = vmatprep.subr.mxu0 0.0
    %276 = vmatpush1.msra.mxu0 0.0
    %277 = vmatprep.subr.mxu0 0.0
    %278 = vmatpush1.msra.mxu0 0.0
    %279 = vmatprep.subr.mxu0 0.0
    %280 = vmatpush1.msra.mxu0 0.0
    %281 = vmatprep.subr.mxu0 0.0
    %282 = vmatpush1.msra.mxu0 0.0
    %283 = vmatprep.subr.mxu0 0.0
    %284 = vmatpush1.msra.mxu0 0.0
    %285 = vmatprep.subr.mxu0 0.0
    %286 = vmatpush1.msra.mxu0 0.0
    %287 = vmatprep.subr.mxu0 0.0
    %288 = vmatpush1.msra.mxu0 0.0
    %289 = vmatprep.subr.mxu0 0.0
    %290 = vmatpush1.msra.mxu0 0.0
    %291 = vmatprep.subr.mxu0 0.0
    %292 = vmatpush1.msra.mxu0 0.0
    %293 = vmatprep.mubr.f32.mxu0 0.0
    %294 = vmatmul.mubr.f32.gmra.mrb[0].mxu0 %v214
    %v295 = vpop.f32.mrb[0].mxu0
    %v296 = vadd.f32 %v211, %v295
    %v297 = vpop.f32.mrb[0].mxu0
    %298 = vmatprep.mubr.f32.mxu0 0.0
    %299 = vmatmul.mubr.f32.gmra.mrb[0].mxu0 %v217
    %v300 = vpop.f32.mrb[0].mxu0
    %v301 = vadd.f32 %v211, %v300
    %v302 = vpop.f32.mrb[0].mxu0
    %303 = vmatprep.mubr.f32.mxu0 0.0
    %304 = vmatmul.mubr.f32.gmra.mrb[0].mxu0 %v220
    %v305 = vpop.f32.mrb[0].mxu0
    %v306 = vadd.f32 %v211, %v305
    %v307 = vpop.f32.mrb[0].mxu0
    %308 = vmatprep.mubr.f32.mxu0 0.0
    %309 = vmatmul.mubr.f32.gmra.mrb[0].mxu0 %v223
    %v310 = vpop.f32.mrb[0].mxu0
    %v311 = vadd.f32 %v211, %v310
    %v312 = vpop.f32.mrb[0].mxu0
    %313 = vdwg.mxu0
    %v314 = vsub.f32 0.0, %v296
    %v315 = vsub.f32 0.0, %v301
    %v316 = vsub.f32 0.0, %v306
    %v317 = vsub.f32 0.0, %v311
    %v318 = vmul.f32 %v314, 1.442695
    %v319 = vpow.pop %v318
    %v320 = vmul.f32 %v315, 1.442695
    %v321 = vpow.pop %v320
    %v322 = vmul.f32 %v316, 1.442695
    %v323 = vpow.pop %v322
    %v324 = vmul.f32 %v317, 1.442695
    %v325 = vpow.pop %v324
    %v326 = vadd.f32 %v319, 1.0
    %v327 = vadd.f32 %v321, 1.0
    %v328 = vadd.f32 %v323, 1.0
    %v329 = vadd.f32 %v325, 1.0
    %v330 = vrcp.pop %v326
    %v331 = vmul.f32 1.0, %v330
    %v332 = vrcp.pop %v327
    %v333 = vmul.f32 1.0, %v332
    %v334 = vrcp.pop %v328
    %v335 = vmul.f32 1.0, %v334
    %v336 = vrcp.pop %v329
    %v337 = vmul.f32 1.0, %v336
    %v338 = vstv %s202
    %v339 = vmul.f32 %v331, %v338
    %v340 = vmul.f32 %v333, %v338
    %v341 = vmul.f32 %v335, %v338
    %v342 = vmul.f32 %v337, %v338
    %v343 = vadd.f32 %v339, 1.1
    %v344 = vadd.f32 %v340, 1.1
    %v345 = vadd.f32 %v341, 1.1
    %v346 = vadd.f32 %v342, 1.1
    %v347 = vmul.f32 %v296, %v296
    %v348 = vmul.f32 %v301, %v301
    %v349 = vmul.f32 %v306, %v306
    %v350 = vmul.f32 %v311, %v311
    %vm351 = vcmask 261120
    %v352 = vsel %vm351, %v347, 0.0
    %353 = vadd.xlane.f32.xlu0 %v352
    %v354 = vpop.xlane.xlu0 %353
    %v355 = vsel %vm351, %v348, 0.0
    %356 = vadd.xlane.f32.xlu0 %v355
    %v357 = vpop.xlane.xlu0 %356
    %v358 = vsel %vm351, %v349, 0.0
    %359 = vadd.xlane.f32.xlu0 %v358
    %v360 = vpop.xlane.xlu0 %359
    %v361 = vsel %vm351, %v350, 0.0
    %362 = vadd.xlane.f32.xlu0 %v361
    %v363 = vpop.xlane.xlu0 %362
    %v364 = vsub.f32 %v354, %v347
    %v365 = vsub.f32 %v357, %v348
    %v366 = vsub.f32 %v360, %v349
    %v367 = vsub.f32 %v363, %v350
    %v368 = vmax.f32 %v364, 1e-08
    %v369 = vmax.f32 %v365, 1e-08
    %v370 = vmax.f32 %v366, 1e-08
    %v371 = vmax.f32 %v367, 1e-08
    %v372 = vmul.f32 %v343, %v343
    %v373 = vmul.f32 %v344, %v344
    %v374 = vmul.f32 %v345, %v345
    %v375 = vmul.f32 %v346, %v346
    %v376 = vsub.f32 %v372, 1.0
    %v377 = vsub.f32 %v373, 1.0
    %v378 = vsub.f32 %v374, 1.0
    %v379 = vsub.f32 %v375, 1.0
    %v380 = vrsqrt.pop %v376
    %v381 = vmul.f32 %v376, %v380
    %vm382 = vcmp.eq.f32.partialorder %v376, inf
    %v383 = vsel %vm382, %v376, %v381
    %vm384 = vcmp.eq.f32.partialorder %v376, 0.0
    %v385 = vand.u32 %v376, 2147483648
    %v386 = vsel %vm384, %v385, %v383
    %v387 = vrsqrt.pop %v377
    %v388 = vmul.f32 %v377, %v387
    %vm389 = vcmp.eq.f32.partialorder %v377, inf
    %v390 = vsel %vm389, %v377, %v388
    %vm391 = vcmp.eq.f32.partialorder %v377, 0.0
    %v392 = vand.u32 %v377, 2147483648
    %v393 = vsel %vm391, %v392, %v390
    %v394 = vrsqrt.pop %v378
    %v395 = vmul.f32 %v378, %v394
    %vm396 = vcmp.eq.f32.partialorder %v378, inf
    %v397 = vsel %vm396, %v378, %v395
    %vm398 = vcmp.eq.f32.partialorder %v378, 0.0
    %v399 = vand.u32 %v378, 2147483648
    %v400 = vsel %vm398, %v399, %v397
    %v401 = vrsqrt.pop %v379
    %v402 = vmul.f32 %v379, %v401
    %vm403 = vcmp.eq.f32.partialorder %v379, inf
    %v404 = vsel %vm403, %v379, %v402
    %vm405 = vcmp.eq.f32.partialorder %v379, 0.0
    %v406 = vand.u32 %v379, 2147483648
    %v407 = vsel %vm405, %v406, %v404
    %v408 = vrsqrt.pop %v368
    %v409 = vrsqrt.pop %v369
    %v410 = vrsqrt.pop %v370
    %v411 = vrsqrt.pop %v371
    %v412 = vmul.f32 %v386, %v408
    %v413 = vmul.f32 %v393, %v409
    %v414 = vmul.f32 %v400, %v410
    %v415 = vmul.f32 %v407, %v411
    %417 = vset.pattern.permute.xlu0 0
    %418 = vperm.xlu0 %417, %v412
    %v419 = vpop.permute.xlu0 %418
    %422 = vset.pattern.permute.xlu0 0
    %423 = vperm.xlu0 %422, %v413
    %v424 = vpop.permute.xlu0 %423
    %427 = vset.pattern.permute.xlu0 0
    %428 = vperm.xlu0 %427, %v414
    %v429 = vpop.permute.xlu0 %428
    %432 = vset.pattern.permute.xlu0 0
    %433 = vperm.xlu0 %432, %v415
    %v434 = vpop.permute.xlu0 %433
    %v436 = vmul.f32 %v296, %v419
    %v437 = vmul.f32 %v301, %v424
    %v438 = vmul.f32 %v306, %v429
    %v439 = vmul.f32 %v311, %v434
    %441 = vset.pattern.permute.xlu0 0
    %442 = vperm.xlu0 %441, %v343
    %v443 = vpop.permute.xlu0 %442
    %446 = vset.pattern.permute.xlu0 0
    %447 = vperm.xlu0 %446, %v344
    %v448 = vpop.permute.xlu0 %447
    %451 = vset.pattern.permute.xlu0 0
    %452 = vperm.xlu0 %451, %v345
    %v453 = vpop.permute.xlu0 %452
    %456 = vset.pattern.permute.xlu0 0
    %457 = vperm.xlu0 %456, %v346
    %v458 = vpop.permute.xlu0 %457
    %v460 = vsel %vm126, %v443, %v436
    %v461 = vsel %vm126, %v448, %v437
    %v462 = vsel %vm126, %v453, %v438
    %v463 = vsel %vm126, %v458, %v439
    %v464 = vpack.c.bf16 %v461, %v460
    %v465 = vpack.c.bf16 %v463, %v462
    %v467 = vsel %vm351, %v200, 0
    %v470 = vsel %vm351, %v201, 0
    %472 = vmatprep.subr.bf16.mxu0 0
    %473 = vmatpush1.bf16.msra.mxu0 %v464
    %474 = vmatprep.subr.bf16.mxu0 0
    %475 = vmatpush1.bf16.msra.mxu0 %v465
    %476 = vmatprep.subr.bf16.mxu0 0
    %477 = vmatpush1.bf16.msra.mxu0 0
    %478 = vmatprep.subr.bf16.mxu0 0
    %479 = vmatpush1.bf16.msra.mxu0 0
    %480 = vmatprep.subr.bf16.mxu0 0
    %481 = vmatpush1.bf16.msra.mxu0 0
    %482 = vmatprep.subr.bf16.mxu0 0
    %483 = vmatpush1.bf16.msra.mxu0 0
    %484 = vmatprep.subr.bf16.mxu0 0
    %485 = vmatpush1.bf16.msra.mxu0 0
    %486 = vmatprep.subr.bf16.mxu0 0
    %487 = vmatpush1.bf16.msra.mxu0 0
    %488 = vmatprep.subr.bf16.mxu0 0
    %489 = vmatpush1.bf16.msra.mxu0 0
    %490 = vmatprep.subr.bf16.mxu0 0
    %491 = vmatpush1.bf16.msra.mxu0 0
    %492 = vmatprep.subr.bf16.mxu0 0
    %493 = vmatpush1.bf16.msra.mxu0 0
    %494 = vmatprep.subr.bf16.mxu0 0
    %495 = vmatpush1.bf16.msra.mxu0 0
    %496 = vmatprep.subr.bf16.mxu0 0
    %497 = vmatpush1.bf16.msra.mxu0 0
    %498 = vmatprep.subr.bf16.mxu0 0
    %499 = vmatpush1.bf16.msra.mxu0 0
    %500 = vmatprep.subr.bf16.mxu0 0
    %501 = vmatpush1.bf16.msra.mxu0 0
    %502 = vmatprep.subr.bf16.mxu0 0
    %503 = vmatpush1.bf16.msra.mxu0 0
    %504 = vmatprep.mubr.bf16.mxu0 0
    %505 = vmatmul.mubr.bf16.gmra.mrb[0].mxu0 %v467
    %v506 = vpop.f32.mrb[0].mxu0
    %v507 = vadd.f32 0.0, %v506
    %v508 = vpop.f32.mrb[0].mxu0
    %v509 = vpop.f32.mrb[0].mxu0
    %v510 = vadd.f32 0.0, %v509
    %v511 = vpop.f32.mrb[0].mxu0
    %512 = vmatprep.mubr.bf16.mxu0 0
    %513 = vmatmul.mubr.bf16.gmra.mrb[0].mxu0 %v470
    %v514 = vpop.f32.mrb[0].mxu0
    %v515 = vadd.f32 0.0, %v514
    %v516 = vpop.f32.mrb[0].mxu0
    %v517 = vpop.f32.mrb[0].mxu0
    %v518 = vadd.f32 0.0, %v517
    %v519 = vpop.f32.mrb[0].mxu0
    %520 = vdwg.mxu0
    %v521 = vmul.f32 %v507, %v507
    %v522 = vmul.f32 %v510, %v510
    %v523 = vmul.f32 %v515, %v515
    %v524 = vmul.f32 %v518, %v518
    %v525 = vsel %vm351, %v521, 0.0
    %526 = vadd.xlane.f32.xlu0 %v525
    %v527 = vpop.xlane.xlu0 %526
    %v528 = vsel %vm351, %v522, 0.0
    %529 = vadd.xlane.f32.xlu0 %v528
    %v530 = vpop.xlane.xlu0 %529
    %v531 = vsel %vm351, %v523, 0.0
    %532 = vadd.xlane.f32.xlu0 %v531
    %v533 = vpop.xlane.xlu0 %532
    %v534 = vsel %vm351, %v524, 0.0
    %535 = vadd.xlane.f32.xlu0 %v534
    %v536 = vpop.xlane.xlu0 %535
    %v537 = vmul.f32 %v507, 2.0
    %v538 = vmul.f32 %v510, 2.0
    %v539 = vmul.f32 %v515, 2.0
    %v540 = vmul.f32 %v518, 2.0
    %v541 = vmul.f32 %v537, %v507
    %v542 = vmul.f32 %v538, %v510
    %v543 = vmul.f32 %v539, %v515
    %v544 = vmul.f32 %v540, %v518
    %v545 = vsub.f32 %v527, %v541
    %v546 = vsub.f32 %v530, %v542
    %v547 = vsub.f32 %v533, %v543
    %v548 = vsub.f32 %v536, %v544
    %v549 = vand.u32 2147483647, %v545
    %v550 = vand.u32 2147483647, %v546
    %v551 = vand.u32 2147483647, %v547
    %v552 = vand.u32 2147483647, %v548
    %v553 = vmax.f32 %v549, 1e-08
    %v554 = vmax.f32 %v550, 1e-08
    %v555 = vmax.f32 %v551, 1e-08
    %v556 = vmax.f32 %v552, 1e-08
    %v557 = vrsqrt.pop %v553
    %v558 = vrsqrt.pop %v554
    %v559 = vrsqrt.pop %v555
    %v560 = vrsqrt.pop %v556
    %562 = vset.pattern.permute.xlu0 0
    %563 = vperm.xlu0 %562, %v557
    %v564 = vpop.permute.xlu0 %563
    %567 = vset.pattern.permute.xlu0 0
    %568 = vperm.xlu0 %567, %v558
    %v569 = vpop.permute.xlu0 %568
    %572 = vset.pattern.permute.xlu0 0
    %573 = vperm.xlu0 %572, %v559
    %v574 = vpop.permute.xlu0 %573
    %577 = vset.pattern.permute.xlu0 0
    %578 = vperm.xlu0 %577, %v560
    %v579 = vpop.permute.xlu0 %578
    %v581 = vmul.f32 %v507, %v564
    %v582 = vmul.f32 %v510, %v569
    %v583 = vmul.f32 %v515, %v574
    %v584 = vmul.f32 %v518, %v579
    %s585 = sld [smem:[#allocation2 + $0x1]]
    %v586 = vmax.f32 %v581, 0.0
    %v587 = vmax.f32 %v582, 0.0
    %v588 = vmax.f32 %v583, 0.0
    %v589 = vmax.f32 %v584, 0.0
    %v590 = vld [vmem:[%s5] sm:$0xff]
    %v591 = vld [vmem:[%s5 + $0x8] sm:$0xff]
    %v592 = vld [vmem:[%s5 + $0x10] sm:$0xff]
    %v593 = vld [vmem:[%s5 + $0x18] sm:$0xff]
    %v594 = vld [vmem:[#allocation6] sm:$0x1]
    %v596 = vlaneseq
    %v597 = vshrl.u32 %v596, 7
    %v598 = vsub.s32 0, %v597
    %v599 = vrot.slane %v594, %v598
    %v602 = vsel %vm351, %v586, 0
    %v605 = vsel %vm351, %v587, 0
    %v608 = vsel %vm351, %v588, 0
    %v611 = vsel %vm351, %v589, 0
    %613 = vmatprep.subr.mxu0 0.0
    %614 = vmatpush1.msra.mxu0 %v590
    %615 = vmatprep.subr.mxu0 0.0
    %616 = vmatpush1.msra.mxu0 %v591
    %617 = vmatprep.subr.mxu0 0.0
    %618 = vmatpush1.msra.mxu0 %v592
    %619 = vmatprep.subr.mxu0 0.0
    %620 = vmatpush1.msra.mxu0 %v593
    %621 = vmatprep.subr.mxu0 0.0
    %622 = vmatpush1.msra.mxu0 0.0
    %623 = vmatprep.subr.mxu0 0.0
    %624 = vmatpush1.msra.mxu0 0.0
    %625 = vmatprep.subr.mxu0 0.0
    %626 = vmatpush1.msra.mxu0 0.0
    %627 = vmatprep.subr.mxu0 0.0
    %628 = vmatpush1.msra.mxu0 0.0
    %629 = vmatprep.subr.mxu0 0.0
    %630 = vmatpush1.msra.mxu0 0.0
    %631 = vmatprep.subr.mxu0 0.0
    %632 = vmatpush1.msra.mxu0 0.0
    %633 = vmatprep.subr.mxu0 0.0
    %634 = vmatpush1.msra.mxu0 0.0
    %635 = vmatprep.subr.mxu0 0.0
    %636 = vmatpush1.msra.mxu0 0.0
    %637 = vmatprep.subr.mxu0 0.0
    %638 = vmatpush1.msra.mxu0 0.0
    %639 = vmatprep.subr.mxu0 0.0
    %640 = vmatpush1.msra.mxu0 0.0
    %641 = vmatprep.subr.mxu0 0.0
    %642 = vmatpush1.msra.mxu0 0.0
    %643 = vmatprep.subr.mxu0 0.0
    %644 = vmatpush1.msra.mxu0 0.0
    %645 = vmatprep.subr.mxu0 0.0
    %646 = vmatpush1.msra.mxu0 0.0
    %647 = vmatprep.subr.mxu0 0.0
    %648 = vmatpush1.msra.mxu0 0.0
    %649 = vmatprep.subr.mxu0 0.0
    %650 = vmatpush1.msra.mxu0 0.0
    %651 = vmatprep.subr.mxu0 0.0
    %652 = vmatpush1.msra.mxu0 0.0
    %653 = vmatprep.subr.mxu0 0.0
    %654 = vmatpush1.msra.mxu0 0.0
    %655 = vmatprep.subr.mxu0 0.0
    %656 = vmatpush1.msra.mxu0 0.0
    %657 = vmatprep.subr.mxu0 0.0
    %658 = vmatpush1.msra.mxu0 0.0
    %659 = vmatprep.subr.mxu0 0.0
    %660 = vmatpush1.msra.mxu0 0.0
    %661 = vmatprep.subr.mxu0 0.0
    %662 = vmatpush1.msra.mxu0 0.0
    %663 = vmatprep.subr.mxu0 0.0
    %664 = vmatpush1.msra.mxu0 0.0
    %665 = vmatprep.subr.mxu0 0.0
    %666 = vmatpush1.msra.mxu0 0.0
    %667 = vmatprep.subr.mxu0 0.0
    %668 = vmatpush1.msra.mxu0 0.0
    %669 = vmatprep.subr.mxu0 0.0
    %670 = vmatpush1.msra.mxu0 0.0
    %671 = vmatprep.subr.mxu0 0.0
    %672 = vmatpush1.msra.mxu0 0.0
    %673 = vmatprep.subr.mxu0 0.0
    %674 = vmatpush1.msra.mxu0 0.0
    %675 = vmatprep.subr.mxu0 0.0
    %676 = vmatpush1.msra.mxu0 0.0
    %677 = vmatprep.mubr.f32.mxu0 0.0
    %678 = vmatmul.mubr.f32.gmra.mrb[0].mxu0 %v602
    %v679 = vpop.f32.mrb[0].mxu0
    %v680 = vadd.f32 %v599, %v679
    %v681 = vpop.f32.mrb[0].mxu0
    %682 = vmatprep.mubr.f32.mxu0 0.0
    %683 = vmatmul.mubr.f32.gmra.mrb[0].mxu0 %v605
    %v684 = vpop.f32.mrb[0].mxu0
    %v685 = vadd.f32 %v599, %v684
    %v686 = vpop.f32.mrb[0].mxu0
    %687 = vmatprep.mubr.f32.mxu0 0.0
    %688 = vmatmul.mubr.f32.gmra.mrb[0].mxu0 %v608
    %v689 = vpop.f32.mrb[0].mxu0
    %v690 = vadd.f32 %v599, %v689
    %v691 = vpop.f32.mrb[0].mxu0
    %692 = vmatprep.mubr.f32.mxu0 0.0
    %693 = vmatmul.mubr.f32.gmra.mrb[0].mxu0 %v611
    %v694 = vpop.f32.mrb[0].mxu0
    %v695 = vadd.f32 %v599, %v694
    %v696 = vpop.f32.mrb[0].mxu0
    %697 = vdwg.mxu0
    %v698 = vsub.f32 0.0, %v680
    %v699 = vsub.f32 0.0, %v685
    %v700 = vsub.f32 0.0, %v690
    %v701 = vsub.f32 0.0, %v695
    %v702 = vmul.f32 %v698, 1.442695
    %v703 = vpow.pop %v702
    %v704 = vmul.f32 %v699, 1.442695
    %v705 = vpow.pop %v704
    %v706 = vmul.f32 %v700, 1.442695
    %v707 = vpow.pop %v706
    %v708 = vmul.f32 %v701, 1.442695
    %v709 = vpow.pop %v708
    %v710 = vadd.f32 %v703, 1.0
    %v711 = vadd.f32 %v705, 1.0
    %v712 = vadd.f32 %v707, 1.0
    %v713 = vadd.f32 %v709, 1.0
    %v714 = vrcp.pop %v710
    %v715 = vmul.f32 1.0, %v714
    %v716 = vrcp.pop %v711
    %v717 = vmul.f32 1.0, %v716
    %v718 = vrcp.pop %v712
    %v719 = vmul.f32 1.0, %v718
    %v720 = vrcp.pop %v713
    %v721 = vmul.f32 1.0, %v720
    %v722 = vstv %s585
    %v723 = vmul.f32 %v715, %v722
    %v724 = vmul.f32 %v717, %v722
    %v725 = vmul.f32 %v719, %v722
    %v726 = vmul.f32 %v721, %v722
    %v727 = vadd.f32 %v723, 1.1
    %v728 = vadd.f32 %v724, 1.1
    %v729 = vadd.f32 %v725, 1.1
    %v730 = vadd.f32 %v726, 1.1
    %v731 = vmul.f32 %v680, %v680
    %v732 = vmul.f32 %v685, %v685
    %v733 = vmul.f32 %v690, %v690
    %v734 = vmul.f32 %v695, %v695
    %v735 = vsel %vm131, %v731, 0.0
    %736 = vadd.xlane.f32.xlu0 %v735
    %v737 = vpop.xlane.xlu0 %736
    %v738 = vsel %vm131, %v732, 0.0
    %739 = vadd.xlane.f32.xlu0 %v738
    %v740 = vpop.xlane.xlu0 %739
    %v741 = vsel %vm131, %v733, 0.0
    %742 = vadd.xlane.f32.xlu0 %v741
    %v743 = vpop.xlane.xlu0 %742
    %v744 = vsel %vm131, %v734, 0.0
    %745 = vadd.xlane.f32.xlu0 %v744
    %v746 = vpop.xlane.xlu0 %745
    %v747 = vsub.f32 %v737, %v731
    %v748 = vsub.f32 %v740, %v732
    %v749 = vsub.f32 %v743, %v733
    %v750 = vsub.f32 %v746, %v734
    %v751 = vmax.f32 %v747, 1e-08
    %v752 = vmax.f32 %v748, 1e-08
    %v753 = vmax.f32 %v749, 1e-08
    %v754 = vmax.f32 %v750, 1e-08
    %v755 = vmul.f32 %v727, %v727
    %v756 = vmul.f32 %v728, %v728
    %v757 = vmul.f32 %v729, %v729
    %v758 = vmul.f32 %v730, %v730
    %v759 = vsub.f32 %v755, 1.0
    %v760 = vsub.f32 %v756, 1.0
    %v761 = vsub.f32 %v757, 1.0
    %v762 = vsub.f32 %v758, 1.0
    %v763 = vrsqrt.pop %v759
    %v764 = vmul.f32 %v759, %v763
    %vm765 = vcmp.eq.f32.partialorder %v759, inf
    %v766 = vsel %vm765, %v759, %v764
    %vm767 = vcmp.eq.f32.partialorder %v759, 0.0
    %v768 = vand.u32 %v759, 2147483648
    %v769 = vsel %vm767, %v768, %v766
    %v770 = vrsqrt.pop %v760
    %v771 = vmul.f32 %v760, %v770
    %vm772 = vcmp.eq.f32.partialorder %v760, inf
    %v773 = vsel %vm772, %v760, %v771
    %vm774 = vcmp.eq.f32.partialorder %v760, 0.0
    %v775 = vand.u32 %v760, 2147483648
    %v776 = vsel %vm774, %v775, %v773
    %v777 = vrsqrt.pop %v761
    %v778 = vmul.f32 %v761, %v777
    %vm779 = vcmp.eq.f32.partialorder %v761, inf
    %v780 = vsel %vm779, %v761, %v778
    %vm781 = vcmp.eq.f32.partialorder %v761, 0.0
    %v782 = vand.u32 %v761, 2147483648
    %v783 = vsel %vm781, %v782, %v780
    %v784 = vrsqrt.pop %v762
    %v785 = vmul.f32 %v762, %v784
    %vm786 = vcmp.eq.f32.partialorder %v762, inf
    %v787 = vsel %vm786, %v762, %v785
    %vm788 = vcmp.eq.f32.partialorder %v762, 0.0
    %v789 = vand.u32 %v762, 2147483648
    %v790 = vsel %vm788, %v789, %v787
    %v791 = vrsqrt.pop %v751
    %v792 = vrsqrt.pop %v752
    %v793 = vrsqrt.pop %v753
    %v794 = vrsqrt.pop %v754
    %v795 = vmul.f32 %v769, %v791
    %v796 = vmul.f32 %v776, %v792
    %v797 = vmul.f32 %v783, %v793
    %v798 = vmul.f32 %v790, %v794
    %800 = vset.pattern.permute.xlu0 0
    %801 = vperm.xlu0 %800, %v795
    %v802 = vpop.permute.xlu0 %801
    %805 = vset.pattern.permute.xlu0 0
    %806 = vperm.xlu0 %805, %v796
    %v807 = vpop.permute.xlu0 %806
    %810 = vset.pattern.permute.xlu0 0
    %811 = vperm.xlu0 %810, %v797
    %v812 = vpop.permute.xlu0 %811
    %815 = vset.pattern.permute.xlu0 0
    %816 = vperm.xlu0 %815, %v798
    %v817 = vpop.permute.xlu0 %816
    %v819 = vmul.f32 %v680, %v802
    %v820 = vmul.f32 %v685, %v807
    %v821 = vmul.f32 %v690, %v812
    %v822 = vmul.f32 %v695, %v817
    %824 = vset.pattern.permute.xlu0 0
    %825 = vperm.xlu0 %824, %v727
    %v826 = vpop.permute.xlu0 %825
    %829 = vset.pattern.permute.xlu0 0
    %830 = vperm.xlu0 %829, %v728
    %v831 = vpop.permute.xlu0 %830
    %834 = vset.pattern.permute.xlu0 0
    %835 = vperm.xlu0 %834, %v729
    %v836 = vpop.permute.xlu0 %835
    %839 = vset.pattern.permute.xlu0 0
    %840 = vperm.xlu0 %839, %v730
    %v841 = vpop.permute.xlu0 %840
    %v843 = vsel %vm126, %v826, %v819
    %v844 = vsel %vm126, %v831, %v820
    %v845 = vsel %vm126, %v836, %v821
    %v846 = vsel %vm126, %v841, %v822
    %v847 = vpack.c.bf16 %v844, %v843
    %v848 = vpack.c.bf16 %v846, %v845
    %849 = vmatprep.subr.bf16.mxu0 0
    %850 = vmatpush1.bf16.msra.mxu0 %v847
    %851 = vmatprep.subr.bf16.mxu0 0
    %852 = vmatpush1.bf16.msra.mxu0 %v848
    %853 = vmatprep.subr.bf16.mxu0 0
    %854 = vmatpush1.bf16.msra.mxu0 0
    %855 = vmatprep.subr.bf16.mxu0 0
    %856 = vmatpush1.bf16.msra.mxu0 0
    %857 = vmatprep.subr.bf16.mxu0 0
    %858 = vmatpush1.bf16.msra.mxu0 0
    %859 = vmatprep.subr.bf16.mxu0 0
    %860 = vmatpush1.bf16.msra.mxu0 0
    %861 = vmatprep.subr.bf16.mxu0 0
    %862 = vmatpush1.bf16.msra.mxu0 0
    %863 = vmatprep.subr.bf16.mxu0 0
    %864 = vmatpush1.bf16.msra.mxu0 0
    %865 = vmatprep.subr.bf16.mxu0 0
    %866 = vmatpush1.bf16.msra.mxu0 0
    %867 = vmatprep.subr.bf16.mxu0 0
    %868 = vmatpush1.bf16.msra.mxu0 0
    %869 = vmatprep.subr.bf16.mxu0 0
    %870 = vmatpush1.bf16.msra.mxu0 0
    %871 = vmatprep.subr.bf16.mxu0 0
    %872 = vmatpush1.bf16.msra.mxu0 0
    %873 = vmatprep.subr.bf16.mxu0 0
    %874 = vmatpush1.bf16.msra.mxu0 0
    %875 = vmatprep.subr.bf16.mxu0 0
    %876 = vmatpush1.bf16.msra.mxu0 0
    %877 = vmatprep.subr.bf16.mxu0 0
    %878 = vmatpush1.bf16.msra.mxu0 0
    %879 = vmatprep.subr.bf16.mxu0 0
    %880 = vmatpush1.bf16.msra.mxu0 0
    %881 = vmatprep.mubr.bf16.mxu0 0
    %882 = vmatmul.mubr.bf16.gmra.mrb[0].mxu0 %v467
    %v883 = vpop.f32.mrb[0].mxu0
    %v884 = vadd.f32 0.0, %v883
    %v885 = vpop.f32.mrb[0].mxu0
    %v886 = vpop.f32.mrb[0].mxu0
    %v887 = vadd.f32 0.0, %v886
    %v888 = vpop.f32.mrb[0].mxu0
    %889 = vmatprep.mubr.bf16.mxu0 0
    %890 = vmatmul.mubr.bf16.gmra.mrb[0].mxu0 %v470
    %v891 = vpop.f32.mrb[0].mxu0
    %v892 = vadd.f32 0.0, %v891
    %v893 = vpop.f32.mrb[0].mxu0
    %v894 = vpop.f32.mrb[0].mxu0
    %v895 = vadd.f32 0.0, %v894
    %v896 = vpop.f32.mrb[0].mxu0
    %897 = vdwg.mxu0
    %v898 = vmul.f32 %v884, %v884
    %v899 = vmul.f32 %v887, %v887
    %v900 = vmul.f32 %v892, %v892
    %v901 = vmul.f32 %v895, %v895
    %v902 = vsel %vm131, %v898, 0.0
    %903 = vadd.xlane.f32.xlu0 %v902
    %v904 = vpop.xlane.xlu0 %903
    %v905 = vsel %vm131, %v899, 0.0
    %906 = vadd.xlane.f32.xlu0 %v905
    %v907 = vpop.xlane.xlu0 %906
    %v908 = vsel %vm131, %v900, 0.0
    %909 = vadd.xlane.f32.xlu0 %v908
    %v910 = vpop.xlane.xlu0 %909
    %v911 = vsel %vm131, %v901, 0.0
    %912 = vadd.xlane.f32.xlu0 %v911
    %v913 = vpop.xlane.xlu0 %912
    %v914 = vmul.f32 %v884, 2.0
    %v915 = vmul.f32 %v887, 2.0
    %v916 = vmul.f32 %v892, 2.0
    %v917 = vmul.f32 %v895, 2.0
    %v918 = vmul.f32 %v914, %v884
    %v919 = vmul.f32 %v915, %v887
    %v920 = vmul.f32 %v916, %v892
    %v921 = vmul.f32 %v917, %v895
    %v922 = vsub.f32 %v904, %v918
    %v923 = vsub.f32 %v907, %v919
    %v924 = vsub.f32 %v910, %v920
    %v925 = vsub.f32 %v913, %v921
    %v926 = vand.u32 2147483647, %v922
    %v927 = vand.u32 2147483647, %v923
    %v928 = vand.u32 2147483647, %v924
    %v929 = vand.u32 2147483647, %v925
    %v930 = vmax.f32 %v926, 1e-08
    %v931 = vmax.f32 %v927, 1e-08
    %v932 = vmax.f32 %v928, 1e-08
    %v933 = vmax.f32 %v929, 1e-08
    %v934 = vrsqrt.pop %v930
    %v935 = vrsqrt.pop %v931
    %v936 = vrsqrt.pop %v932
    %v937 = vrsqrt.pop %v933
    %939 = vset.pattern.permute.xlu0 0
    %940 = vperm.xlu0 %939, %v934
    %v941 = vpop.permute.xlu0 %940
    %944 = vset.pattern.permute.xlu0 0
    %945 = vperm.xlu0 %944, %v935
    %v946 = vpop.permute.xlu0 %945
    %949 = vset.pattern.permute.xlu0 0
    %950 = vperm.xlu0 %949, %v936
    %v951 = vpop.permute.xlu0 %950
    %954 = vset.pattern.permute.xlu0 0
    %955 = vperm.xlu0 %954, %v937
    %v956 = vpop.permute.xlu0 %955
    %v958 = vmul.f32 %v884, %v941
    %v959 = vmul.f32 %v887, %v946
    %v960 = vmul.f32 %v892, %v951
    %v961 = vmul.f32 %v895, %v956
    %v962 = vsel %vm126, 0.0, %v958
    %v963 = vsel %vm126, 0.0, %v959
    %v964 = vsel %vm126, 0.0, %v960
    %v965 = vsel %vm126, 0.0, %v961
    %v966 = vadd.f32 %v958, 1.0
    %v967 = vadd.f32 %v959, 1.0
    %v968 = vadd.f32 %v960, 1.0
    %v969 = vadd.f32 %v961, 1.0
    %v970 = vrcp.pop %v966
    %v971 = vmul.f32 1.0, %v970
    %v972 = vrcp.pop %v967
    %v973 = vmul.f32 1.0, %v972
    %v974 = vrcp.pop %v968
    %v975 = vmul.f32 1.0, %v974
    %v976 = vrcp.pop %v969
    %v977 = vmul.f32 1.0, %v976
    %979 = vset.pattern.permute.xlu0 0
    %980 = vperm.xlu0 %979, %v971
    %v981 = vpop.permute.xlu0 %980
    %984 = vset.pattern.permute.xlu0 0
    %985 = vperm.xlu0 %984, %v973
    %v986 = vpop.permute.xlu0 %985
    %989 = vset.pattern.permute.xlu0 0
    %990 = vperm.xlu0 %989, %v975
    %v991 = vpop.permute.xlu0 %990
    %994 = vset.pattern.permute.xlu0 0
    %995 = vperm.xlu0 %994, %v977
    %v996 = vpop.permute.xlu0 %995
    %v998 = vmul.f32 %v962, %v981
    %v999 = vmul.f32 %v963, %v986
    %v1000 = vmul.f32 %v964, %v991
    %v1001 = vmul.f32 %v965, %v996
    %v1002 = vmul.f32 %v998, %v998
    %v1003 = vmul.f32 %v999, %v999
    %v1004 = vmul.f32 %v1000, %v1000
    %v1005 = vmul.f32 %v1001, %v1001
    %v1006 = vsel %vm131, %v1002, 0.0
    %1007 = vadd.xlane.f32.xlu0 %v1006
    %v1008 = vpop.xlane.xlu0 %1007
    %v1009 = vsel %vm131, %v1003, 0.0
    %1010 = vadd.xlane.f32.xlu0 %v1009
    %v1011 = vpop.xlane.xlu0 %1010
    %v1012 = vsel %vm131, %v1004, 0.0
    %1013 = vadd.xlane.f32.xlu0 %v1012
    %v1014 = vpop.xlane.xlu0 %1013
    %v1015 = vsel %vm131, %v1005, 0.0
    %1016 = vadd.xlane.f32.xlu0 %v1015
    %v1017 = vpop.xlane.xlu0 %1016
    %v1018 = vmax.f32 %v1008, 1e-24
    %v1019 = vmax.f32 %v1011, 1e-24
    %v1020 = vmax.f32 %v1014, 1e-24
    %v1021 = vmax.f32 %v1017, 1e-24
    %v1022 = vrsqrt.pop %v1018
    %v1023 = vrsqrt.pop %v1019
    %v1024 = vrsqrt.pop %v1020
    %v1025 = vrsqrt.pop %v1021
    %v1026 = vmul.f32 %v998, %v1022
    %v1027 = vmul.f32 %v999, %v1023
    %v1028 = vmul.f32 %v1000, %v1024
    %v1029 = vmul.f32 %v1001, %v1025
    %s1030 = sld [smem:[#allocation2 + $0x2]]
    %v1031 = vstv %s1030
    %v1032 = vmul.f32 %v1026, %v1031
    %v1033 = vmul.f32 %v1027, %v1031
    %v1034 = vmul.f32 %v1028, %v1031
    %v1035 = vmul.f32 %v1029, %v1031
    %v1036 = vmul.f32 %v1032, %v1032
    %v1037 = vmul.f32 %v1033, %v1033
    %v1038 = vmul.f32 %v1034, %v1034
    %v1039 = vmul.f32 %v1035, %v1035
    %v1040 = vsel %vm131, %v1036, 0.0
    %1041 = vadd.xlane.f32.xlu0 %v1040
    %v1042 = vpop.xlane.xlu0 %1041
    %v1043 = vsel %vm131, %v1037, 0.0
    %1044 = vadd.xlane.f32.xlu0 %v1043
    %v1045 = vpop.xlane.xlu0 %1044
    %v1046 = vsel %vm131, %v1038, 0.0
    %1047 = vadd.xlane.f32.xlu0 %v1046
    %v1048 = vpop.xlane.xlu0 %1047
    %v1049 = vsel %vm131, %v1039, 0.0
    %1050 = vadd.xlane.f32.xlu0 %v1049
    %v1051 = vpop.xlane.xlu0 %1050
    %v1052 = vsub.f32 1.0, %v1042
    %v1053 = vsub.f32 1.0, %v1045
    %v1054 = vsub.f32 1.0, %v1048
    %v1055 = vsub.f32 1.0, %v1051
    %v1056 = vadd.f32 %v1052, 1e-06
    %v1057 = vadd.f32 %v1053, 1e-06
    %v1058 = vadd.f32 %v1054, 1e-06
    %v1059 = vadd.f32 %v1055, 1e-06
    %v1060 = vrcp.pop %v1056
    %v1061 = vmul.f32 1.0, %v1060
    %v1062 = vrcp.pop %v1057
    %v1063 = vmul.f32 1.0, %v1062
    %v1064 = vrcp.pop %v1058
    %v1065 = vmul.f32 1.0, %v1064
    %v1066 = vrcp.pop %v1059
    %v1067 = vmul.f32 1.0, %v1066
    %v1068 = vadd.f32 %v1042, 1.0
    %v1069 = vadd.f32 %v1045, 1.0
    %v1070 = vadd.f32 %v1048, 1.0
    %v1071 = vadd.f32 %v1051, 1.0
    %v1072 = vmul.f32 %v1068, %v1061
    %v1073 = vmul.f32 %v1069, %v1063
    %v1074 = vmul.f32 %v1070, %v1065
    %v1075 = vmul.f32 %v1071, %v1067
    %v1076 = vmul.f32 %v1032, 2.0
    %v1077 = vmul.f32 %v1033, 2.0
    %v1078 = vmul.f32 %v1034, 2.0
    %v1079 = vmul.f32 %v1035, 2.0
    %v1080 = vmul.f32 %v1076, %v1061
    %v1081 = vmul.f32 %v1077, %v1063
    %v1082 = vmul.f32 %v1078, %v1065
    %v1083 = vmul.f32 %v1079, %v1067
    %v1084 = vsel %vm126, %v1072, %v1080
    %v1085 = vsel %vm126, %v1073, %v1081
    %v1086 = vsel %vm126, %v1074, %v1082
    %v1087 = vsel %vm126, %v1075, %v1083
    %1088 = vst.msk [vmem:[%s23] sm:$0xff] %vm131, %v1084
    %1089 = vst.msk [vmem:[%s23 + $0x8] sm:$0xff] %vm131, %v1085
    %1090 = vst.msk [vmem:[%s23 + $0x10] sm:$0xff] %vm131, %v1086
    %1091 = vst.msk [vmem:[%s23 + $0x18] sm:$0xff] %vm131, %v1087
    %s1092 = sld [smem:[#allocation2 + $0x3]]
    %v1093 = vld [vmem:[%s7] sm:$0xff]
    %v1094 = vld [vmem:[%s7 + $0x8] sm:$0xff]
    %v1095 = vld [vmem:[%s7 + $0x10] sm:$0x1]
    %v1096 = vld [vmem:[#allocation7] sm:$0x1]
    %v1098 = vlaneseq
    %v1099 = vshrl.u32 %v1098, 7
    %v1100 = vsub.s32 0, %v1099
    %v1101 = vrot.slane %v1096, %v1100
    %v1104 = vsel %vm131, %v1084, 0
    %v1107 = vsel %vm131, %v1085, 0
    %v1110 = vsel %vm131, %v1086, 0
    %v1113 = vsel %vm131, %v1087, 0
    %v1116 = vsel %vm225, %v1095, 0
    %1118 = vmatprep.subr.mxu0 0.0
    %1119 = vmatpush1.msra.mxu0 %v1093
    %1120 = vmatprep.subr.mxu0 0.0
    %1121 = vmatpush1.msra.mxu0 %v1094
    %1122 = vmatprep.subr.mxu0 0.0
    %1123 = vmatpush1.msra.mxu0 %v1116
    %1124 = vmatprep.subr.mxu0 0.0
    %1125 = vmatpush1.msra.mxu0 0.0
    %1126 = vmatprep.subr.mxu0 0.0
    %1127 = vmatpush1.msra.mxu0 0.0
    %1128 = vmatprep.subr.mxu0 0.0
    %1129 = vmatpush1.msra.mxu0 0.0
    %1130 = vmatprep.subr.mxu0 0.0
    %1131 = vmatpush1.msra.mxu0 0.0
    %1132 = vmatprep.subr.mxu0 0.0
    %1133 = vmatpush1.msra.mxu0 0.0
    %1134 = vmatprep.subr.mxu0 0.0
    %1135 = vmatpush1.msra.mxu0 0.0
    %1136 = vmatprep.subr.mxu0 0.0
    %1137 = vmatpush1.msra.mxu0 0.0
    %1138 = vmatprep.subr.mxu0 0.0
    %1139 = vmatpush1.msra.mxu0 0.0
    %1140 = vmatprep.subr.mxu0 0.0
    %1141 = vmatpush1.msra.mxu0 0.0
    %1142 = vmatprep.subr.mxu0 0.0
    %1143 = vmatpush1.msra.mxu0 0.0
    %1144 = vmatprep.subr.mxu0 0.0
    %1145 = vmatpush1.msra.mxu0 0.0
    %1146 = vmatprep.subr.mxu0 0.0
    %1147 = vmatpush1.msra.mxu0 0.0
    %1148 = vmatprep.subr.mxu0 0.0
    %1149 = vmatpush1.msra.mxu0 0.0
    %1150 = vmatprep.subr.mxu0 0.0
    %1151 = vmatpush1.msra.mxu0 0.0
    %1152 = vmatprep.subr.mxu0 0.0
    %1153 = vmatpush1.msra.mxu0 0.0
    %1154 = vmatprep.subr.mxu0 0.0
    %1155 = vmatpush1.msra.mxu0 0.0
    %1156 = vmatprep.subr.mxu0 0.0
    %1157 = vmatpush1.msra.mxu0 0.0
    %1158 = vmatprep.subr.mxu0 0.0
    %1159 = vmatpush1.msra.mxu0 0.0
    %1160 = vmatprep.subr.mxu0 0.0
    %1161 = vmatpush1.msra.mxu0 0.0
    %1162 = vmatprep.subr.mxu0 0.0
    %1163 = vmatpush1.msra.mxu0 0.0
    %1164 = vmatprep.subr.mxu0 0.0
    %1165 = vmatpush1.msra.mxu0 0.0
    %1166 = vmatprep.subr.mxu0 0.0
    %1167 = vmatpush1.msra.mxu0 0.0
    %1168 = vmatprep.subr.mxu0 0.0
    %1169 = vmatpush1.msra.mxu0 0.0
    %1170 = vmatprep.subr.mxu0 0.0
    %1171 = vmatpush1.msra.mxu0 0.0
    %1172 = vmatprep.subr.mxu0 0.0
    %1173 = vmatpush1.msra.mxu0 0.0
    %1174 = vmatprep.subr.mxu0 0.0
    %1175 = vmatpush1.msra.mxu0 0.0
    %1176 = vmatprep.subr.mxu0 0.0
    %1177 = vmatpush1.msra.mxu0 0.0
    %1178 = vmatprep.subr.mxu0 0.0
    %1179 = vmatpush1.msra.mxu0 0.0
    %1180 = vmatprep.subr.mxu0 0.0
    %1181 = vmatpush1.msra.mxu0 0.0
    %1182 = vmatprep.mubr.f32.mxu0 0.0
    %1183 = vmatmul.mubr.f32.gmra.mrb[0].mxu0 %v1104
    %v1184 = vpop.f32.mrb[0].mxu0
    %v1185 = vadd.f32 %v1101, %v1184
    %v1186 = vpop.f32.mrb[0].mxu0
    %1187 = vmatprep.mubr.f32.mxu0 0.0
    %1188 = vmatmul.mubr.f32.gmra.mrb[0].mxu0 %v1107
    %v1189 = vpop.f32.mrb[0].mxu0
    %v1190 = vadd.f32 %v1101, %v1189
    %v1191 = vpop.f32.mrb[0].mxu0
    %1192 = vmatprep.mubr.f32.mxu0 0.0
    %1193 = vmatmul.mubr.f32.gmra.mrb[0].mxu0 %v1110
    %v1194 = vpop.f32.mrb[0].mxu0
    %v1195 = vadd.f32 %v1101, %v1194
    %v1196 = vpop.f32.mrb[0].mxu0
    %1197 = vmatprep.mubr.f32.mxu0 0.0
    %1198 = vmatmul.mubr.f32.gmra.mrb[0].mxu0 %v1113
    %v1199 = vpop.f32.mrb[0].mxu0
    %v1200 = vadd.f32 %v1101, %v1199
    %v1201 = vpop.f32.mrb[0].mxu0
    %1202 = vdwg.mxu0
    %v1203 = vsub.f32 0.0, %v1185
    %v1204 = vsub.f32 0.0, %v1190
    %v1205 = vsub.f32 0.0, %v1195
    %v1206 = vsub.f32 0.0, %v1200
    %v1207 = vmul.f32 %v1203, 1.442695
    %v1208 = vpow.pop %v1207
    %v1209 = vmul.f32 %v1204, 1.442695
    %v1210 = vpow.pop %v1209
    %v1211 = vmul.f32 %v1205, 1.442695
    %v1212 = vpow.pop %v1211
    %v1213 = vmul.f32 %v1206, 1.442695
    %v1214 = vpow.pop %v1213
    %v1215 = vadd.f32 %v1208, 1.0
    %v1216 = vadd.f32 %v1210, 1.0
    %v1217 = vadd.f32 %v1212, 1.0
    %v1218 = vadd.f32 %v1214, 1.0
    %v1219 = vrcp.pop %v1215
    %v1220 = vmul.f32 1.0, %v1219
    %v1221 = vrcp.pop %v1216
    %v1222 = vmul.f32 1.0, %v1221
    %v1223 = vrcp.pop %v1217
    %v1224 = vmul.f32 1.0, %v1223
    %v1225 = vrcp.pop %v1218
    %v1226 = vmul.f32 1.0, %v1225
    %v1227 = vstv %s1092
    %v1228 = vmul.f32 %v1220, %v1227
    %v1229 = vmul.f32 %v1222, %v1227
    %v1230 = vmul.f32 %v1224, %v1227
    %v1231 = vmul.f32 %v1226, %v1227
    %v1232 = vadd.f32 %v1228, 1.1
    %v1233 = vadd.f32 %v1229, 1.1
    %v1234 = vadd.f32 %v1230, 1.1
    %v1235 = vadd.f32 %v1231, 1.1
    %v1236 = vmul.f32 %v1185, %v1185
    %v1237 = vmul.f32 %v1190, %v1190
    %v1238 = vmul.f32 %v1195, %v1195
    %v1239 = vmul.f32 %v1200, %v1200
    %v1240 = vsel %vm351, %v1236, 0.0
    %1241 = vadd.xlane.f32.xlu0 %v1240
    %v1242 = vpop.xlane.xlu0 %1241
    %v1243 = vsel %vm351, %v1237, 0.0
    %1244 = vadd.xlane.f32.xlu0 %v1243
    %v1245 = vpop.xlane.xlu0 %1244
    %v1246 = vsel %vm351, %v1238, 0.0
    %1247 = vadd.xlane.f32.xlu0 %v1246
    %v1248 = vpop.xlane.xlu0 %1247
    %v1249 = vsel %vm351, %v1239, 0.0
    %1250 = vadd.xlane.f32.xlu0 %v1249
    %v1251 = vpop.xlane.xlu0 %1250
    %v1252 = vsub.f32 %v1242, %v1236
    %v1253 = vsub.f32 %v1245, %v1237
    %v1254 = vsub.f32 %v1248, %v1238
    %v1255 = vsub.f32 %v1251, %v1239
    %v1256 = vmax.f32 %v1252, 1e-08
    %v1257 = vmax.f32 %v1253, 1e-08
    %v1258 = vmax.f32 %v1254, 1e-08
    %v1259 = vmax.f32 %v1255, 1e-08
    %v1260 = vmul.f32 %v1232, %v1232
    %v1261 = vmul.f32 %v1233, %v1233
    %v1262 = vmul.f32 %v1234, %v1234
    %v1263 = vmul.f32 %v1235, %v1235
    %v1264 = vsub.f32 %v1260, 1.0
    %v1265 = vsub.f32 %v1261, 1.0
    %v1266 = vsub.f32 %v1262, 1.0
    %v1267 = vsub.f32 %v1263, 1.0
    %v1268 = vrsqrt.pop %v1264
    %v1269 = vmul.f32 %v1264, %v1268
    %vm1270 = vcmp.eq.f32.partialorder %v1264, inf
    %v1271 = vsel %vm1270, %v1264, %v1269
    %vm1272 = vcmp.eq.f32.partialorder %v1264, 0.0
    %v1273 = vand.u32 %v1264, 2147483648
    %v1274 = vsel %vm1272, %v1273, %v1271
    %v1275 = vrsqrt.pop %v1265
    %v1276 = vmul.f32 %v1265, %v1275
    %vm1277 = vcmp.eq.f32.partialorder %v1265, inf
    %v1278 = vsel %vm1277, %v1265, %v1276
    %vm1279 = vcmp.eq.f32.partialorder %v1265, 0.0
    %v1280 = vand.u32 %v1265, 2147483648
    %v1281 = vsel %vm1279, %v1280, %v1278
    %v1282 = vrsqrt.pop %v1266
    %v1283 = vmul.f32 %v1266, %v1282
    %vm1284 = vcmp.eq.f32.partialorder %v1266, inf
    %v1285 = vsel %vm1284, %v1266, %v1283
    %vm1286 = vcmp.eq.f32.partialorder %v1266, 0.0
    %v1287 = vand.u32 %v1266, 2147483648
    %v1288 = vsel %vm1286, %v1287, %v1285
    %v1289 = vrsqrt.pop %v1267
    %v1290 = vmul.f32 %v1267, %v1289
    %vm1291 = vcmp.eq.f32.partialorder %v1267, inf
    %v1292 = vsel %vm1291, %v1267, %v1290
    %vm1293 = vcmp.eq.f32.partialorder %v1267, 0.0
    %v1294 = vand.u32 %v1267, 2147483648
    %v1295 = vsel %vm1293, %v1294, %v1292
    %v1296 = vrsqrt.pop %v1256
    %v1297 = vrsqrt.pop %v1257
    %v1298 = vrsqrt.pop %v1258
    %v1299 = vrsqrt.pop %v1259
    %v1300 = vmul.f32 %v1274, %v1296
    %v1301 = vmul.f32 %v1281, %v1297
    %v1302 = vmul.f32 %v1288, %v1298
    %v1303 = vmul.f32 %v1295, %v1299
    %1305 = vset.pattern.permute.xlu0 0
    %1306 = vperm.xlu0 %1305, %v1300
    %v1307 = vpop.permute.xlu0 %1306
    %1310 = vset.pattern.permute.xlu0 0
    %1311 = vperm.xlu0 %1310, %v1301
    %v1312 = vpop.permute.xlu0 %1311
    %1315 = vset.pattern.permute.xlu0 0
    %1316 = vperm.xlu0 %1315, %v1302
    %v1317 = vpop.permute.xlu0 %1316
    %1320 = vset.pattern.permute.xlu0 0
    %1321 = vperm.xlu0 %1320, %v1303
    %v1322 = vpop.permute.xlu0 %1321
    %v1324 = vmul.f32 %v1185, %v1307
    %v1325 = vmul.f32 %v1190, %v1312
    %v1326 = vmul.f32 %v1195, %v1317
    %v1327 = vmul.f32 %v1200, %v1322
    %1329 = vset.pattern.permute.xlu0 0
    %1330 = vperm.xlu0 %1329, %v1232
    %v1331 = vpop.permute.xlu0 %1330
    %1334 = vset.pattern.permute.xlu0 0
    %1335 = vperm.xlu0 %1334, %v1233
    %v1336 = vpop.permute.xlu0 %1335
    %1339 = vset.pattern.permute.xlu0 0
    %1340 = vperm.xlu0 %1339, %v1234
    %v1341 = vpop.permute.xlu0 %1340
    %1344 = vset.pattern.permute.xlu0 0
    %1345 = vperm.xlu0 %1344, %v1235
    %v1346 = vpop.permute.xlu0 %1345
    %v1348 = vsel %vm126, %v1331, %v1324
    %v1349 = vsel %vm126, %v1336, %v1325
    %v1350 = vsel %vm126, %v1341, %v1326
    %v1351 = vsel %vm126, %v1346, %v1327
    %s1352 = sld [smem:[#allocation2 + $0x4]]
    %v1353 = vmax.f32 %v1348, 0.0
    %v1354 = vmax.f32 %v1349, 0.0
    %v1355 = vmax.f32 %v1350, 0.0
    %v1356 = vmax.f32 %v1351, 0.0
    %v1357 = vld [vmem:[%s9] sm:$0xff]
    %v1358 = vld [vmem:[%s9 + $0x8] sm:$0xff]
    %v1359 = vld [vmem:[%s9 + $0x10] sm:$0xff]
    %v1360 = vld [vmem:[%s9 + $0x18] sm:$0xff]
    %v1361 = vld [vmem:[%s10] sm:$0x1]
    %v1363 = vlaneseq
    %v1364 = vshrl.u32 %v1363, 7
    %v1365 = vsub.s32 0, %v1364
    %v1366 = vrot.slane %v1361, %v1365
    %v1369 = vsel %vm351, %v1353, 0
    %v1372 = vsel %vm351, %v1354, 0
    %v1375 = vsel %vm351, %v1355, 0
    %v1378 = vsel %vm351, %v1356, 0
    %1380 = vmatprep.subr.mxu0 0.0
    %1381 = vmatpush1.msra.mxu0 %v1357
    %1382 = vmatprep.subr.mxu0 0.0
    %1383 = vmatpush1.msra.mxu0 %v1358
    %1384 = vmatprep.subr.mxu0 0.0
    %1385 = vmatpush1.msra.mxu0 %v1359
    %1386 = vmatprep.subr.mxu0 0.0
    %1387 = vmatpush1.msra.mxu0 %v1360
    %1388 = vmatprep.subr.mxu0 0.0
    %1389 = vmatpush1.msra.mxu0 0.0
    %1390 = vmatprep.subr.mxu0 0.0
    %1391 = vmatpush1.msra.mxu0 0.0
    %1392 = vmatprep.subr.mxu0 0.0
    %1393 = vmatpush1.msra.mxu0 0.0
    %1394 = vmatprep.subr.mxu0 0.0
    %1395 = vmatpush1.msra.mxu0 0.0
    %1396 = vmatprep.subr.mxu0 0.0
    %1397 = vmatpush1.msra.mxu0 0.0
    %1398 = vmatprep.subr.mxu0 0.0
    %1399 = vmatpush1.msra.mxu0 0.0
    %1400 = vmatprep.subr.mxu0 0.0
    %1401 = vmatpush1.msra.mxu0 0.0
    %1402 = vmatprep.subr.mxu0 0.0
    %1403 = vmatpush1.msra.mxu0 0.0
    %1404 = vmatprep.subr.mxu0 0.0
    %1405 = vmatpush1.msra.mxu0 0.0
    %1406 = vmatprep.subr.mxu0 0.0
    %1407 = vmatpush1.msra.mxu0 0.0
    %1408 = vmatprep.subr.mxu0 0.0
    %1409 = vmatpush1.msra.mxu0 0.0
    %1410 = vmatprep.subr.mxu0 0.0
    %1411 = vmatpush1.msra.mxu0 0.0
    %1412 = vmatprep.subr.mxu0 0.0
    %1413 = vmatpush1.msra.mxu0 0.0
    %1414 = vmatprep.subr.mxu0 0.0
    %1415 = vmatpush1.msra.mxu0 0.0
    %1416 = vmatprep.subr.mxu0 0.0
    %1417 = vmatpush1.msra.mxu0 0.0
    %1418 = vmatprep.subr.mxu0 0.0
    %1419 = vmatpush1.msra.mxu0 0.0
    %1420 = vmatprep.subr.mxu0 0.0
    %1421 = vmatpush1.msra.mxu0 0.0
    %1422 = vmatprep.subr.mxu0 0.0
    %1423 = vmatpush1.msra.mxu0 0.0
    %1424 = vmatprep.subr.mxu0 0.0
    %1425 = vmatpush1.msra.mxu0 0.0
    %1426 = vmatprep.subr.mxu0 0.0
    %1427 = vmatpush1.msra.mxu0 0.0
    %1428 = vmatprep.subr.mxu0 0.0
    %1429 = vmatpush1.msra.mxu0 0.0
    %1430 = vmatprep.subr.mxu0 0.0
    %1431 = vmatpush1.msra.mxu0 0.0
    %1432 = vmatprep.subr.mxu0 0.0
    %1433 = vmatpush1.msra.mxu0 0.0
    %1434 = vmatprep.subr.mxu0 0.0
    %1435 = vmatpush1.msra.mxu0 0.0
    %1436 = vmatprep.subr.mxu0 0.0
    %1437 = vmatpush1.msra.mxu0 0.0
    %1438 = vmatprep.subr.mxu0 0.0
    %1439 = vmatpush1.msra.mxu0 0.0
    %1440 = vmatprep.subr.mxu0 0.0
    %1441 = vmatpush1.msra.mxu0 0.0
    %1442 = vmatprep.subr.mxu0 0.0
    %1443 = vmatpush1.msra.mxu0 0.0
    %1444 = vmatprep.mubr.f32.mxu0 0.0
    %1445 = vmatmul.mubr.f32.gmra.mrb[0].mxu0 %v1369
    %v1446 = vpop.f32.mrb[0].mxu0
    %v1447 = vadd.f32 %v1366, %v1446
    %v1448 = vpop.f32.mrb[0].mxu0
    %1449 = vmatprep.mubr.f32.mxu0 0.0
    %1450 = vmatmul.mubr.f32.gmra.mrb[0].mxu0 %v1372
    %v1451 = vpop.f32.mrb[0].mxu0
    %v1452 = vadd.f32 %v1366, %v1451
    %v1453 = vpop.f32.mrb[0].mxu0
    %1454 = vmatprep.mubr.f32.mxu0 0.0
    %1455 = vmatmul.mubr.f32.gmra.mrb[0].mxu0 %v1375
    %v1456 = vpop.f32.mrb[0].mxu0
    %v1457 = vadd.f32 %v1366, %v1456
    %v1458 = vpop.f32.mrb[0].mxu0
    %1459 = vmatprep.mubr.f32.mxu0 0.0
    %1460 = vmatmul.mubr.f32.gmra.mrb[0].mxu0 %v1378
    %v1461 = vpop.f32.mrb[0].mxu0
    %v1462 = vadd.f32 %v1366, %v1461
    %v1463 = vpop.f32.mrb[0].mxu0
    %1464 = vdwg.mxu0
    %v1465 = vsub.f32 0.0, %v1447
    %v1466 = vsub.f32 0.0, %v1452
    %v1467 = vsub.f32 0.0, %v1457
    %v1468 = vsub.f32 0.0, %v1462
    %v1469 = vmul.f32 %v1465, 1.442695
    %v1470 = vpow.pop %v1469
    %v1471 = vmul.f32 %v1466, 1.442695
    %v1472 = vpow.pop %v1471
    %v1473 = vmul.f32 %v1467, 1.442695
    %v1474 = vpow.pop %v1473
    %v1475 = vmul.f32 %v1468, 1.442695
    %v1476 = vpow.pop %v1475
    %v1477 = vadd.f32 %v1470, 1.0
    %v1478 = vadd.f32 %v1472, 1.0
    %v1479 = vadd.f32 %v1474, 1.0
    %v1480 = vadd.f32 %v1476, 1.0
    %v1481 = vrcp.pop %v1477
    %v1482 = vmul.f32 1.0, %v1481
    %v1483 = vrcp.pop %v1478
    %v1484 = vmul.f32 1.0, %v1483
    %v1485 = vrcp.pop %v1479
    %v1486 = vmul.f32 1.0, %v1485
    %v1487 = vrcp.pop %v1480
    %v1488 = vmul.f32 1.0, %v1487
    %v1489 = vstv %s1352
    %v1490 = vmul.f32 %v1482, %v1489
    %v1491 = vmul.f32 %v1484, %v1489
    %v1492 = vmul.f32 %v1486, %v1489
    %v1493 = vmul.f32 %v1488, %v1489
    %v1494 = vadd.f32 %v1490, 1.1
    %v1495 = vadd.f32 %v1491, 1.1
    %v1496 = vadd.f32 %v1492, 1.1
    %v1497 = vadd.f32 %v1493, 1.1
    %v1498 = vmul.f32 %v1447, %v1447
    %v1499 = vmul.f32 %v1452, %v1452
    %v1500 = vmul.f32 %v1457, %v1457
    %v1501 = vmul.f32 %v1462, %v1462
    %vm1502 = vcmask 89088
    %v1503 = vsel %vm1502, %v1498, 0.0
    %1504 = vadd.xlane.f32.xlu0 %v1503
    %v1505 = vpop.xlane.xlu0 %1504
    %v1506 = vsel %vm1502, %v1499, 0.0
    %1507 = vadd.xlane.f32.xlu0 %v1506
    %v1508 = vpop.xlane.xlu0 %1507
    %v1509 = vsel %vm1502, %v1500, 0.0
    %1510 = vadd.xlane.f32.xlu0 %v1509
    %v1511 = vpop.xlane.xlu0 %1510
    %v1512 = vsel %vm1502, %v1501, 0.0
    %1513 = vadd.xlane.f32.xlu0 %v1512
    %v1514 = vpop.xlane.xlu0 %1513
    %v1515 = vsub.f32 %v1505, %v1498
    %v1516 = vsub.f32 %v1508, %v1499
    %v1517 = vsub.f32 %v1511, %v1500
    %v1518 = vsub.f32 %v1514, %v1501
    %v1519 = vmax.f32 %v1515, 1e-08
    %v1520 = vmax.f32 %v1516, 1e-08
    %v1521 = vmax.f32 %v1517, 1e-08
    %v1522 = vmax.f32 %v1518, 1e-08
    %v1523 = vmul.f32 %v1494, %v1494
    %v1524 = vmul.f32 %v1495, %v1495
    %v1525 = vmul.f32 %v1496, %v1496
    %v1526 = vmul.f32 %v1497, %v1497
    %v1527 = vsub.f32 %v1523, 1.0
    %v1528 = vsub.f32 %v1524, 1.0
    %v1529 = vsub.f32 %v1525, 1.0
    %v1530 = vsub.f32 %v1526, 1.0
    %v1531 = vrsqrt.pop %v1527
    %v1532 = vmul.f32 %v1527, %v1531
    %vm1533 = vcmp.eq.f32.partialorder %v1527, inf
    %v1534 = vsel %vm1533, %v1527, %v1532
    %vm1535 = vcmp.eq.f32.partialorder %v1527, 0.0
    %v1536 = vand.u32 %v1527, 2147483648
    %v1537 = vsel %vm1535, %v1536, %v1534
    %v1538 = vrsqrt.pop %v1528
    %v1539 = vmul.f32 %v1528, %v1538
    %vm1540 = vcmp.eq.f32.partialorder %v1528, inf
    %v1541 = vsel %vm1540, %v1528, %v1539
    %vm1542 = vcmp.eq.f32.partialorder %v1528, 0.0
    %v1543 = vand.u32 %v1528, 2147483648
    %v1544 = vsel %vm1542, %v1543, %v1541
    %v1545 = vrsqrt.pop %v1529
    %v1546 = vmul.f32 %v1529, %v1545
    %vm1547 = vcmp.eq.f32.partialorder %v1529, inf
    %v1548 = vsel %vm1547, %v1529, %v1546
    %vm1549 = vcmp.eq.f32.partialorder %v1529, 0.0
    %v1550 = vand.u32 %v1529, 2147483648
    %v1551 = vsel %vm1549, %v1550, %v1548
    %v1552 = vrsqrt.pop %v1530
    %v1553 = vmul.f32 %v1530, %v1552
    %vm1554 = vcmp.eq.f32.partialorder %v1530, inf
    %v1555 = vsel %vm1554, %v1530, %v1553
    %vm1556 = vcmp.eq.f32.partialorder %v1530, 0.0
    %v1557 = vand.u32 %v1530, 2147483648
    %v1558 = vsel %vm1556, %v1557, %v1555
    %v1559 = vrsqrt.pop %v1519
    %v1560 = vrsqrt.pop %v1520
    %v1561 = vrsqrt.pop %v1521
    %v1562 = vrsqrt.pop %v1522
    %v1563 = vmul.f32 %v1537, %v1559
    %v1564 = vmul.f32 %v1544, %v1560
    %v1565 = vmul.f32 %v1551, %v1561
    %v1566 = vmul.f32 %v1558, %v1562
    %1568 = vset.pattern.permute.xlu0 0
    %1569 = vperm.xlu0 %1568, %v1563
    %v1570 = vpop.permute.xlu0 %1569
    %1573 = vset.pattern.permute.xlu0 0
    %1574 = vperm.xlu0 %1573, %v1564
    %v1575 = vpop.permute.xlu0 %1574
    %1578 = vset.pattern.permute.xlu0 0
    %1579 = vperm.xlu0 %1578, %v1565
    %v1580 = vpop.permute.xlu0 %1579
    %1583 = vset.pattern.permute.xlu0 0
    %1584 = vperm.xlu0 %1583, %v1566
    %v1585 = vpop.permute.xlu0 %1584
    %v1587 = vmul.f32 %v1447, %v1570
    %v1588 = vmul.f32 %v1452, %v1575
    %v1589 = vmul.f32 %v1457, %v1580
    %v1590 = vmul.f32 %v1462, %v1585
    %1592 = vset.pattern.permute.xlu0 0
    %1593 = vperm.xlu0 %1592, %v1494
    %v1594 = vpop.permute.xlu0 %1593
    %1597 = vset.pattern.permute.xlu0 0
    %1598 = vperm.xlu0 %1597, %v1495
    %v1599 = vpop.permute.xlu0 %1598
    %1602 = vset.pattern.permute.xlu0 0
    %1603 = vperm.xlu0 %1602, %v1496
    %v1604 = vpop.permute.xlu0 %1603
    %1607 = vset.pattern.permute.xlu0 0
    %1608 = vperm.xlu0 %1607, %v1497
    %v1609 = vpop.permute.xlu0 %1608
    %v1611 = vsel %vm126, %v1594, %v1587
    %v1612 = vsel %vm126, %v1599, %v1588
    %v1613 = vsel %vm126, %v1604, %v1589
    %v1614 = vsel %vm126, %v1609, %v1590
    %v1615 = vpack.c.bf16 %v1612, %v1611
    %v1616 = vpack.c.bf16 %v1614, %v1613
    %1617 = vmatprep.subr.bf16.mxu0 0
    %1618 = vmatpush1.bf16.msra.mxu0 %v1615
    %1619 = vmatprep.subr.bf16.mxu0 0
    %1620 = vmatpush1.bf16.msra.mxu0 %v1616
    %1621 = vmatprep.subr.bf16.mxu0 0
    %1622 = vmatpush1.bf16.msra.mxu0 0
    %1623 = vmatprep.subr.bf16.mxu0 0
    %1624 = vmatpush1.bf16.msra.mxu0 0
    %1625 = vmatprep.subr.bf16.mxu0 0
    %1626 = vmatpush1.bf16.msra.mxu0 0
    %1627 = vmatprep.subr.bf16.mxu0 0
    %1628 = vmatpush1.bf16.msra.mxu0 0
    %1629 = vmatprep.subr.bf16.mxu0 0
    %1630 = vmatpush1.bf16.msra.mxu0 0
    %1631 = vmatprep.subr.bf16.mxu0 0
    %1632 = vmatpush1.bf16.msra.mxu0 0
    %1633 = vmatprep.subr.bf16.mxu0 0
    %1634 = vmatpush1.bf16.msra.mxu0 0
    %1635 = vmatprep.subr.bf16.mxu0 0
    %1636 = vmatpush1.bf16.msra.mxu0 0
    %1637 = vmatprep.subr.bf16.mxu0 0
    %1638 = vmatpush1.bf16.msra.mxu0 0
    %1639 = vmatprep.subr.bf16.mxu0 0
    %1640 = vmatpush1.bf16.msra.mxu0 0
    %1641 = vmatprep.subr.bf16.mxu0 0
    %1642 = vmatpush1.bf16.msra.mxu0 0
    %1643 = vmatprep.subr.bf16.mxu0 0
    %1644 = vmatpush1.bf16.msra.mxu0 0
    %1645 = vmatprep.subr.bf16.mxu0 0
    %1646 = vmatpush1.bf16.msra.mxu0 0
    %1647 = vmatprep.subr.bf16.mxu0 0
    %1648 = vmatpush1.bf16.msra.mxu0 0
    %1649 = vmatprep.mubr.bf16.mxu0 0
    %1650 = vmatmul.mubr.bf16.gmra.mrb[0].mxu0 %v467
    %v1651 = vpop.f32.mrb[0].mxu0
    %v1652 = vadd.f32 0.0, %v1651
    %v1653 = vpop.f32.mrb[0].mxu0
    %v1654 = vpop.f32.mrb[0].mxu0
    %v1655 = vadd.f32 0.0, %v1654
    %v1656 = vpop.f32.mrb[0].mxu0
    %1657 = vmatprep.mubr.bf16.mxu0 0
    %1658 = vmatmul.mubr.bf16.gmra.mrb[0].mxu0 %v470
    %v1659 = vpop.f32.mrb[0].mxu0
    %v1660 = vadd.f32 0.0, %v1659
    %v1661 = vpop.f32.mrb[0].mxu0
    %v1662 = vpop.f32.mrb[0].mxu0
    %v1663 = vadd.f32 0.0, %v1662
    %v1664 = vpop.f32.mrb[0].mxu0
    %1665 = vdwg.mxu0
    %v1666 = vmul.f32 %v1652, %v1652
    %v1667 = vmul.f32 %v1655, %v1655
    %v1668 = vmul.f32 %v1660, %v1660
    %v1669 = vmul.f32 %v1663, %v1663
    %v1670 = vsel %vm1502, %v1666, 0.0
    %1671 = vadd.xlane.f32.xlu0 %v1670
    %v1672 = vpop.xlane.xlu0 %1671
    %v1673 = vsel %vm1502, %v1667, 0.0
    %1674 = vadd.xlane.f32.xlu0 %v1673
    %v1675 = vpop.xlane.xlu0 %1674
    %v1676 = vsel %vm1502, %v1668, 0.0
    %1677 = vadd.xlane.f32.xlu0 %v1676
    %v1678 = vpop.xlane.xlu0 %1677
    %v1679 = vsel %vm1502, %v1669, 0.0
    %1680 = vadd.xlane.f32.xlu0 %v1679
    %v1681 = vpop.xlane.xlu0 %1680
    %v1682 = vmul.f32 %v1652, 2.0
    %v1683 = vmul.f32 %v1655, 2.0
    %v1684 = vmul.f32 %v1660, 2.0
    %v1685 = vmul.f32 %v1663, 2.0
    %v1686 = vmul.f32 %v1682, %v1652
    %v1687 = vmul.f32 %v1683, %v1655
    %v1688 = vmul.f32 %v1684, %v1660
    %v1689 = vmul.f32 %v1685, %v1663
    %v1690 = vsub.f32 %v1672, %v1686
    %v1691 = vsub.f32 %v1675, %v1687
    %v1692 = vsub.f32 %v1678, %v1688
    %v1693 = vsub.f32 %v1681, %v1689
    %v1694 = vand.u32 2147483647, %v1690
    %v1695 = vand.u32 2147483647, %v1691
    %v1696 = vand.u32 2147483647, %v1692
    %v1697 = vand.u32 2147483647, %v1693
    %v1698 = vmax.f32 %v1694, 1e-08
    %v1699 = vmax.f32 %v1695, 1e-08
    %v1700 = vmax.f32 %v1696, 1e-08
    %v1701 = vmax.f32 %v1697, 1e-08
    %v1702 = vrsqrt.pop %v1698
    %v1703 = vrsqrt.pop %v1699
    %v1704 = vrsqrt.pop %v1700
    %v1705 = vrsqrt.pop %v1701
    %1707 = vset.pattern.permute.xlu0 0
    %1708 = vperm.xlu0 %1707, %v1702
    %v1709 = vpop.permute.xlu0 %1708
    %1712 = vset.pattern.permute.xlu0 0
    %1713 = vperm.xlu0 %1712, %v1703
    %v1714 = vpop.permute.xlu0 %1713
    %1717 = vset.pattern.permute.xlu0 0
    %1718 = vperm.xlu0 %1717, %v1704
    %v1719 = vpop.permute.xlu0 %1718
    %1722 = vset.pattern.permute.xlu0 0
    %1723 = vperm.xlu0 %1722, %v1705
    %v1724 = vpop.permute.xlu0 %1723
    %v1726 = vmul.f32 %v1652, %v1709
    %v1727 = vmul.f32 %v1655, %v1714
    %v1728 = vmul.f32 %v1660, %v1719
    %v1729 = vmul.f32 %v1663, %v1724
    %s1730 = sld [smem:[#allocation2 + $0x5]]
    %v1731 = vld [vmem:[%s11] sm:$0xff]
    %v1732 = vld [vmem:[%s11 + $0x8] sm:$0xff]
    %v1733 = vld [vmem:[%s11 + $0x10] sm:$0x1]
    %v1734 = vld [vmem:[%s12] sm:$0x1]
    %v1736 = vlaneseq
    %v1737 = vshrl.u32 %v1736, 7
    %v1738 = vsub.s32 0, %v1737
    %v1739 = vrot.slane %v1734, %v1738
    %v1742 = vsel %vm225, %v1733, 0
    %1744 = vmatprep.subr.mxu0 0.0
    %1745 = vmatpush1.msra.mxu0 %v1731
    %1746 = vmatprep.subr.mxu0 0.0
    %1747 = vmatpush1.msra.mxu0 %v1732
    %1748 = vmatprep.subr.mxu0 0.0
    %1749 = vmatpush1.msra.mxu0 %v1742
    %1750 = vmatprep.subr.mxu0 0.0
    %1751 = vmatpush1.msra.mxu0 0.0
    %1752 = vmatprep.subr.mxu0 0.0
    %1753 = vmatpush1.msra.mxu0 0.0
    %1754 = vmatprep.subr.mxu0 0.0
    %1755 = vmatpush1.msra.mxu0 0.0
    %1756 = vmatprep.subr.mxu0 0.0
    %1757 = vmatpush1.msra.mxu0 0.0
    %1758 = vmatprep.subr.mxu0 0.0
    %1759 = vmatpush1.msra.mxu0 0.0
    %1760 = vmatprep.subr.mxu0 0.0
    %1761 = vmatpush1.msra.mxu0 0.0
    %1762 = vmatprep.subr.mxu0 0.0
    %1763 = vmatpush1.msra.mxu0 0.0
    %1764 = vmatprep.subr.mxu0 0.0
    %1765 = vmatpush1.msra.mxu0 0.0
    %1766 = vmatprep.subr.mxu0 0.0
    %1767 = vmatpush1.msra.mxu0 0.0
    %1768 = vmatprep.subr.mxu0 0.0
    %1769 = vmatpush1.msra.mxu0 0.0
    %1770 = vmatprep.subr.mxu0 0.0
    %1771 = vmatpush1.msra.mxu0 0.0
    %1772 = vmatprep.subr.mxu0 0.0
    %1773 = vmatpush1.msra.mxu0 0.0
    %1774 = vmatprep.subr.mxu0 0.0
    %1775 = vmatpush1.msra.mxu0 0.0
    %1776 = vmatprep.subr.mxu0 0.0
    %1777 = vmatpush1.msra.mxu0 0.0
    %1778 = vmatprep.subr.mxu0 0.0
    %1779 = vmatpush1.msra.mxu0 0.0
    %1780 = vmatprep.subr.mxu0 0.0
    %1781 = vmatpush1.msra.mxu0 0.0
    %1782 = vmatprep.subr.mxu0 0.0
    %1783 = vmatpush1.msra.mxu0 0.0
    %1784 = vmatprep.subr.mxu0 0.0
    %1785 = vmatpush1.msra.mxu0 0.0
    %1786 = vmatprep.subr.mxu0 0.0
    %1787 = vmatpush1.msra.mxu0 0.0
    %1788 = vmatprep.subr.mxu0 0.0
    %1789 = vmatpush1.msra.mxu0 0.0
    %1790 = vmatprep.subr.mxu0 0.0
    %1791 = vmatpush1.msra.mxu0 0.0
    %1792 = vmatprep.subr.mxu0 0.0
    %1793 = vmatpush1.msra.mxu0 0.0
    %1794 = vmatprep.subr.mxu0 0.0
    %1795 = vmatpush1.msra.mxu0 0.0
    %1796 = vmatprep.subr.mxu0 0.0
    %1797 = vmatpush1.msra.mxu0 0.0
    %1798 = vmatprep.subr.mxu0 0.0
    %1799 = vmatpush1.msra.mxu0 0.0
    %1800 = vmatprep.subr.mxu0 0.0
    %1801 = vmatpush1.msra.mxu0 0.0
    %1802 = vmatprep.subr.mxu0 0.0
    %1803 = vmatpush1.msra.mxu0 0.0
    %1804 = vmatprep.subr.mxu0 0.0
    %1805 = vmatpush1.msra.mxu0 0.0
    %1806 = vmatprep.subr.mxu0 0.0
    %1807 = vmatpush1.msra.mxu0 0.0
    %1808 = vmatprep.mubr.f32.mxu0 0.0
    %1809 = vmatmul.mubr.f32.gmra.mrb[0].mxu0 %v1104
    %v1810 = vpop.f32.mrb[0].mxu0
    %v1811 = vadd.f32 %v1739, %v1810
    %v1812 = vpop.f32.mrb[0].mxu0
    %1813 = vmatprep.mubr.f32.mxu0 0.0
    %1814 = vmatmul.mubr.f32.gmra.mrb[0].mxu0 %v1107
    %v1815 = vpop.f32.mrb[0].mxu0
    %v1816 = vadd.f32 %v1739, %v1815
    %v1817 = vpop.f32.mrb[0].mxu0
    %1818 = vmatprep.mubr.f32.mxu0 0.0
    %1819 = vmatmul.mubr.f32.gmra.mrb[0].mxu0 %v1110
    %v1820 = vpop.f32.mrb[0].mxu0
    %v1821 = vadd.f32 %v1739, %v1820
    %v1822 = vpop.f32.mrb[0].mxu0
    %1823 = vmatprep.mubr.f32.mxu0 0.0
    %1824 = vmatmul.mubr.f32.gmra.mrb[0].mxu0 %v1113
    %v1825 = vpop.f32.mrb[0].mxu0
    %v1826 = vadd.f32 %v1739, %v1825
    %v1827 = vpop.f32.mrb[0].mxu0
    %1828 = vdwg.mxu0
    %v1829 = vsub.f32 0.0, %v1811
    %v1830 = vsub.f32 0.0, %v1816
    %v1831 = vsub.f32 0.0, %v1821
    %v1832 = vsub.f32 0.0, %v1826
    %v1833 = vmul.f32 %v1829, 1.442695
    %v1834 = vpow.pop %v1833
    %v1835 = vmul.f32 %v1830, 1.442695
    %v1836 = vpow.pop %v1835
    %v1837 = vmul.f32 %v1831, 1.442695
    %v1838 = vpow.pop %v1837
    %v1839 = vmul.f32 %v1832, 1.442695
    %v1840 = vpow.pop %v1839
    %v1841 = vadd.f32 %v1834, 1.0
    %v1842 = vadd.f32 %v1836, 1.0
    %v1843 = vadd.f32 %v1838, 1.0
    %v1844 = vadd.f32 %v1840, 1.0
    %v1845 = vrcp.pop %v1841
    %v1846 = vmul.f32 1.0, %v1845
    %v1847 = vrcp.pop %v1842
    %v1848 = vmul.f32 1.0, %v1847
    %v1849 = vrcp.pop %v1843
    %v1850 = vmul.f32 1.0, %v1849
    %v1851 = vrcp.pop %v1844
    %v1852 = vmul.f32 1.0, %v1851
    %v1853 = vstv %s1730
    %v1854 = vmul.f32 %v1846, %v1853
    %v1855 = vmul.f32 %v1848, %v1853
    %v1856 = vmul.f32 %v1850, %v1853
    %v1857 = vmul.f32 %v1852, %v1853
    %v1858 = vadd.f32 %v1854, 1.1
    %v1859 = vadd.f32 %v1855, 1.1
    %v1860 = vadd.f32 %v1856, 1.1
    %v1861 = vadd.f32 %v1857, 1.1
    %v1862 = vmul.f32 %v1811, %v1811
    %v1863 = vmul.f32 %v1816, %v1816
    %v1864 = vmul.f32 %v1821, %v1821
    %v1865 = vmul.f32 %v1826, %v1826
    %v1866 = vsel %vm131, %v1862, 0.0
    %1867 = vadd.xlane.f32.xlu0 %v1866
    %v1868 = vpop.xlane.xlu0 %1867
    %v1869 = vsel %vm131, %v1863, 0.0
    %1870 = vadd.xlane.f32.xlu0 %v1869
    %v1871 = vpop.xlane.xlu0 %1870
    %v1872 = vsel %vm131, %v1864, 0.0
    %1873 = vadd.xlane.f32.xlu0 %v1872
    %v1874 = vpop.xlane.xlu0 %1873
    %v1875 = vsel %vm131, %v1865, 0.0
    %1876 = vadd.xlane.f32.xlu0 %v1875
    %v1877 = vpop.xlane.xlu0 %1876
    %v1878 = vsub.f32 %v1868, %v1862
    %v1879 = vsub.f32 %v1871, %v1863
    %v1880 = vsub.f32 %v1874, %v1864
    %v1881 = vsub.f32 %v1877, %v1865
    %v1882 = vmax.f32 %v1878, 1e-08
    %v1883 = vmax.f32 %v1879, 1e-08
    %v1884 = vmax.f32 %v1880, 1e-08
    %v1885 = vmax.f32 %v1881, 1e-08
    %v1886 = vmul.f32 %v1858, %v1858
    %v1887 = vmul.f32 %v1859, %v1859
    %v1888 = vmul.f32 %v1860, %v1860
    %v1889 = vmul.f32 %v1861, %v1861
    %v1890 = vsub.f32 %v1886, 1.0
    %v1891 = vsub.f32 %v1887, 1.0
    %v1892 = vsub.f32 %v1888, 1.0
    %v1893 = vsub.f32 %v1889, 1.0
    %v1894 = vrsqrt.pop %v1890
    %v1895 = vmul.f32 %v1890, %v1894
    %vm1896 = vcmp.eq.f32.partialorder %v1890, inf
    %v1897 = vsel %vm1896, %v1890, %v1895
    %vm1898 = vcmp.eq.f32.partialorder %v1890, 0.0
    %v1899 = vand.u32 %v1890, 2147483648
    %v1900 = vsel %vm1898, %v1899, %v1897
    %v1901 = vrsqrt.pop %v1891
    %v1902 = vmul.f32 %v1891, %v1901
    %vm1903 = vcmp.eq.f32.partialorder %v1891, inf
    %v1904 = vsel %vm1903, %v1891, %v1902
    %vm1905 = vcmp.eq.f32.partialorder %v1891, 0.0
    %v1906 = vand.u32 %v1891, 2147483648
    %v1907 = vsel %vm1905, %v1906, %v1904
    %v1908 = vrsqrt.pop %v1892
    %v1909 = vmul.f32 %v1892, %v1908
    %vm1910 = vcmp.eq.f32.partialorder %v1892, inf
    %v1911 = vsel %vm1910, %v1892, %v1909
    %vm1912 = vcmp.eq.f32.partialorder %v1892, 0.0
    %v1913 = vand.u32 %v1892, 2147483648
    %v1914 = vsel %vm1912, %v1913, %v1911
    %v1915 = vrsqrt.pop %v1893
    %v1916 = vmul.f32 %v1893, %v1915
    %vm1917 = vcmp.eq.f32.partialorder %v1893, inf
    %v1918 = vsel %vm1917, %v1893, %v1916
    %vm1919 = vcmp.eq.f32.partialorder %v1893, 0.0
    %v1920 = vand.u32 %v1893, 2147483648
    %v1921 = vsel %vm1919, %v1920, %v1918
    %v1922 = vrsqrt.pop %v1882
    %v1923 = vrsqrt.pop %v1883
    %v1924 = vrsqrt.pop %v1884
    %v1925 = vrsqrt.pop %v1885
    %v1926 = vmul.f32 %v1900, %v1922
    %v1927 = vmul.f32 %v1907, %v1923
    %v1928 = vmul.f32 %v1914, %v1924
    %v1929 = vmul.f32 %v1921, %v1925
    %1931 = vset.pattern.permute.xlu0 0
    %1932 = vperm.xlu0 %1931, %v1926
    %v1933 = vpop.permute.xlu0 %1932
    %1936 = vset.pattern.permute.xlu0 0
    %1937 = vperm.xlu0 %1936, %v1927
    %v1938 = vpop.permute.xlu0 %1937
    %1941 = vset.pattern.permute.xlu0 0
    %1942 = vperm.xlu0 %1941, %v1928
    %v1943 = vpop.permute.xlu0 %1942
    %1946 = vset.pattern.permute.xlu0 0
    %1947 = vperm.xlu0 %1946, %v1929
    %v1948 = vpop.permute.xlu0 %1947
    %v1950 = vmul.f32 %v1811, %v1933
    %v1951 = vmul.f32 %v1816, %v1938
    %v1952 = vmul.f32 %v1821, %v1943
    %v1953 = vmul.f32 %v1826, %v1948
    %1955 = vset.pattern.permute.xlu0 0
    %1956 = vperm.xlu0 %1955, %v1858
    %v1957 = vpop.permute.xlu0 %1956
    %1960 = vset.pattern.permute.xlu0 0
    %1961 = vperm.xlu0 %1960, %v1859
    %v1962 = vpop.permute.xlu0 %1961
    %1965 = vset.pattern.permute.xlu0 0
    %1966 = vperm.xlu0 %1965, %v1860
    %v1967 = vpop.permute.xlu0 %1966
    %1970 = vset.pattern.permute.xlu0 0
    %1971 = vperm.xlu0 %1970, %v1861
    %v1972 = vpop.permute.xlu0 %1971
    %v1974 = vsel %vm126, %v1957, %v1950
    %v1975 = vsel %vm126, %v1962, %v1951
    %v1976 = vsel %vm126, %v1967, %v1952
    %v1977 = vsel %vm126, %v1972, %v1953
    %s1978 = sld [smem:[#allocation2 + $0x6]]
    %v1979 = vld [vmem:[%s13] sm:$0xff]
    %v1980 = vld [vmem:[%s13 + $0x8] sm:$0xff]
    %v1981 = vld [vmem:[%s13 + $0x10] sm:$0x1]
    %v1982 = vld [vmem:[%s14] sm:$0x1]
    %v1984 = vlaneseq
    %v1985 = vshrl.u32 %v1984, 7
    %v1986 = vsub.s32 0, %v1985
    %v1987 = vrot.slane %v1982, %v1986
    %v1990 = vsel %vm225, %v1981, 0
    %1992 = vmatprep.subr.mxu0 0.0
    %1993 = vmatpush1.msra.mxu0 %v1979
    %1994 = vmatprep.subr.mxu0 0.0
    %1995 = vmatpush1.msra.mxu0 %v1980
    %1996 = vmatprep.subr.mxu0 0.0
    %1997 = vmatpush1.msra.mxu0 %v1990
    %1998 = vmatprep.subr.mxu0 0.0
    %1999 = vmatpush1.msra.mxu0 0.0
    %2000 = vmatprep.subr.mxu0 0.0
    %2001 = vmatpush1.msra.mxu0 0.0
    %2002 = vmatprep.subr.mxu0 0.0
    %2003 = vmatpush1.msra.mxu0 0.0
    %2004 = vmatprep.subr.mxu0 0.0
    %2005 = vmatpush1.msra.mxu0 0.0
    %2006 = vmatprep.subr.mxu0 0.0
    %2007 = vmatpush1.msra.mxu0 0.0
    %2008 = vmatprep.subr.mxu0 0.0
    %2009 = vmatpush1.msra.mxu0 0.0
    %2010 = vmatprep.subr.mxu0 0.0
    %2011 = vmatpush1.msra.mxu0 0.0
    %2012 = vmatprep.subr.mxu0 0.0
    %2013 = vmatpush1.msra.mxu0 0.0
    %2014 = vmatprep.subr.mxu0 0.0
    %2015 = vmatpush1.msra.mxu0 0.0
    %2016 = vmatprep.subr.mxu0 0.0
    %2017 = vmatpush1.msra.mxu0 0.0
    %2018 = vmatprep.subr.mxu0 0.0
    %2019 = vmatpush1.msra.mxu0 0.0
    %2020 = vmatprep.subr.mxu0 0.0
    %2021 = vmatpush1.msra.mxu0 0.0
    %2022 = vmatprep.subr.mxu0 0.0
    %2023 = vmatpush1.msra.mxu0 0.0
    %2024 = vmatprep.subr.mxu0 0.0
    %2025 = vmatpush1.msra.mxu0 0.0
    %2026 = vmatprep.subr.mxu0 0.0
    %2027 = vmatpush1.msra.mxu0 0.0
    %2028 = vmatprep.subr.mxu0 0.0
    %2029 = vmatpush1.msra.mxu0 0.0
    %2030 = vmatprep.subr.mxu0 0.0
    %2031 = vmatpush1.msra.mxu0 0.0
    %2032 = vmatprep.subr.mxu0 0.0
    %2033 = vmatpush1.msra.mxu0 0.0
    %2034 = vmatprep.subr.mxu0 0.0
    %2035 = vmatpush1.msra.mxu0 0.0
    %2036 = vmatprep.subr.mxu0 0.0
    %2037 = vmatpush1.msra.mxu0 0.0
    %2038 = vmatprep.subr.mxu0 0.0
    %2039 = vmatpush1.msra.mxu0 0.0
    %2040 = vmatprep.subr.mxu0 0.0
    %2041 = vmatpush1.msra.mxu0 0.0
    %2042 = vmatprep.subr.mxu0 0.0
    %2043 = vmatpush1.msra.mxu0 0.0
    %2044 = vmatprep.subr.mxu0 0.0
    %2045 = vmatpush1.msra.mxu0 0.0
    %2046 = vmatprep.subr.mxu0 0.0
    %2047 = vmatpush1.msra.mxu0 0.0
    %2048 = vmatprep.subr.mxu0 0.0
    %2049 = vmatpush1.msra.mxu0 0.0
    %2050 = vmatprep.subr.mxu0 0.0
    %2051 = vmatpush1.msra.mxu0 0.0
    %2052 = vmatprep.subr.mxu0 0.0
    %2053 = vmatpush1.msra.mxu0 0.0
    %2054 = vmatprep.subr.mxu0 0.0
    %2055 = vmatpush1.msra.mxu0 0.0
    %2056 = vmatprep.mubr.f32.mxu0 0.0
    %2057 = vmatmul.mubr.f32.gmra.mrb[0].mxu0 %v1104
    %v2058 = vpop.f32.mrb[0].mxu0
    %v2059 = vadd.f32 %v1987, %v2058
    %v2060 = vpop.f32.mrb[0].mxu0
    %2061 = vmatprep.mubr.f32.mxu0 0.0
    %2062 = vmatmul.mubr.f32.gmra.mrb[0].mxu0 %v1107
    %v2063 = vpop.f32.mrb[0].mxu0
    %v2064 = vadd.f32 %v1987, %v2063
    %v2065 = vpop.f32.mrb[0].mxu0
    %2066 = vmatprep.mubr.f32.mxu0 0.0
    %2067 = vmatmul.mubr.f32.gmra.mrb[0].mxu0 %v1110
    %v2068 = vpop.f32.mrb[0].mxu0
    %v2069 = vadd.f32 %v1987, %v2068
    %v2070 = vpop.f32.mrb[0].mxu0
    %2071 = vmatprep.mubr.f32.mxu0 0.0
    %2072 = vmatmul.mubr.f32.gmra.mrb[0].mxu0 %v1113
    %v2073 = vpop.f32.mrb[0].mxu0
    %v2074 = vadd.f32 %v1987, %v2073
    %v2075 = vpop.f32.mrb[0].mxu0
    %2076 = vdwg.mxu0
    %v2077 = vsub.f32 0.0, %v2059
    %v2078 = vsub.f32 0.0, %v2064
    %v2079 = vsub.f32 0.0, %v2069
    %v2080 = vsub.f32 0.0, %v2074
    %v2081 = vmul.f32 %v2077, 1.442695
    %v2082 = vpow.pop %v2081
    %v2083 = vmul.f32 %v2078, 1.442695
    %v2084 = vpow.pop %v2083
    %v2085 = vmul.f32 %v2079, 1.442695
    %v2086 = vpow.pop %v2085
    %v2087 = vmul.f32 %v2080, 1.442695
    %v2088 = vpow.pop %v2087
    %v2089 = vadd.f32 %v2082, 1.0
    %v2090 = vadd.f32 %v2084, 1.0
    %v2091 = vadd.f32 %v2086, 1.0
    %v2092 = vadd.f32 %v2088, 1.0
    %v2093 = vrcp.pop %v2089
    %v2094 = vmul.f32 1.0, %v2093
    %v2095 = vrcp.pop %v2090
    %v2096 = vmul.f32 1.0, %v2095
    %v2097 = vrcp.pop %v2091
    %v2098 = vmul.f32 1.0, %v2097
    %v2099 = vrcp.pop %v2092
    %v2100 = vmul.f32 1.0, %v2099
    %v2101 = vstv %s1978
    %v2102 = vmul.f32 %v2094, %v2101
    %v2103 = vmul.f32 %v2096, %v2101
    %v2104 = vmul.f32 %v2098, %v2101
    %v2105 = vmul.f32 %v2100, %v2101
    %v2106 = vadd.f32 %v2102, 1.1
    %v2107 = vadd.f32 %v2103, 1.1
    %v2108 = vadd.f32 %v2104, 1.1
    %v2109 = vadd.f32 %v2105, 1.1
    %v2110 = vmul.f32 %v2059, %v2059
    %v2111 = vmul.f32 %v2064, %v2064
    %v2112 = vmul.f32 %v2069, %v2069
    %v2113 = vmul.f32 %v2074, %v2074
    %v2114 = vsel %vm131, %v2110, 0.0
    %2115 = vadd.xlane.f32.xlu0 %v2114
    %v2116 = vpop.xlane.xlu0 %2115
    %v2117 = vsel %vm131, %v2111, 0.0
    %2118 = vadd.xlane.f32.xlu0 %v2117
    %v2119 = vpop.xlane.xlu0 %2118
    %v2120 = vsel %vm131, %v2112, 0.0
    %2121 = vadd.xlane.f32.xlu0 %v2120
    %v2122 = vpop.xlane.xlu0 %2121
    %v2123 = vsel %vm131, %v2113, 0.0
    %2124 = vadd.xlane.f32.xlu0 %v2123
    %v2125 = vpop.xlane.xlu0 %2124
    %v2126 = vsub.f32 %v2116, %v2110
    %v2127 = vsub.f32 %v2119, %v2111
    %v2128 = vsub.f32 %v2122, %v2112
    %v2129 = vsub.f32 %v2125, %v2113
    %v2130 = vmax.f32 %v2126, 1e-08
    %v2131 = vmax.f32 %v2127, 1e-08
    %v2132 = vmax.f32 %v2128, 1e-08
    %v2133 = vmax.f32 %v2129, 1e-08
    %v2134 = vmul.f32 %v2106, %v2106
    %v2135 = vmul.f32 %v2107, %v2107
    %v2136 = vmul.f32 %v2108, %v2108
    %v2137 = vmul.f32 %v2109, %v2109
    %v2138 = vsub.f32 %v2134, 1.0
    %v2139 = vsub.f32 %v2135, 1.0
    %v2140 = vsub.f32 %v2136, 1.0
    %v2141 = vsub.f32 %v2137, 1.0
    %v2142 = vrsqrt.pop %v2138
    %v2143 = vmul.f32 %v2138, %v2142
    %vm2144 = vcmp.eq.f32.partialorder %v2138, inf
    %v2145 = vsel %vm2144, %v2138, %v2143
    %vm2146 = vcmp.eq.f32.partialorder %v2138, 0.0
    %v2147 = vand.u32 %v2138, 2147483648
    %v2148 = vsel %vm2146, %v2147, %v2145
    %v2149 = vrsqrt.pop %v2139
    %v2150 = vmul.f32 %v2139, %v2149
    %vm2151 = vcmp.eq.f32.partialorder %v2139, inf
    %v2152 = vsel %vm2151, %v2139, %v2150
    %vm2153 = vcmp.eq.f32.partialorder %v2139, 0.0
    %v2154 = vand.u32 %v2139, 2147483648
    %v2155 = vsel %vm2153, %v2154, %v2152
    %v2156 = vrsqrt.pop %v2140
    %v2157 = vmul.f32 %v2140, %v2156
    %vm2158 = vcmp.eq.f32.partialorder %v2140, inf
    %v2159 = vsel %vm2158, %v2140, %v2157
    %vm2160 = vcmp.eq.f32.partialorder %v2140, 0.0
    %v2161 = vand.u32 %v2140, 2147483648
    %v2162 = vsel %vm2160, %v2161, %v2159
    %v2163 = vrsqrt.pop %v2141
    %v2164 = vmul.f32 %v2141, %v2163
    %vm2165 = vcmp.eq.f32.partialorder %v2141, inf
    %v2166 = vsel %vm2165, %v2141, %v2164
    %vm2167 = vcmp.eq.f32.partialorder %v2141, 0.0
    %v2168 = vand.u32 %v2141, 2147483648
    %v2169 = vsel %vm2167, %v2168, %v2166
    %v2170 = vrsqrt.pop %v2130
    %v2171 = vrsqrt.pop %v2131
    %v2172 = vrsqrt.pop %v2132
    %v2173 = vrsqrt.pop %v2133
    %v2174 = vmul.f32 %v2148, %v2170
    %v2175 = vmul.f32 %v2155, %v2171
    %v2176 = vmul.f32 %v2162, %v2172
    %v2177 = vmul.f32 %v2169, %v2173
    %2179 = vset.pattern.permute.xlu0 0
    %2180 = vperm.xlu0 %2179, %v2174
    %v2181 = vpop.permute.xlu0 %2180
    %2184 = vset.pattern.permute.xlu0 0
    %2185 = vperm.xlu0 %2184, %v2175
    %v2186 = vpop.permute.xlu0 %2185
    %2189 = vset.pattern.permute.xlu0 0
    %2190 = vperm.xlu0 %2189, %v2176
    %v2191 = vpop.permute.xlu0 %2190
    %2194 = vset.pattern.permute.xlu0 0
    %2195 = vperm.xlu0 %2194, %v2177
    %v2196 = vpop.permute.xlu0 %2195
    %v2198 = vmul.f32 %v2059, %v2181
    %v2199 = vmul.f32 %v2064, %v2186
    %v2200 = vmul.f32 %v2069, %v2191
    %v2201 = vmul.f32 %v2074, %v2196
    %2203 = vset.pattern.permute.xlu0 0
    %2204 = vperm.xlu0 %2203, %v2106
    %v2205 = vpop.permute.xlu0 %2204
    %2208 = vset.pattern.permute.xlu0 0
    %2209 = vperm.xlu0 %2208, %v2107
    %v2210 = vpop.permute.xlu0 %2209
    %2213 = vset.pattern.permute.xlu0 0
    %2214 = vperm.xlu0 %2213, %v2108
    %v2215 = vpop.permute.xlu0 %2214
    %2218 = vset.pattern.permute.xlu0 0
    %2219 = vperm.xlu0 %2218, %v2109
    %v2220 = vpop.permute.xlu0 %2219
    %v2222 = vsel %vm126, %v2205, %v2198
    %v2223 = vsel %vm126, %v2210, %v2199
    %v2224 = vsel %vm126, %v2215, %v2200
    %v2225 = vsel %vm126, %v2220, %v2201
    %v2226 = vsub.f32 0.0, %v1974
    %v2227 = vsub.f32 0.0, %v1975
    %v2228 = vsub.f32 0.0, %v1976
    %v2229 = vsub.f32 0.0, %v1977
    %v2230 = vsel %vm126, %v2226, %v1950
    %v2231 = vsel %vm126, %v2227, %v1951
    %v2232 = vsel %vm126, %v2228, %v1952
    %v2233 = vsel %vm126, %v2229, %v1953
    %v2235 = vsel %vm131, %v2230, 0
    %v2238 = vsel %vm131, %v2231, 0
    %v2241 = vsel %vm131, %v2232, 0
    %v2244 = vsel %vm131, %v2233, 0
    %v2247 = vsel %vm131, %v2222, 0
    %v2250 = vsel %vm131, %v2223, 0
    %v2253 = vsel %vm131, %v2224, 0
    %v2256 = vsel %vm131, %v2225, 0
    %2258 = vmatprep.subr.mxu0 0.0
    %2259 = vmatpush1.xpose.msra.mxu0 %v2247
    %2260 = vmatprep.subr.mxu0 0.0
    %2261 = vmatpush1.xpose.msra.mxu0 %v2250
    %2262 = vmatprep.subr.mxu0 0.0
    %2263 = vmatpush1.xpose.msra.mxu0 %v2253
    %2264 = vmatprep.subr.mxu0 0.0
    %2265 = vmatpush1.xpose.msra.mxu0 %v2256
    %2266 = vmatprep.subr.mxu0 0.0
    %2267 = vmatpush1.xpose.msra.mxu0 0.0
    %2268 = vmatprep.subr.mxu0 0.0
    %2269 = vmatpush1.xpose.msra.mxu0 0.0
    %2270 = vmatprep.subr.mxu0 0.0
    %2271 = vmatpush1.xpose.msra.mxu0 0.0
    %2272 = vmatprep.subr.mxu0 0.0
    %2273 = vmatpush1.xpose.msra.mxu0 0.0
    %2274 = vmatprep.subr.mxu0 0.0
    %2275 = vmatpush1.xpose.msra.mxu0 0.0
    %2276 = vmatprep.subr.mxu0 0.0
    %2277 = vmatpush1.xpose.msra.mxu0 0.0
    %2278 = vmatprep.subr.mxu0 0.0
    %2279 = vmatpush1.xpose.msra.mxu0 0.0
    %2280 = vmatprep.subr.mxu0 0.0
    %2281 = vmatpush1.xpose.msra.mxu0 0.0
    %2282 = vmatprep.subr.mxu0 0.0
    %2283 = vmatpush1.xpose.msra.mxu0 0.0
    %2284 = vmatprep.subr.mxu0 0.0
    %2285 = vmatpush1.xpose.msra.mxu0 0.0
    %2286 = vmatprep.subr.mxu0 0.0
    %2287 = vmatpush1.xpose.msra.mxu0 0.0
    %2288 = vmatprep.subr.mxu0 0.0
    %2289 = vmatpush1.xpose.msra.mxu0 0.0
    %2290 = vmatprep.subr.mxu0 0.0
    %2291 = vmatpush1.xpose.msra.mxu0 0.0
    %2292 = vmatprep.subr.mxu0 0.0
    %2293 = vmatpush1.xpose.msra.mxu0 0.0
    %2294 = vmatprep.subr.mxu0 0.0
    %2295 = vmatpush1.xpose.msra.mxu0 0.0
    %2296 = vmatprep.subr.mxu0 0.0
    %2297 = vmatpush1.xpose.msra.mxu0 0.0
    %2298 = vmatprep.subr.mxu0 0.0
    %2299 = vmatpush1.xpose.msra.mxu0 0.0
    %2300 = vmatprep.subr.mxu0 0.0
    %2301 = vmatpush1.xpose.msra.mxu0 0.0
    %2302 = vmatprep.subr.mxu0 0.0
    %2303 = vmatpush1.xpose.msra.mxu0 0.0
    %2304 = vmatprep.subr.mxu0 0.0
    %2305 = vmatpush1.xpose.msra.mxu0 0.0
    %2306 = vmatprep.subr.mxu0 0.0
    %2307 = vmatpush1.xpose.msra.mxu0 0.0
    %2308 = vmatprep.subr.mxu0 0.0
    %2309 = vmatpush1.xpose.msra.mxu0 0.0
    %2310 = vmatprep.subr.mxu0 0.0
    %2311 = vmatpush1.xpose.msra.mxu0 0.0
    %2312 = vmatprep.subr.mxu0 0.0
    %2313 = vmatpush1.xpose.msra.mxu0 0.0
    %2314 = vmatprep.subr.mxu0 0.0
    %2315 = vmatpush1.xpose.msra.mxu0 0.0
    %2316 = vmatprep.subr.mxu0 0.0
    %2317 = vmatpush1.xpose.msra.mxu0 0.0
    %2318 = vmatprep.subr.mxu0 0.0
    %2319 = vmatpush1.xpose.msra.mxu0 0.0
    %2320 = vmatprep.subr.mxu0 0.0
    %2321 = vmatpush1.xpose.msra.mxu0 0.0
    %2322 = vmatprep.mubr.f32.mxu0 0.0
    %2323 = vmatmul.mubr.f32.gmra.mrb[0].mxu0 %v2235
    %v2324 = vpop.f32.mrb[0].mxu0
    %v2325 = vadd.f32 0.0, %v2324
    %v2326 = vpop.f32.mrb[0].mxu0
    %2327 = vmatprep.mubr.f32.mxu0 0.0
    %2328 = vmatmul.mubr.f32.gmra.mrb[0].mxu0 %v2238
    %v2329 = vpop.f32.mrb[0].mxu0
    %v2330 = vadd.f32 0.0, %v2329
    %v2331 = vpop.f32.mrb[0].mxu0
    %2332 = vmatprep.mubr.f32.mxu0 0.0
    %2333 = vmatmul.mubr.f32.gmra.mrb[0].mxu0 %v2241
    %v2334 = vpop.f32.mrb[0].mxu0
    %v2335 = vadd.f32 0.0, %v2334
    %v2336 = vpop.f32.mrb[0].mxu0
    %2337 = vmatprep.mubr.f32.mxu0 0.0
    %2338 = vmatmul.mubr.f32.gmra.mrb[0].mxu0 %v2244
    %v2339 = vpop.f32.mrb[0].mxu0
    %v2340 = vadd.f32 0.0, %v2339
    %v2341 = vpop.f32.mrb[0].mxu0
    %2342 = vdwg.mxu0
    %v2343 = vmul.f32 %v2325, 2.0
    %v2344 = vmul.f32 %v2330, 2.0
    %v2345 = vmul.f32 %v2335, 2.0
    %v2346 = vmul.f32 %v2340, 2.0
    %v2347 = vadd.f32 %v2343, 2.0
    %v2348 = vadd.f32 %v2344, 2.0
    %v2349 = vadd.f32 %v2345, 2.0
    %v2350 = vadd.f32 %v2346, 2.0
    %s2351 = sld [smem:[#allocation2 + $0x7]]
    %v2352 = vstv %s2351
    %v2353 = vmul.f32 %v2347, %v2352
    %v2354 = vmul.f32 %v2348, %v2352
    %v2355 = vmul.f32 %v2349, %v2352
    %v2356 = vmul.f32 %v2350, %v2352
    %s2357 = sld [smem:[#allocation2 + $0x8]]
    %v2358 = vstv %s2357
    %v2359 = vadd.f32 %v2353, %v2358
    %v2360 = vadd.f32 %v2354, %v2358
    %v2361 = vadd.f32 %v2355, %v2358
    %v2362 = vadd.f32 %v2356, %v2358
    %v2363 = vsub.f32 0.0, %v2359
    %v2364 = vsub.f32 0.0, %v2360
    %v2365 = vsub.f32 0.0, %v2361
    %v2366 = vsub.f32 0.0, %v2362
    %v2367 = vmul.f32 %v2363, 1.442695
    %v2368 = vpow.pop %v2367
    %v2369 = vmul.f32 %v2364, 1.442695
    %v2370 = vpow.pop %v2369
    %v2371 = vmul.f32 %v2365, 1.442695
    %v2372 = vpow.pop %v2371
    %v2373 = vmul.f32 %v2366, 1.442695
    %v2374 = vpow.pop %v2373
    %v2375 = vadd.f32 %v2368, 1.0
    %v2376 = vadd.f32 %v2370, 1.0
    %v2377 = vadd.f32 %v2372, 1.0
    %v2378 = vadd.f32 %v2374, 1.0
    %v2379 = vrcp.pop %v2375
    %v2380 = vmul.f32 1.0, %v2379
    %v2381 = vrcp.pop %v2376
    %v2382 = vmul.f32 1.0, %v2381
    %v2383 = vrcp.pop %v2377
    %v2384 = vmul.f32 1.0, %v2383
    %v2385 = vrcp.pop %v2378
    %v2386 = vmul.f32 1.0, %v2385
    %v2387 = vmul.f32 %v2380, %v196
    %v2388 = vmul.f32 %v2382, %v197
    %v2389 = vmul.f32 %v2384, %v198
    %v2390 = vmul.f32 %v2386, %v199
    %v2391 = vpack.c.bf16 %v2388, %v2387
    %v2392 = vpack.c.bf16 %v2390, %v2389
    %v2393 = vpack.c.bf16 %v1727, %v1726
    %v2394 = vpack.c.bf16 %v1729, %v1728
    %2397 = vrot.lane.b32.xlu0 %v2393, 127
    %v2398 = vpop.permute.xlu0 %2397
    %2399 = vrot.lane.b32.xlu0 %v2394, 127
    %v2400 = vpop.permute.xlu0 %2399
    %v2404 = vsel %vm351, %v2391, 0
    %v2407 = vsel %vm351, %v2392, 0
    %2409 = vmatprep.subr.bf16.mxu0 0
    %2410 = vmatpush1.bf16.msra.mxu0 %v2398
    %2411 = vmatprep.subr.bf16.mxu0 0
    %2412 = vmatpush1.bf16.msra.mxu0 %v2400
    %2413 = vmatprep.subr.bf16.mxu0 0
    %2414 = vmatpush1.bf16.msra.mxu0 0
    %2415 = vmatprep.subr.bf16.mxu0 0
    %2416 = vmatpush1.bf16.msra.mxu0 0
    %2417 = vmatprep.subr.bf16.mxu0 0
    %2418 = vmatpush1.bf16.msra.mxu0 0
    %2419 = vmatprep.subr.bf16.mxu0 0
    %2420 = vmatpush1.bf16.msra.mxu0 0
    %2421 = vmatprep.subr.bf16.mxu0 0
    %2422 = vmatpush1.bf16.msra.mxu0 0
    %2423 = vmatprep.subr.bf16.mxu0 0
    %2424 = vmatpush1.bf16.msra.mxu0 0
    %2425 = vmatprep.subr.bf16.mxu0 0
    %2426 = vmatpush1.bf16.msra.mxu0 0
    %2427 = vmatprep.subr.bf16.mxu0 0
    %2428 = vmatpush1.bf16.msra.mxu0 0
    %2429 = vmatprep.subr.bf16.mxu0 0
    %2430 = vmatpush1.bf16.msra.mxu0 0
    %2431 = vmatprep.subr.bf16.mxu0 0
    %2432 = vmatpush1.bf16.msra.mxu0 0
    %2433 = vmatprep.subr.bf16.mxu0 0
    %2434 = vmatpush1.bf16.msra.mxu0 0
    %2435 = vmatprep.subr.bf16.mxu0 0
    %2436 = vmatpush1.bf16.msra.mxu0 0
    %2437 = vmatprep.subr.bf16.mxu0 0
    %2438 = vmatpush1.bf16.msra.mxu0 0
    %2439 = vmatprep.subr.bf16.mxu0 0
    %2440 = vmatpush1.bf16.msra.mxu0 0
    %2441 = vmatprep.mubr.bf16.mxu0 0
    %2442 = vmatmul.mubr.bf16.gmra.mrb[0].mxu0 %v2404
    %v2443 = vpop.f32.mrb[0].mxu0
    %v2444 = vadd.f32 0.0, %v2443
    %v2445 = vpop.f32.mrb[0].mxu0
    %v2446 = vpop.f32.mrb[0].mxu0
    %v2447 = vadd.f32 0.0, %v2446
    %v2448 = vpop.f32.mrb[0].mxu0
    %2449 = vmatprep.mubr.bf16.mxu0 0
    %2450 = vmatmul.mubr.bf16.gmra.mrb[0].mxu0 %v2407
    %v2451 = vpop.f32.mrb[0].mxu0
    %v2452 = vadd.f32 0.0, %v2451
    %v2453 = vpop.f32.mrb[0].mxu0
    %v2454 = vpop.f32.mrb[0].mxu0
    %v2455 = vadd.f32 0.0, %v2454
    %v2456 = vpop.f32.mrb[0].mxu0
    %2457 = vdwg.mxu0
    %v2458 = vmul.f32 %v2444, 10.0
    %v2459 = vmul.f32 %v2447, 10.0
    %v2460 = vmul.f32 %v2452, 10.0
    %v2461 = vmul.f32 %v2455, 10.0
    %vm2462 = vcmask 80896
    %v2463 = vsel %vm2462, %v2458, -inf
    %2464 = vmax.xlane.f32.xlu0 %v2463
    %v2465 = vpop.xlane.xlu0 %2464
    %v2466 = vsel %vm2462, %v2459, -inf
    %2467 = vmax.xlane.f32.xlu0 %v2466
    %v2468 = vpop.xlane.xlu0 %2467
    %v2469 = vsel %vm2462, %v2460, -inf
    %2470 = vmax.xlane.f32.xlu0 %v2469
    %v2471 = vpop.xlane.xlu0 %2470
    %v2472 = vsel %vm2462, %v2461, -inf
    %2473 = vmax.xlane.f32.xlu0 %v2472
    %v2474 = vpop.xlane.xlu0 %2473
    %v2475 = vsub.f32 %v2458, %v2465
    %v2476 = vsub.f32 %v2459, %v2468
    %v2477 = vsub.f32 %v2460, %v2471
    %v2478 = vsub.f32 %v2461, %v2474
    %v2479 = vmul.f32 %v2475, 1.442695
    %v2480 = vpow.pop %v2479
    %v2481 = vmul.f32 %v2476, 1.442695
    %v2482 = vpow.pop %v2481
    %v2483 = vmul.f32 %v2477, 1.442695
    %v2484 = vpow.pop %v2483
    %v2485 = vmul.f32 %v2478, 1.442695
    %v2486 = vpow.pop %v2485
    %v2487 = vsel %vm2462, %v2480, 0.0
    %2488 = vadd.xlane.f32.xlu0 %v2487
    %v2489 = vpop.xlane.xlu0 %2488
    %v2490 = vsel %vm2462, %v2482, 0.0
    %2491 = vadd.xlane.f32.xlu0 %v2490
    %v2492 = vpop.xlane.xlu0 %2491
    %v2493 = vsel %vm2462, %v2484, 0.0
    %2494 = vadd.xlane.f32.xlu0 %v2493
    %v2495 = vpop.xlane.xlu0 %2494
    %v2496 = vsel %vm2462, %v2486, 0.0
    %2497 = vadd.xlane.f32.xlu0 %v2496
    %v2498 = vpop.xlane.xlu0 %2497
    %v2499 = vrcp.pop %v2489
    %v2500 = vrcp.pop %v2492
    %v2501 = vrcp.pop %v2495
    %v2502 = vrcp.pop %v2498
    %v2503 = vmul.f32 %v2480, %v2499
    %v2504 = vmul.f32 %v2482, %v2500
    %v2505 = vmul.f32 %v2484, %v2501
    %v2506 = vmul.f32 %v2486, %v2502
    %2507 = vxpose.xlu0.b32.start [1/16] %v2503, 128
    %2508 = vxpose.xlu0.b32.cont [2/16] %v2504, 128
    %2509 = vxpose.xlu0.b32.cont [3/16] %v2505, 128
    %2510 = vxpose.xlu0.b32.cont [4/16] %v2506, 128
    %2511 = vxpose.xlu0.b32.cont [5/16] 0.0, 128
    %2512 = vxpose.xlu0.b32.cont [6/16] 0.0, 128
    %2513 = vxpose.xlu0.b32.cont [7/16] 0.0, 128
    %2514 = vxpose.xlu0.b32.cont [8/16] 0.0, 128
    %2515 = vxpose.xlu0.b32.cont [9/16] 0.0, 128
    %2516 = vxpose.xlu0.b32.cont [10/16] 0.0, 128
    %2517 = vxpose.xlu0.b32.cont [11/16] 0.0, 128
    %2518 = vxpose.xlu0.b32.cont [12/16] 0.0, 128
    %2519 = vxpose.xlu0.b32.cont [13/16] 0.0, 128
    %2520 = vxpose.xlu0.b32.cont [14/16] 0.0, 128
    %2521 = vxpose.xlu0.b32.cont [15/16] 0.0, 128
    %2522 = vxpose.xlu0.b32.end [16/16] 0.0, 128
    %v2523 = vpop.trf.xlu0
    %v2524 = vpop.trf.xlu0
    %v2525 = vpop.trf.xlu0
    %v2526 = vpop.trf.xlu0
    %v2527 = vpop.trf.xlu0
    %v2528 = vpop.trf.xlu0
    %v2529 = vpop.trf.xlu0
    %v2530 = vpop.trf.xlu0
    %v2531 = vpop.trf.xlu0
    %v2532 = vpop.trf.xlu0
    %v2533 = vpop.trf.xlu0
    %v2534 = vpop.trf.xlu0
    %v2535 = vpop.trf.xlu0
    %v2536 = vpop.trf.xlu0
    %v2537 = vpop.trf.xlu0
    %v2538 = vpop.trf.xlu0
    %v2540 = vsel %vm351, %v2523, 0
    %v2543 = vsel %vm351, %v2524, 0
    %2545 = vmatprep.subr.mxu0 0.0
    %2546 = vmatpush1.msra.mxu0 %v1084
    %2547 = vmatprep.subr.mxu0 0.0
    %2548 = vmatpush1.msra.mxu0 %v1085
    %2549 = vmatprep.subr.mxu0 0.0
    %2550 = vmatpush1.msra.mxu0 %v1086
    %2551 = vmatprep.subr.mxu0 0.0
    %2552 = vmatpush1.msra.mxu0 %v1087
    %2553 = vmatprep.subr.mxu0 0.0
    %2554 = vmatpush1.msra.mxu0 0.0
    %2555 = vmatprep.subr.mxu0 0.0
    %2556 = vmatpush1.msra.mxu0 0.0
    %2557 = vmatprep.subr.mxu0 0.0
    %2558 = vmatpush1.msra.mxu0 0.0
    %2559 = vmatprep.subr.mxu0 0.0
    %2560 = vmatpush1.msra.mxu0 0.0
    %2561 = vmatprep.subr.mxu0 0.0
    %2562 = vmatpush1.msra.mxu0 0.0
    %2563 = vmatprep.subr.mxu0 0.0
    %2564 = vmatpush1.msra.mxu0 0.0
    %2565 = vmatprep.subr.mxu0 0.0
    %2566 = vmatpush1.msra.mxu0 0.0
    %2567 = vmatprep.subr.mxu0 0.0
    %2568 = vmatpush1.msra.mxu0 0.0
    %2569 = vmatprep.subr.mxu0 0.0
    %2570 = vmatpush1.msra.mxu0 0.0
    %2571 = vmatprep.subr.mxu0 0.0
    %2572 = vmatpush1.msra.mxu0 0.0
    %2573 = vmatprep.subr.mxu0 0.0
    %2574 = vmatpush1.msra.mxu0 0.0
    %2575 = vmatprep.subr.mxu0 0.0
    %2576 = vmatpush1.msra.mxu0 0.0
    %2577 = vmatprep.subr.mxu0 0.0
    %2578 = vmatpush1.msra.mxu0 0.0
    %2579 = vmatprep.subr.mxu0 0.0
    %2580 = vmatpush1.msra.mxu0 0.0
    %2581 = vmatprep.subr.mxu0 0.0
    %2582 = vmatpush1.msra.mxu0 0.0
    %2583 = vmatprep.subr.mxu0 0.0
    %2584 = vmatpush1.msra.mxu0 0.0
    %2585 = vmatprep.subr.mxu0 0.0
    %2586 = vmatpush1.msra.mxu0 0.0
    %2587 = vmatprep.subr.mxu0 0.0
    %2588 = vmatpush1.msra.mxu0 0.0
    %2589 = vmatprep.subr.mxu0 0.0
    %2590 = vmatpush1.msra.mxu0 0.0
    %2591 = vmatprep.subr.mxu0 0.0
    %2592 = vmatpush1.msra.mxu0 0.0
    %2593 = vmatprep.subr.mxu0 0.0
    %2594 = vmatpush1.msra.mxu0 0.0
    %2595 = vmatprep.subr.mxu0 0.0
    %2596 = vmatpush1.msra.mxu0 0.0
    %2597 = vmatprep.subr.mxu0 0.0
    %2598 = vmatpush1.msra.mxu0 0.0
    %2599 = vmatprep.subr.mxu0 0.0
    %2600 = vmatpush1.msra.mxu0 0.0
    %2601 = vmatprep.subr.mxu0 0.0
    %2602 = vmatpush1.msra.mxu0 0.0
    %2603 = vmatprep.subr.mxu0 0.0
    %2604 = vmatpush1.msra.mxu0 0.0
    %2605 = vmatprep.subr.mxu0 0.0
    %2606 = vmatpush1.msra.mxu0 0.0
    %2607 = vmatprep.subr.mxu0 0.0
    %2608 = vmatpush1.msra.mxu0 0.0
    %2609 = vmatprep.mubr.f32.mxu0 0.0
    %2610 = vmatmul.mubr.f32.gmra.mrb[0].mxu0 %v2540
    %v2611 = vpop.f32.mrb[0].mxu0
    %v2612 = vadd.f32 0.0, %v2611
    %v2613 = vpop.f32.mrb[0].mxu0
    %2614 = vmatprep.mubr.f32.mxu0 0.0
    %2615 = vmatmul.mubr.f32.gmra.mrb[0].mxu0 %v2543
    %v2616 = vpop.f32.mrb[0].mxu0
    %v2617 = vadd.f32 0.0, %v2616
    %v2618 = vpop.f32.mrb[0].mxu0
    %2619 = vdwg.mxu0
    %v2620 = vmul.f32 %v2612, %v2612
    %v2621 = vmul.f32 %v2617, %v2617
    %v2622 = vsel %vm131, %v2620, 0.0
    %2623 = vadd.xlane.f32.xlu0 %v2622
    %v2624 = vpop.xlane.xlu0 %2623
    %vm2625 = vcmask 132096
    %v2626 = vsel %vm2625, %v2621, 0.0
    %2627 = vadd.xlane.f32.xlu0 %v2626
    %v2628 = vpop.xlane.xlu0 %2627
    %v2629 = vmul.f32 %v2612, 2.0
    %v2630 = vmul.f32 %v2617, 2.0
    %v2631 = vmul.f32 %v2629, %v2612
    %v2632 = vmul.f32 %v2630, %v2617
    %v2633 = vsub.f32 %v2624, %v2631
    %v2634 = vsub.f32 %v2628, %v2632
    %v2635 = vand.u32 2147483647, %v2633
    %v2636 = vand.u32 2147483647, %v2634
    %v2637 = vmax.f32 %v2635, 1e-08
    %v2638 = vmax.f32 %v2636, 1e-08
    %v2639 = vrsqrt.pop %v2637
    %v2640 = vrsqrt.pop %v2638
    %2642 = vset.pattern.permute.xlu0 0
    %2643 = vperm.xlu0 %2642, %v2639
    %v2644 = vpop.permute.xlu0 %2643
    %2647 = vset.pattern.permute.xlu0 0
    %2648 = vperm.xlu0 %2647, %v2640
    %v2649 = vpop.permute.xlu0 %2648
    %v2651 = vmul.f32 %v2612, %v2644
    %v2652 = vmul.f32 %v2617, %v2649
    %2653 = vst.msk [vmem:[#allocation9] sm:$0xff] %vm131, %v2651
    %2654 = vst.msk [vmem:[#allocation9 + $0x8] sm:$0x3] %vm2625, %v2652
    %2655 = vst.msk [vmem:[%s27] sm:$0xff] %vm2462, %v2503
    %2656 = vst.msk [vmem:[%s27 + $0x8] sm:$0xff] %vm2462, %v2504
    %2657 = vst.msk [vmem:[%s27 + $0x10] sm:$0xff] %vm2462, %v2505
    %2658 = vst.msk [vmem:[%s27 + $0x18] sm:$0xff] %vm2462, %v2506
    %v2659 = vpack.c.bf16 %v2504, %v2503
    %v2660 = vpack.c.bf16 %v2506, %v2505
    %2661 = vxpose.xlu0.c.b16.start [1/8] %v2659, 128
    %2662 = vxpose.xlu0.c.b16.cont [2/8] %v2660, 128
    %2663 = vxpose.xlu0.c.b16.cont [3/8] 0, 128
    %2664 = vxpose.xlu0.c.b16.cont [4/8] 0, 128
    %2665 = vxpose.xlu0.c.b16.cont [5/8] 0, 128
    %2666 = vxpose.xlu0.c.b16.cont [6/8] 0, 128
    %2667 = vxpose.xlu0.c.b16.cont [7/8] 0, 128
    %2668 = vxpose.xlu0.c.b16.end [8/8] 0, 128
    %v2669 = vpop.trf.xlu0
    %v2670 = vpop.trf.xlu0
    %v2671 = vpop.trf.xlu0
    %v2672 = vpop.trf.xlu0
    %v2673 = vpop.trf.xlu0
    %v2674 = vpop.trf.xlu0
    %v2675 = vpop.trf.xlu0
    %v2676 = vpop.trf.xlu0
    %v2678 = vsel %vm351, %v2669, 0
    %2680 = vmatprep.subr.bf16.mxu0 0
    %2681 = vmatpush1.bf16.msra.mxu0 %v200
    %2682 = vmatprep.subr.bf16.mxu0 0
    %2683 = vmatpush1.bf16.msra.mxu0 %v201
    %2684 = vmatprep.subr.bf16.mxu0 0
    %2685 = vmatpush1.bf16.msra.mxu0 0
    %2686 = vmatprep.subr.bf16.mxu0 0
    %2687 = vmatpush1.bf16.msra.mxu0 0
    %2688 = vmatprep.subr.bf16.mxu0 0
    %2689 = vmatpush1.bf16.msra.mxu0 0
    %2690 = vmatprep.subr.bf16.mxu0 0
    %2691 = vmatpush1.bf16.msra.mxu0 0
    %2692 = vmatprep.subr.bf16.mxu0 0
    %2693 = vmatpush1.bf16.msra.mxu0 0
    %2694 = vmatprep.subr.bf16.mxu0 0
    %2695 = vmatpush1.bf16.msra.mxu0 0
    %2696 = vmatprep.subr.bf16.mxu0 0
    %2697 = vmatpush1.bf16.msra.mxu0 0
    %2698 = vmatprep.subr.bf16.mxu0 0
    %2699 = vmatpush1.bf16.msra.mxu0 0
    %2700 = vmatprep.subr.bf16.mxu0 0
    %2701 = vmatpush1.bf16.msra.mxu0 0
    %2702 = vmatprep.subr.bf16.mxu0 0
    %2703 = vmatpush1.bf16.msra.mxu0 0
    %2704 = vmatprep.subr.bf16.mxu0 0
    %2705 = vmatpush1.bf16.msra.mxu0 0
    %2706 = vmatprep.subr.bf16.mxu0 0
    %2707 = vmatpush1.bf16.msra.mxu0 0
    %2708 = vmatprep.subr.bf16.mxu0 0
    %2709 = vmatpush1.bf16.msra.mxu0 0
    %2710 = vmatprep.subr.bf16.mxu0 0
    %2711 = vmatpush1.bf16.msra.mxu0 0
    %2712 = vmatprep.mubr.bf16.mxu0 0
    %2713 = vmatmul.mubr.bf16.gmra.mrb[0].mxu0 %v2678
    %v2714 = vpop.f32.mrb[0].mxu0
    %v2715 = vadd.f32 0.0, %v2714
    %v2716 = vpop.f32.mrb[0].mxu0
    %v2717 = vpop.f32.mrb[0].mxu0
    %v2718 = vadd.f32 0.0, %v2717
    %v2719 = vpop.f32.mrb[0].mxu0
    %2720 = vdwg.mxu0
    %v2721 = vpack.c.bf16 %v2718, %v2715
    %v2723 = vsel %vm351, %v2721, 0
    %2725 = vmatprep.subr.bf16.mxu0 0
    %2726 = vmatpush1.bf16.msra.mxu0 %v2659
    %2727 = vmatprep.subr.bf16.mxu0 0
    %2728 = vmatpush1.bf16.msra.mxu0 %v2660
    %2729 = vmatprep.subr.bf16.mxu0 0
    %2730 = vmatpush1.bf16.msra.mxu0 0
    %2731 = vmatprep.subr.bf16.mxu0 0
    %2732 = vmatpush1.bf16.msra.mxu0 0
    %2733 = vmatprep.subr.bf16.mxu0 0
    %2734 = vmatpush1.bf16.msra.mxu0 0
    %2735 = vmatprep.subr.bf16.mxu0 0
    %2736 = vmatpush1.bf16.msra.mxu0 0
    %2737 = vmatprep.subr.bf16.mxu0 0
    %2738 = vmatpush1.bf16.msra.mxu0 0
    %2739 = vmatprep.subr.bf16.mxu0 0
    %2740 = vmatpush1.bf16.msra.mxu0 0
    %2741 = vmatprep.subr.bf16.mxu0 0
    %2742 = vmatpush1.bf16.msra.mxu0 0
    %2743 = vmatprep.subr.bf16.mxu0 0
    %2744 = vmatpush1.bf16.msra.mxu0 0
    %2745 = vmatprep.subr.bf16.mxu0 0
    %2746 = vmatpush1.bf16.msra.mxu0 0
    %2747 = vmatprep.subr.bf16.mxu0 0
    %2748 = vmatpush1.bf16.msra.mxu0 0
    %2749 = vmatprep.subr.bf16.mxu0 0
    %2750 = vmatpush1.bf16.msra.mxu0 0
    %2751 = vmatprep.subr.bf16.mxu0 0
    %2752 = vmatpush1.bf16.msra.mxu0 0
    %2753 = vmatprep.subr.bf16.mxu0 0
    %2754 = vmatpush1.bf16.msra.mxu0 0
    %2755 = vmatprep.subr.bf16.mxu0 0
    %2756 = vmatpush1.bf16.msra.mxu0 0
    %2757 = vmatprep.mubr.bf16.mxu0 0
    %2758 = vmatmul.mubr.bf16.gmra.mrb[0].mxu0 %v2723
    %v2759 = vpop.f32.mrb[0].mxu0
    %v2760 = vadd.f32 0.0, %v2759
    %v2761 = vpop.f32.mrb[0].mxu0
    %v2762 = vpop.f32.mrb[0].mxu0
    %v2763 = vadd.f32 0.0, %v2762
    %v2764 = vpop.f32.mrb[0].mxu0
    %2765 = vdwg.mxu0
    %v2766 = vpack.c.bf16 %v2763, %v2760
    %s2767 = sld [smem:[#allocation2 + $0x9]]
    %v2768 = vld [vmem:[%s15] sm:$0xff]
    %v2769 = vld [vmem:[%s15 + $0x8] sm:$0xff]
    %v2770 = vld [vmem:[%s15 + $0x10] sm:$0x1]
    %v2771 = vld [vmem:[%s16] sm:$0x1]
    %v2773 = vlaneseq
    %v2774 = vshrl.u32 %v2773, 7
    %v2775 = vsub.s32 0, %v2774
    %v2776 = vrot.slane %v2771, %v2775
    %v2779 = vsel %vm131, %v2651, 0
    %v2782 = vsel %vm131, %v2652, 0
    %v2785 = vsel %vm225, %v2770, 0
    %2787 = vmatprep.subr.mxu0 0.0
    %2788 = vmatpush1.msra.mxu0 %v2768
    %2789 = vmatprep.subr.mxu0 0.0
    %2790 = vmatpush1.msra.mxu0 %v2769
    %2791 = vmatprep.subr.mxu0 0.0
    %2792 = vmatpush1.msra.mxu0 %v2785
    %2793 = vmatprep.subr.mxu0 0.0
    %2794 = vmatpush1.msra.mxu0 0.0
    %2795 = vmatprep.subr.mxu0 0.0
    %2796 = vmatpush1.msra.mxu0 0.0
    %2797 = vmatprep.subr.mxu0 0.0
    %2798 = vmatpush1.msra.mxu0 0.0
    %2799 = vmatprep.subr.mxu0 0.0
    %2800 = vmatpush1.msra.mxu0 0.0
    %2801 = vmatprep.subr.mxu0 0.0
    %2802 = vmatpush1.msra.mxu0 0.0
    %2803 = vmatprep.subr.mxu0 0.0
    %2804 = vmatpush1.msra.mxu0 0.0
    %2805 = vmatprep.subr.mxu0 0.0
    %2806 = vmatpush1.msra.mxu0 0.0
    %2807 = vmatprep.subr.mxu0 0.0
    %2808 = vmatpush1.msra.mxu0 0.0
    %2809 = vmatprep.subr.mxu0 0.0
    %2810 = vmatpush1.msra.mxu0 0.0
    %2811 = vmatprep.subr.mxu0 0.0
    %2812 = vmatpush1.msra.mxu0 0.0
    %2813 = vmatprep.subr.mxu0 0.0
    %2814 = vmatpush1.msra.mxu0 0.0
    %2815 = vmatprep.subr.mxu0 0.0
    %2816 = vmatpush1.msra.mxu0 0.0
    %2817 = vmatprep.subr.mxu0 0.0
    %2818 = vmatpush1.msra.mxu0 0.0
    %2819 = vmatprep.subr.mxu0 0.0
    %2820 = vmatpush1.msra.mxu0 0.0
    %2821 = vmatprep.subr.mxu0 0.0
    %2822 = vmatpush1.msra.mxu0 0.0
    %2823 = vmatprep.subr.mxu0 0.0
    %2824 = vmatpush1.msra.mxu0 0.0
    %2825 = vmatprep.subr.mxu0 0.0
    %2826 = vmatpush1.msra.mxu0 0.0
    %2827 = vmatprep.subr.mxu0 0.0
    %2828 = vmatpush1.msra.mxu0 0.0
    %2829 = vmatprep.subr.mxu0 0.0
    %2830 = vmatpush1.msra.mxu0 0.0
    %2831 = vmatprep.subr.mxu0 0.0
    %2832 = vmatpush1.msra.mxu0 0.0
    %2833 = vmatprep.subr.mxu0 0.0
    %2834 = vmatpush1.msra.mxu0 0.0
    %2835 = vmatprep.subr.mxu0 0.0
    %2836 = vmatpush1.msra.mxu0 0.0
    %2837 = vmatprep.subr.mxu0 0.0
    %2838 = vmatpush1.msra.mxu0 0.0
    %2839 = vmatprep.subr.mxu0 0.0
    %2840 = vmatpush1.msra.mxu0 0.0
    %2841 = vmatprep.subr.mxu0 0.0
    %2842 = vmatpush1.msra.mxu0 0.0
    %2843 = vmatprep.subr.mxu0 0.0
    %2844 = vmatpush1.msra.mxu0 0.0
    %2845 = vmatprep.subr.mxu0 0.0
    %2846 = vmatpush1.msra.mxu0 0.0
    %2847 = vmatprep.subr.mxu0 0.0
    %2848 = vmatpush1.msra.mxu0 0.0
    %2849 = vmatprep.subr.mxu0 0.0
    %2850 = vmatpush1.msra.mxu0 0.0
    %2851 = vmatprep.mubr.f32.mxu0 0.0
    %2852 = vmatmul.mubr.f32.gmra.mrb[0].mxu0 %v2779
    %v2853 = vpop.f32.mrb[0].mxu0
    %v2854 = vadd.f32 %v2776, %v2853
    %v2855 = vpop.f32.mrb[0].mxu0
    %2856 = vmatprep.mubr.f32.mxu0 0.0
    %2857 = vmatmul.mubr.f32.gmra.mrb[0].mxu0 %v2782
    %v2858 = vpop.f32.mrb[0].mxu0
    %v2859 = vadd.f32 %v2776, %v2858
    %v2860 = vpop.f32.mrb[0].mxu0
    %2861 = vdwg.mxu0
    %v2862 = vsub.f32 0.0, %v2854
    %v2863 = vsub.f32 0.0, %v2859
    %v2864 = vmul.f32 %v2862, 1.442695
    %v2865 = vpow.pop %v2864
    %v2866 = vmul.f32 %v2863, 1.442695
    %v2867 = vpow.pop %v2866
    %v2868 = vadd.f32 %v2865, 1.0
    %v2869 = vadd.f32 %v2867, 1.0
    %v2870 = vrcp.pop %v2868
    %v2871 = vmul.f32 1.0, %v2870
    %v2872 = vrcp.pop %v2869
    %v2873 = vmul.f32 1.0, %v2872
    %v2874 = vstv %s2767
    %v2875 = vmul.f32 %v2871, %v2874
    %v2876 = vmul.f32 %v2873, %v2874
    %v2877 = vadd.f32 %v2875, 1.1
    %v2878 = vadd.f32 %v2876, 1.1
    %v2879 = vmul.f32 %v2854, %v2854
    %v2880 = vmul.f32 %v2859, %v2859
    %v2881 = vsel %vm351, %v2879, 0.0
    %2882 = vadd.xlane.f32.xlu0 %v2881
    %v2883 = vpop.xlane.xlu0 %2882
    %vm2884 = vcmask 254976
    %v2885 = vsel %vm2884, %v2880, 0.0
    %2886 = vadd.xlane.f32.xlu0 %v2885
    %v2887 = vpop.xlane.xlu0 %2886
    %v2888 = vsub.f32 %v2883, %v2879
    %v2889 = vsub.f32 %v2887, %v2880
    %v2890 = vmax.f32 %v2888, 1e-08
    %v2891 = vmax.f32 %v2889, 1e-08
    %v2892 = vmul.f32 %v2877, %v2877
    %v2893 = vmul.f32 %v2878, %v2878
    %v2894 = vsub.f32 %v2892, 1.0
    %v2895 = vsub.f32 %v2893, 1.0
    %v2896 = vrsqrt.pop %v2894
    %v2897 = vmul.f32 %v2894, %v2896
    %vm2898 = vcmp.eq.f32.partialorder %v2894, inf
    %v2899 = vsel %vm2898, %v2894, %v2897
    %vm2900 = vcmp.eq.f32.partialorder %v2894, 0.0
    %v2901 = vand.u32 %v2894, 2147483648
    %v2902 = vsel %vm2900, %v2901, %v2899
    %v2903 = vrsqrt.pop %v2895
    %v2904 = vmul.f32 %v2895, %v2903
    %vm2905 = vcmp.eq.f32.partialorder %v2895, inf
    %v2906 = vsel %vm2905, %v2895, %v2904
    %vm2907 = vcmp.eq.f32.partialorder %v2895, 0.0
    %v2908 = vand.u32 %v2895, 2147483648
    %v2909 = vsel %vm2907, %v2908, %v2906
    %v2910 = vrsqrt.pop %v2890
    %v2911 = vrsqrt.pop %v2891
    %v2912 = vmul.f32 %v2902, %v2910
    %v2913 = vmul.f32 %v2909, %v2911
    %2915 = vset.pattern.permute.xlu0 0
    %2916 = vperm.xlu0 %2915, %v2912
    %v2917 = vpop.permute.xlu0 %2916
    %2920 = vset.pattern.permute.xlu0 0
    %2921 = vperm.xlu0 %2920, %v2913
    %v2922 = vpop.permute.xlu0 %2921
    %v2924 = vmul.f32 %v2854, %v2917
    %v2925 = vmul.f32 %v2859, %v2922
    %2927 = vset.pattern.permute.xlu0 0
    %2928 = vperm.xlu0 %2927, %v2877
    %v2929 = vpop.permute.xlu0 %2928
    %2932 = vset.pattern.permute.xlu0 0
    %2933 = vperm.xlu0 %2932, %v2878
    %v2934 = vpop.permute.xlu0 %2933
    %v2936 = vsel %vm126, %v2929, %v2924
    %v2937 = vsel %vm126, %v2934, %v2925
    %s2938 = sld [smem:[#allocation2 + $0xa]]
    %v2939 = vmax.f32 %v2936, 0.0
    %v2940 = vmax.f32 %v2937, 0.0
    %v2941 = vld [vmem:[%s17] sm:$0xff]
    %v2942 = vld [vmem:[%s17 + $0x8] sm:$0xff]
    %v2943 = vld [vmem:[%s17 + $0x10] sm:$0xff]
    %v2944 = vld [vmem:[%s17 + $0x18] sm:$0xff]
    %v2945 = vld [vmem:[%s18] sm:$0x1]
    %v2947 = vlaneseq
    %v2948 = vshrl.u32 %v2947, 7
    %v2949 = vsub.s32 0, %v2948
    %v2950 = vrot.slane %v2945, %v2949
    %v2953 = vsel %vm351, %v2939, 0
    %v2956 = vsel %vm351, %v2940, 0
    %2958 = vmatprep.subr.mxu0 0.0
    %2959 = vmatpush1.msra.mxu0 %v2941
    %2960 = vmatprep.subr.mxu0 0.0
    %2961 = vmatpush1.msra.mxu0 %v2942
    %2962 = vmatprep.subr.mxu0 0.0
    %2963 = vmatpush1.msra.mxu0 %v2943
    %2964 = vmatprep.subr.mxu0 0.0
    %2965 = vmatpush1.msra.mxu0 %v2944
    %2966 = vmatprep.subr.mxu0 0.0
    %2967 = vmatpush1.msra.mxu0 0.0
    %2968 = vmatprep.subr.mxu0 0.0
    %2969 = vmatpush1.msra.mxu0 0.0
    %2970 = vmatprep.subr.mxu0 0.0
    %2971 = vmatpush1.msra.mxu0 0.0
    %2972 = vmatprep.subr.mxu0 0.0
    %2973 = vmatpush1.msra.mxu0 0.0
    %2974 = vmatprep.subr.mxu0 0.0
    %2975 = vmatpush1.msra.mxu0 0.0
    %2976 = vmatprep.subr.mxu0 0.0
    %2977 = vmatpush1.msra.mxu0 0.0
    %2978 = vmatprep.subr.mxu0 0.0
    %2979 = vmatpush1.msra.mxu0 0.0
    %2980 = vmatprep.subr.mxu0 0.0
    %2981 = vmatpush1.msra.mxu0 0.0
    %2982 = vmatprep.subr.mxu0 0.0
    %2983 = vmatpush1.msra.mxu0 0.0
    %2984 = vmatprep.subr.mxu0 0.0
    %2985 = vmatpush1.msra.mxu0 0.0
    %2986 = vmatprep.subr.mxu0 0.0
    %2987 = vmatpush1.msra.mxu0 0.0
    %2988 = vmatprep.subr.mxu0 0.0
    %2989 = vmatpush1.msra.mxu0 0.0
    %2990 = vmatprep.subr.mxu0 0.0
    %2991 = vmatpush1.msra.mxu0 0.0
    %2992 = vmatprep.subr.mxu0 0.0
    %2993 = vmatpush1.msra.mxu0 0.0
    %2994 = vmatprep.subr.mxu0 0.0
    %2995 = vmatpush1.msra.mxu0 0.0
    %2996 = vmatprep.subr.mxu0 0.0
    %2997 = vmatpush1.msra.mxu0 0.0
    %2998 = vmatprep.subr.mxu0 0.0
    %2999 = vmatpush1.msra.mxu0 0.0
    %3000 = vmatprep.subr.mxu0 0.0
    %3001 = vmatpush1.msra.mxu0 0.0
    %3002 = vmatprep.subr.mxu0 0.0
    %3003 = vmatpush1.msra.mxu0 0.0
    %3004 = vmatprep.subr.mxu0 0.0
    %3005 = vmatpush1.msra.mxu0 0.0
    %3006 = vmatprep.subr.mxu0 0.0
    %3007 = vmatpush1.msra.mxu0 0.0
    %3008 = vmatprep.subr.mxu0 0.0
    %3009 = vmatpush1.msra.mxu0 0.0
    %3010 = vmatprep.subr.mxu0 0.0
    %3011 = vmatpush1.msra.mxu0 0.0
    %3012 = vmatprep.subr.mxu0 0.0
    %3013 = vmatpush1.msra.mxu0 0.0
    %3014 = vmatprep.subr.mxu0 0.0
    %3015 = vmatpush1.msra.mxu0 0.0
    %3016 = vmatprep.subr.mxu0 0.0
    %3017 = vmatpush1.msra.mxu0 0.0
    %3018 = vmatprep.subr.mxu0 0.0
    %3019 = vmatpush1.msra.mxu0 0.0
    %3020 = vmatprep.subr.mxu0 0.0
    %3021 = vmatpush1.msra.mxu0 0.0
    %3022 = vmatprep.mubr.f32.mxu0 0.0
    %3023 = vmatmul.mubr.f32.gmra.mrb[0].mxu0 %v2953
    %v3024 = vpop.f32.mrb[0].mxu0
    %v3025 = vadd.f32 %v2950, %v3024
    %v3026 = vpop.f32.mrb[0].mxu0
    %3027 = vmatprep.mubr.f32.mxu0 0.0
    %3028 = vmatmul.mubr.f32.gmra.mrb[0].mxu0 %v2956
    %v3029 = vpop.f32.mrb[0].mxu0
    %v3030 = vadd.f32 %v2950, %v3029
    %v3031 = vpop.f32.mrb[0].mxu0
    %3032 = vdwg.mxu0
    %v3033 = vsub.f32 0.0, %v3025
    %v3034 = vsub.f32 0.0, %v3030
    %v3035 = vmul.f32 %v3033, 1.442695
    %v3036 = vpow.pop %v3035
    %v3037 = vmul.f32 %v3034, 1.442695
    %v3038 = vpow.pop %v3037
    %v3039 = vadd.f32 %v3036, 1.0
    %v3040 = vadd.f32 %v3038, 1.0
    %v3041 = vrcp.pop %v3039
    %v3042 = vmul.f32 1.0, %v3041
    %v3043 = vrcp.pop %v3040
    %v3044 = vmul.f32 1.0, %v3043
    %v3045 = vstv %s2938
    %v3046 = vmul.f32 %v3042, %v3045
    %v3047 = vmul.f32 %v3044, %v3045
    %v3048 = vadd.f32 %v3046, 1.1
    %v3049 = vadd.f32 %v3047, 1.1
    %v3050 = vmul.f32 %v3025, %v3025
    %v3051 = vmul.f32 %v3030, %v3030
    %vm3052 = vcmask 31744
    %v3053 = vsel %vm3052, %v3050, 0.0
    %3054 = vadd.xlane.f32.xlu0 %v3053
    %v3055 = vpop.xlane.xlu0 %3054
    %vm3056 = vcmask 25600
    %v3057 = vsel %vm3056, %v3051, 0.0
    %3058 = vadd.xlane.f32.xlu0 %v3057
    %v3059 = vpop.xlane.xlu0 %3058
    %v3060 = vsub.f32 %v3055, %v3050
    %v3061 = vsub.f32 %v3059, %v3051
    %v3062 = vmax.f32 %v3060, 1e-08
    %v3063 = vmax.f32 %v3061, 1e-08
    %v3064 = vmul.f32 %v3048, %v3048
    %v3065 = vmul.f32 %v3049, %v3049
    %v3066 = vsub.f32 %v3064, 1.0
    %v3067 = vsub.f32 %v3065, 1.0
    %v3068 = vrsqrt.pop %v3066
    %v3069 = vmul.f32 %v3066, %v3068
    %vm3070 = vcmp.eq.f32.partialorder %v3066, inf
    %v3071 = vsel %vm3070, %v3066, %v3069
    %vm3072 = vcmp.eq.f32.partialorder %v3066, 0.0
    %v3073 = vand.u32 %v3066, 2147483648
    %v3074 = vsel %vm3072, %v3073, %v3071
    %v3075 = vrsqrt.pop %v3067
    %v3076 = vmul.f32 %v3067, %v3075
    %vm3077 = vcmp.eq.f32.partialorder %v3067, inf
    %v3078 = vsel %vm3077, %v3067, %v3076
    %vm3079 = vcmp.eq.f32.partialorder %v3067, 0.0
    %v3080 = vand.u32 %v3067, 2147483648
    %v3081 = vsel %vm3079, %v3080, %v3078
    %v3082 = vrsqrt.pop %v3062
    %v3083 = vrsqrt.pop %v3063
    %v3084 = vmul.f32 %v3074, %v3082
    %v3085 = vmul.f32 %v3081, %v3083
    %3087 = vset.pattern.permute.xlu0 0
    %3088 = vperm.xlu0 %3087, %v3084
    %v3089 = vpop.permute.xlu0 %3088
    %3092 = vset.pattern.permute.xlu0 0
    %3093 = vperm.xlu0 %3092, %v3085
    %v3094 = vpop.permute.xlu0 %3093
    %v3096 = vmul.f32 %v3025, %v3089
    %v3097 = vmul.f32 %v3030, %v3094
    %3099 = vset.pattern.permute.xlu0 0
    %3100 = vperm.xlu0 %3099, %v3048
    %v3101 = vpop.permute.xlu0 %3100
    %3104 = vset.pattern.permute.xlu0 0
    %3105 = vperm.xlu0 %3104, %v3049
    %v3106 = vpop.permute.xlu0 %3105
    %v3108 = vsel %vm126, %v3101, %v3096
    %v3109 = vsel %vm126, %v3106, %v3097
    %v3110 = vpack.c.bf16 %v3109, %v3108
    %v3112 = vsel %vm2462, %v2766, 0
    %vm3114 = vcmask 1044480
    %v3116 = vsel %vm3114, %v3110, 0
    %3118 = vmatprep.subr.bf16.mxu0 0
    %3119 = vmatpush1.bf16.msra.mxu0 %v3116
    %3120 = vmatprep.subr.bf16.mxu0 0
    %3121 = vmatpush1.bf16.msra.mxu0 0
    %3122 = vmatprep.subr.bf16.mxu0 0
    %3123 = vmatpush1.bf16.msra.mxu0 0
    %3124 = vmatprep.subr.bf16.mxu0 0
    %3125 = vmatpush1.bf16.msra.mxu0 0
    %3126 = vmatprep.subr.bf16.mxu0 0
    %3127 = vmatpush1.bf16.msra.mxu0 0
    %3128 = vmatprep.subr.bf16.mxu0 0
    %3129 = vmatpush1.bf16.msra.mxu0 0
    %3130 = vmatprep.subr.bf16.mxu0 0
    %3131 = vmatpush1.bf16.msra.mxu0 0
    %3132 = vmatprep.subr.bf16.mxu0 0
    %3133 = vmatpush1.bf16.msra.mxu0 0
    %3134 = vmatprep.subr.bf16.mxu0 0
    %3135 = vmatpush1.bf16.msra.mxu0 0
    %3136 = vmatprep.subr.bf16.mxu0 0
    %3137 = vmatpush1.bf16.msra.mxu0 0
    %3138 = vmatprep.subr.bf16.mxu0 0
    %3139 = vmatpush1.bf16.msra.mxu0 0
    %3140 = vmatprep.subr.bf16.mxu0 0
    %3141 = vmatpush1.bf16.msra.mxu0 0
    %3142 = vmatprep.subr.bf16.mxu0 0
    %3143 = vmatpush1.bf16.msra.mxu0 0
    %3144 = vmatprep.subr.bf16.mxu0 0
    %3145 = vmatpush1.bf16.msra.mxu0 0
    %3146 = vmatprep.subr.bf16.mxu0 0
    %3147 = vmatpush1.bf16.msra.mxu0 0
    %3148 = vmatprep.subr.bf16.mxu0 0
    %3149 = vmatpush1.bf16.msra.mxu0 0
    %3150 = vmatprep.mubr.bf16.mxu0 0
    %3151 = vmatmul.mubr.bf16.gmra.mrb[0].mxu0 %v3112
    %v3152 = vpop.f32.mrb[0].mxu0
    %v3153 = vadd.f32 0.0, %v3152
    %v3154 = vpop.f32.mrb[0].mxu0
    %v3155 = vpop.f32.mrb[0].mxu0
    %v3156 = vadd.f32 0.0, %v3155
    %v3157 = vpop.f32.mrb[0].mxu0
    %3158 = vdwg.mxu0
    %v3159 = vmul.f32 %v3153, %v3153
    %v3160 = vmul.f32 %v3156, %v3156
    %v3161 = vsel %vm3052, %v3159, 0.0
    %3162 = vadd.xlane.f32.xlu0 %v3161
    %v3163 = vpop.xlane.xlu0 %3162
    %v3164 = vsel %vm3056, %v3160, 0.0
    %3165 = vadd.xlane.f32.xlu0 %v3164
    %v3166 = vpop.xlane.xlu0 %3165
    %v3167 = vmul.f32 %v3153, 2.0
    %v3168 = vmul.f32 %v3156, 2.0
    %v3169 = vmul.f32 %v3167, %v3153
    %v3170 = vmul.f32 %v3168, %v3156
    %v3171 = vsub.f32 %v3163, %v3169
    %v3172 = vsub.f32 %v3166, %v3170
    %v3173 = vand.u32 2147483647, %v3171
    %v3174 = vand.u32 2147483647, %v3172
    %v3175 = vmax.f32 %v3173, 1e-08
    %v3176 = vmax.f32 %v3174, 1e-08
    %v3177 = vrsqrt.pop %v3175
    %v3178 = vrsqrt.pop %v3176
    %3180 = vset.pattern.permute.xlu0 0
    %3181 = vperm.xlu0 %3180, %v3177
    %v3182 = vpop.permute.xlu0 %3181
    %3185 = vset.pattern.permute.xlu0 0
    %3186 = vperm.xlu0 %3185, %v3178
    %v3187 = vpop.permute.xlu0 %3186
    %v3189 = vmul.f32 %v3153, %v3182
    %v3190 = vmul.f32 %v3156, %v3187
    %s3191 = sld [smem:[#allocation2 + $0xb]]
    %v3192 = vld [vmem:[%s19] sm:$0xff]
    %v3193 = vld [vmem:[%s19 + $0x8] sm:$0xff]
    %v3194 = vld [vmem:[%s19 + $0x10] sm:$0x1]
    %v3195 = vld [vmem:[%s20] sm:$0x1]
    %v3197 = vlaneseq
    %v3198 = vshrl.u32 %v3197, 7
    %v3199 = vsub.s32 0, %v3198
    %v3200 = vrot.slane %v3195, %v3199
    %v3203 = vsel %vm225, %v3194, 0
    %3205 = vmatprep.subr.mxu0 0.0
    %3206 = vmatpush1.msra.mxu0 %v3192
    %3207 = vmatprep.subr.mxu0 0.0
    %3208 = vmatpush1.msra.mxu0 %v3193
    %3209 = vmatprep.subr.mxu0 0.0
    %3210 = vmatpush1.msra.mxu0 %v3203
    %3211 = vmatprep.subr.mxu0 0.0
    %3212 = vmatpush1.msra.mxu0 0.0
    %3213 = vmatprep.subr.mxu0 0.0
    %3214 = vmatpush1.msra.mxu0 0.0
    %3215 = vmatprep.subr.mxu0 0.0
    %3216 = vmatpush1.msra.mxu0 0.0
    %3217 = vmatprep.subr.mxu0 0.0
    %3218 = vmatpush1.msra.mxu0 0.0
    %3219 = vmatprep.subr.mxu0 0.0
    %3220 = vmatpush1.msra.mxu0 0.0
    %3221 = vmatprep.subr.mxu0 0.0
    %3222 = vmatpush1.msra.mxu0 0.0
    %3223 = vmatprep.subr.mxu0 0.0
    %3224 = vmatpush1.msra.mxu0 0.0
    %3225 = vmatprep.subr.mxu0 0.0
    %3226 = vmatpush1.msra.mxu0 0.0
    %3227 = vmatprep.subr.mxu0 0.0
    %3228 = vmatpush1.msra.mxu0 0.0
    %3229 = vmatprep.subr.mxu0 0.0
    %3230 = vmatpush1.msra.mxu0 0.0
    %3231 = vmatprep.subr.mxu0 0.0
    %3232 = vmatpush1.msra.mxu0 0.0
    %3233 = vmatprep.subr.mxu0 0.0
    %3234 = vmatpush1.msra.mxu0 0.0
    %3235 = vmatprep.subr.mxu0 0.0
    %3236 = vmatpush1.msra.mxu0 0.0
    %3237 = vmatprep.subr.mxu0 0.0
    %3238 = vmatpush1.msra.mxu0 0.0
    %3239 = vmatprep.subr.mxu0 0.0
    %3240 = vmatpush1.msra.mxu0 0.0
    %3241 = vmatprep.subr.mxu0 0.0
    %3242 = vmatpush1.msra.mxu0 0.0
    %3243 = vmatprep.subr.mxu0 0.0
    %3244 = vmatpush1.msra.mxu0 0.0
    %3245 = vmatprep.subr.mxu0 0.0
    %3246 = vmatpush1.msra.mxu0 0.0
    %3247 = vmatprep.subr.mxu0 0.0
    %3248 = vmatpush1.msra.mxu0 0.0
    %3249 = vmatprep.subr.mxu0 0.0
    %3250 = vmatpush1.msra.mxu0 0.0
    %3251 = vmatprep.subr.mxu0 0.0
    %3252 = vmatpush1.msra.mxu0 0.0
    %3253 = vmatprep.subr.mxu0 0.0
    %3254 = vmatpush1.msra.mxu0 0.0
    %3255 = vmatprep.subr.mxu0 0.0
    %3256 = vmatpush1.msra.mxu0 0.0
    %3257 = vmatprep.subr.mxu0 0.0
    %3258 = vmatpush1.msra.mxu0 0.0
    %3259 = vmatprep.subr.mxu0 0.0
    %3260 = vmatpush1.msra.mxu0 0.0
    %3261 = vmatprep.subr.mxu0 0.0
    %3262 = vmatpush1.msra.mxu0 0.0
    %3263 = vmatprep.subr.mxu0 0.0
    %3264 = vmatpush1.msra.mxu0 0.0
    %3265 = vmatprep.subr.mxu0 0.0
    %3266 = vmatpush1.msra.mxu0 0.0
    %3267 = vmatprep.subr.mxu0 0.0
    %3268 = vmatpush1.msra.mxu0 0.0
    %3269 = vmatprep.mubr.f32.mxu0 0.0
    %3270 = vmatmul.mubr.f32.gmra.mrb[0].mxu0 %v2779
    %v3271 = vpop.f32.mrb[0].mxu0
    %v3272 = vadd.f32 %v3200, %v3271
    %v3273 = vpop.f32.mrb[0].mxu0
    %3274 = vmatprep.mubr.f32.mxu0 0.0
    %3275 = vmatmul.mubr.f32.gmra.mrb[0].mxu0 %v2782
    %v3276 = vpop.f32.mrb[0].mxu0
    %v3277 = vadd.f32 %v3200, %v3276
    %v3278 = vpop.f32.mrb[0].mxu0
    %3279 = vdwg.mxu0
    %v3280 = vsub.f32 0.0, %v3272
    %v3281 = vsub.f32 0.0, %v3277
    %v3282 = vmul.f32 %v3280, 1.442695
    %v3283 = vpow.pop %v3282
    %v3284 = vmul.f32 %v3281, 1.442695
    %v3285 = vpow.pop %v3284
    %v3286 = vadd.f32 %v3283, 1.0
    %v3287 = vadd.f32 %v3285, 1.0
    %v3288 = vrcp.pop %v3286
    %v3289 = vmul.f32 1.0, %v3288
    %v3290 = vrcp.pop %v3287
    %v3291 = vmul.f32 1.0, %v3290
    %v3292 = vstv %s3191
    %v3293 = vmul.f32 %v3289, %v3292
    %v3294 = vmul.f32 %v3291, %v3292
    %v3295 = vadd.f32 %v3293, 1.1
    %v3296 = vadd.f32 %v3294, 1.1
    %v3297 = vmul.f32 %v3272, %v3272
    %v3298 = vmul.f32 %v3277, %v3277
    %v3299 = vsel %vm131, %v3297, 0.0
    %3300 = vadd.xlane.f32.xlu0 %v3299
    %v3301 = vpop.xlane.xlu0 %3300
    %v3302 = vsel %vm2625, %v3298, 0.0
    %3303 = vadd.xlane.f32.xlu0 %v3302
    %v3304 = vpop.xlane.xlu0 %3303
    %v3305 = vsub.f32 %v3301, %v3297
    %v3306 = vsub.f32 %v3304, %v3298
    %v3307 = vmax.f32 %v3305, 1e-08
    %v3308 = vmax.f32 %v3306, 1e-08
    %v3309 = vmul.f32 %v3295, %v3295
    %v3310 = vmul.f32 %v3296, %v3296
    %v3311 = vsub.f32 %v3309, 1.0
    %v3312 = vsub.f32 %v3310, 1.0
    %v3313 = vrsqrt.pop %v3311
    %v3314 = vmul.f32 %v3311, %v3313
    %vm3315 = vcmp.eq.f32.partialorder %v3311, inf
    %v3316 = vsel %vm3315, %v3311, %v3314
    %vm3317 = vcmp.eq.f32.partialorder %v3311, 0.0
    %v3318 = vand.u32 %v3311, 2147483648
    %v3319 = vsel %vm3317, %v3318, %v3316
    %v3320 = vrsqrt.pop %v3312
    %v3321 = vmul.f32 %v3312, %v3320
    %vm3322 = vcmp.eq.f32.partialorder %v3312, inf
    %v3323 = vsel %vm3322, %v3312, %v3321
    %vm3324 = vcmp.eq.f32.partialorder %v3312, 0.0
    %v3325 = vand.u32 %v3312, 2147483648
    %v3326 = vsel %vm3324, %v3325, %v3323
    %v3327 = vrsqrt.pop %v3307
    %v3328 = vrsqrt.pop %v3308
    %v3329 = vmul.f32 %v3319, %v3327
    %v3330 = vmul.f32 %v3326, %v3328
    %3332 = vset.pattern.permute.xlu0 0
    %3333 = vperm.xlu0 %3332, %v3329
    %v3334 = vpop.permute.xlu0 %3333
    %3337 = vset.pattern.permute.xlu0 0
    %3338 = vperm.xlu0 %3337, %v3330
    %v3339 = vpop.permute.xlu0 %3338
    %v3341 = vmul.f32 %v3272, %v3334
    %v3342 = vmul.f32 %v3277, %v3339
    %3344 = vset.pattern.permute.xlu0 0
    %3345 = vperm.xlu0 %3344, %v3295
    %v3346 = vpop.permute.xlu0 %3345
    %3349 = vset.pattern.permute.xlu0 0
    %3350 = vperm.xlu0 %3349, %v3296
    %v3351 = vpop.permute.xlu0 %3350
    %v3353 = vsel %vm126, %v3346, %v3341
    %v3354 = vsel %vm126, %v3351, %v3342
    %s3355 = sld [smem:[#allocation2 + $0xc]]
    %v3356 = vld [vmem:[%s21] sm:$0xff]
    %v3357 = vld [vmem:[%s21 + $0x8] sm:$0xff]
    %v3358 = vld [vmem:[%s21 + $0x10] sm:$0x1]
    %v3359 = vld [vmem:[%s22] sm:$0x1]
    %v3361 = vlaneseq
    %v3362 = vshrl.u32 %v3361, 7
    %v3363 = vsub.s32 0, %v3362
    %v3364 = vrot.slane %v3359, %v3363
    %v3367 = vsel %vm225, %v3358, 0
    %3369 = vmatprep.subr.mxu0 0.0
    %3370 = vmatpush1.msra.mxu0 %v3356
    %3371 = vmatprep.subr.mxu0 0.0
    %3372 = vmatpush1.msra.mxu0 %v3357
    %3373 = vmatprep.subr.mxu0 0.0
    %3374 = vmatpush1.msra.mxu0 %v3367
    %3375 = vmatprep.subr.mxu0 0.0
    %3376 = vmatpush1.msra.mxu0 0.0
    %3377 = vmatprep.subr.mxu0 0.0
    %3378 = vmatpush1.msra.mxu0 0.0
    %3379 = vmatprep.subr.mxu0 0.0
    %3380 = vmatpush1.msra.mxu0 0.0
    %3381 = vmatprep.subr.mxu0 0.0
    %3382 = vmatpush1.msra.mxu0 0.0
    %3383 = vmatprep.subr.mxu0 0.0
    %3384 = vmatpush1.msra.mxu0 0.0
    %3385 = vmatprep.subr.mxu0 0.0
    %3386 = vmatpush1.msra.mxu0 0.0
    %3387 = vmatprep.subr.mxu0 0.0
    %3388 = vmatpush1.msra.mxu0 0.0
    %3389 = vmatprep.subr.mxu0 0.0
    %3390 = vmatpush1.msra.mxu0 0.0
    %3391 = vmatprep.subr.mxu0 0.0
    %3392 = vmatpush1.msra.mxu0 0.0
    %3393 = vmatprep.subr.mxu0 0.0
    %3394 = vmatpush1.msra.mxu0 0.0
    %3395 = vmatprep.subr.mxu0 0.0
    %3396 = vmatpush1.msra.mxu0 0.0
    %3397 = vmatprep.subr.mxu0 0.0
    %3398 = vmatpush1.msra.mxu0 0.0
    %3399 = vmatprep.subr.mxu0 0.0
    %3400 = vmatpush1.msra.mxu0 0.0
    %3401 = vmatprep.subr.mxu0 0.0
    %3402 = vmatpush1.msra.mxu0 0.0
    %3403 = vmatprep.subr.mxu0 0.0
    %3404 = vmatpush1.msra.mxu0 0.0
    %3405 = vmatprep.subr.mxu0 0.0
    %3406 = vmatpush1.msra.mxu0 0.0
    %3407 = vmatprep.subr.mxu0 0.0
    %3408 = vmatpush1.msra.mxu0 0.0
    %3409 = vmatprep.subr.mxu0 0.0
    %3410 = vmatpush1.msra.mxu0 0.0
    %3411 = vmatprep.subr.mxu0 0.0
    %3412 = vmatpush1.msra.mxu0 0.0
    %3413 = vmatprep.subr.mxu0 0.0
    %3414 = vmatpush1.msra.mxu0 0.0
    %3415 = vmatprep.subr.mxu0 0.0
    %3416 = vmatpush1.msra.mxu0 0.0
    %3417 = vmatprep.subr.mxu0 0.0
    %3418 = vmatpush1.msra.mxu0 0.0
    %3419 = vmatprep.subr.mxu0 0.0
    %3420 = vmatpush1.msra.mxu0 0.0
    %3421 = vmatprep.subr.mxu0 0.0
    %3422 = vmatpush1.msra.mxu0 0.0
    %3423 = vmatprep.subr.mxu0 0.0
    %3424 = vmatpush1.msra.mxu0 0.0
    %3425 = vmatprep.subr.mxu0 0.0
    %3426 = vmatpush1.msra.mxu0 0.0
    %3427 = vmatprep.subr.mxu0 0.0
    %3428 = vmatpush1.msra.mxu0 0.0
    %3429 = vmatprep.subr.mxu0 0.0
    %3430 = vmatpush1.msra.mxu0 0.0
    %3431 = vmatprep.subr.mxu0 0.0
    %3432 = vmatpush1.msra.mxu0 0.0
    %3433 = vmatprep.mubr.f32.mxu0 0.0
    %3434 = vmatmul.mubr.f32.gmra.mrb[0].mxu0 %v2779
    %v3435 = vpop.f32.mrb[0].mxu0
    %v3436 = vadd.f32 %v3364, %v3435
    %v3437 = vpop.f32.mrb[0].mxu0
    %3438 = vmatprep.mubr.f32.mxu0 0.0
    %3439 = vmatmul.mubr.f32.gmra.mrb[0].mxu0 %v2782
    %v3440 = vpop.f32.mrb[0].mxu0
    %v3441 = vadd.f32 %v3364, %v3440
    %v3442 = vpop.f32.mrb[0].mxu0
    %3443 = vdwg.mxu0
    %v3444 = vsub.f32 0.0, %v3436
    %v3445 = vsub.f32 0.0, %v3441
    %v3446 = vmul.f32 %v3444, 1.442695
    %v3447 = vpow.pop %v3446
    %v3448 = vmul.f32 %v3445, 1.442695
    %v3449 = vpow.pop %v3448
    %v3450 = vadd.f32 %v3447, 1.0
    %v3451 = vadd.f32 %v3449, 1.0
    %v3452 = vrcp.pop %v3450
    %v3453 = vmul.f32 1.0, %v3452
    %v3454 = vrcp.pop %v3451
    %v3455 = vmul.f32 1.0, %v3454
    %v3456 = vstv %s3355
    %v3457 = vmul.f32 %v3453, %v3456
    %v3458 = vmul.f32 %v3455, %v3456
    %v3459 = vadd.f32 %v3457, 1.1
    %v3460 = vadd.f32 %v3458, 1.1
    %v3461 = vmul.f32 %v3436, %v3436
    %v3462 = vmul.f32 %v3441, %v3441
    %v3463 = vsel %vm131, %v3461, 0.0
    %3464 = vadd.xlane.f32.xlu0 %v3463
    %v3465 = vpop.xlane.xlu0 %3464
    %v3466 = vsel %vm2625, %v3462, 0.0
    %3467 = vadd.xlane.f32.xlu0 %v3466
    %v3468 = vpop.xlane.xlu0 %3467
    %v3469 = vsub.f32 %v3465, %v3461
    %v3470 = vsub.f32 %v3468, %v3462
    %v3471 = vmax.f32 %v3469, 1e-08
    %v3472 = vmax.f32 %v3470, 1e-08
    %v3473 = vmul.f32 %v3459, %v3459
    %v3474 = vmul.f32 %v3460, %v3460
    %v3475 = vsub.f32 %v3473, 1.0
    %v3476 = vsub.f32 %v3474, 1.0
    %v3477 = vrsqrt.pop %v3475
    %v3478 = vmul.f32 %v3475, %v3477
    %vm3479 = vcmp.eq.f32.partialorder %v3475, inf
    %v3480 = vsel %vm3479, %v3475, %v3478
    %vm3481 = vcmp.eq.f32.partialorder %v3475, 0.0
    %v3482 = vand.u32 %v3475, 2147483648
    %v3483 = vsel %vm3481, %v3482, %v3480
    %v3484 = vrsqrt.pop %v3476
    %v3485 = vmul.f32 %v3476, %v3484
    %vm3486 = vcmp.eq.f32.partialorder %v3476, inf
    %v3487 = vsel %vm3486, %v3476, %v3485
    %vm3488 = vcmp.eq.f32.partialorder %v3476, 0.0
    %v3489 = vand.u32 %v3476, 2147483648
    %v3490 = vsel %vm3488, %v3489, %v3487
    %v3491 = vrsqrt.pop %v3471
    %v3492 = vrsqrt.pop %v3472
    %v3493 = vmul.f32 %v3483, %v3491
    %v3494 = vmul.f32 %v3490, %v3492
    %3496 = vset.pattern.permute.xlu0 0
    %3497 = vperm.xlu0 %3496, %v3493
    %v3498 = vpop.permute.xlu0 %3497
    %3501 = vset.pattern.permute.xlu0 0
    %3502 = vperm.xlu0 %3501, %v3494
    %v3503 = vpop.permute.xlu0 %3502
    %v3505 = vmul.f32 %v3436, %v3498
    %v3506 = vmul.f32 %v3441, %v3503
    %3508 = vset.pattern.permute.xlu0 0
    %3509 = vperm.xlu0 %3508, %v3459
    %v3510 = vpop.permute.xlu0 %3509
    %3513 = vset.pattern.permute.xlu0 0
    %3514 = vperm.xlu0 %3513, %v3460
    %v3515 = vpop.permute.xlu0 %3514
    %v3517 = vsel %vm126, %v3510, %v3505
    %v3518 = vsel %vm126, %v3515, %v3506
    %v3519 = vsub.f32 0.0, %v3353
    %v3520 = vsub.f32 0.0, %v3354
    %v3521 = vsel %vm126, %v3519, %v3341
    %v3522 = vsel %vm126, %v3520, %v3342
    %v3524 = vsel %vm131, %v3521, 0
    %v3527 = vsel %vm131, %v3522, 0
    %v3530 = vsel %vm131, %v3517, 0
    %v3533 = vsel %vm131, %v3518, 0
    %3535 = vmatprep.subr.mxu0 0.0
    %3536 = vmatpush1.xpose.msra.mxu0 %v3530
    %3537 = vmatprep.subr.mxu0 0.0
    %3538 = vmatpush1.xpose.msra.mxu0 %v3533
    %3539 = vmatprep.subr.mxu0 0.0
    %3540 = vmatpush1.xpose.msra.mxu0 0.0
    %3541 = vmatprep.subr.mxu0 0.0
    %3542 = vmatpush1.xpose.msra.mxu0 0.0
    %3543 = vmatprep.subr.mxu0 0.0
    %3544 = vmatpush1.xpose.msra.mxu0 0.0
    %3545 = vmatprep.subr.mxu0 0.0
    %3546 = vmatpush1.xpose.msra.mxu0 0.0
    %3547 = vmatprep.subr.mxu0 0.0
    %3548 = vmatpush1.xpose.msra.mxu0 0.0
    %3549 = vmatprep.subr.mxu0 0.0
    %3550 = vmatpush1.xpose.msra.mxu0 0.0
    %3551 = vmatprep.subr.mxu0 0.0
    %3552 = vmatpush1.xpose.msra.mxu0 0.0
    %3553 = vmatprep.subr.mxu0 0.0
    %3554 = vmatpush1.xpose.msra.mxu0 0.0
    %3555 = vmatprep.subr.mxu0 0.0
    %3556 = vmatpush1.xpose.msra.mxu0 0.0
    %3557 = vmatprep.subr.mxu0 0.0
    %3558 = vmatpush1.xpose.msra.mxu0 0.0
    %3559 = vmatprep.subr.mxu0 0.0
    %3560 = vmatpush1.xpose.msra.mxu0 0.0
    %3561 = vmatprep.subr.mxu0 0.0
    %3562 = vmatpush1.xpose.msra.mxu0 0.0
    %3563 = vmatprep.subr.mxu0 0.0
    %3564 = vmatpush1.xpose.msra.mxu0 0.0
    %3565 = vmatprep.subr.mxu0 0.0
    %3566 = vmatpush1.xpose.msra.mxu0 0.0
    %3567 = vmatprep.subr.mxu0 0.0
    %3568 = vmatpush1.xpose.msra.mxu0 0.0
    %3569 = vmatprep.subr.mxu0 0.0
    %3570 = vmatpush1.xpose.msra.mxu0 0.0
    %3571 = vmatprep.subr.mxu0 0.0
    %3572 = vmatpush1.xpose.msra.mxu0 0.0
    %3573 = vmatprep.subr.mxu0 0.0
    %3574 = vmatpush1.xpose.msra.mxu0 0.0
    %3575 = vmatprep.subr.mxu0 0.0
    %3576 = vmatpush1.xpose.msra.mxu0 0.0
    %3577 = vmatprep.subr.mxu0 0.0
    %3578 = vmatpush1.xpose.msra.mxu0 0.0
    %3579 = vmatprep.subr.mxu0 0.0
    %3580 = vmatpush1.xpose.msra.mxu0 0.0
    %3581 = vmatprep.subr.mxu0 0.0
    %3582 = vmatpush1.xpose.msra.mxu0 0.0
    %3583 = vmatprep.subr.mxu0 0.0
    %3584 = vmatpush1.xpose.msra.mxu0 0.0
    %3585 = vmatprep.subr.mxu0 0.0
    %3586 = vmatpush1.xpose.msra.mxu0 0.0
    %3587 = vmatprep.subr.mxu0 0.0
    %3588 = vmatpush1.xpose.msra.mxu0 0.0
    %3589 = vmatprep.subr.mxu0 0.0
    %3590 = vmatpush1.xpose.msra.mxu0 0.0
    %3591 = vmatprep.subr.mxu0 0.0
    %3592 = vmatpush1.xpose.msra.mxu0 0.0
    %3593 = vmatprep.subr.mxu0 0.0
    %3594 = vmatpush1.xpose.msra.mxu0 0.0
    %3595 = vmatprep.subr.mxu0 0.0
    %3596 = vmatpush1.xpose.msra.mxu0 0.0
    %3597 = vmatprep.subr.mxu0 0.0
    %3598 = vmatpush1.xpose.msra.mxu0 0.0
    %3599 = vmatprep.mubr.f32.mxu0 0.0
    %3600 = vmatmul.mubr.f32.gmra.mrb[0].mxu0 %v3524
    %v3601 = vpop.f32.mrb[0].mxu0
    %v3602 = vadd.f32 0.0, %v3601
    %v3603 = vpop.f32.mrb[0].mxu0
    %3604 = vmatprep.mubr.f32.mxu0 0.0
    %3605 = vmatmul.mubr.f32.gmra.mrb[0].mxu0 %v3527
    %v3606 = vpop.f32.mrb[0].mxu0
    %v3607 = vadd.f32 0.0, %v3606
    %v3608 = vpop.f32.mrb[0].mxu0
    %3609 = vdwg.mxu0
    %v3610 = vmul.f32 %v3602, 2.0
    %v3611 = vmul.f32 %v3607, 2.0
    %v3612 = vadd.f32 %v3610, 2.0
    %v3613 = vadd.f32 %v3611, 2.0
    %s3614 = sld [smem:[#allocation2 + $0xd]]
    %v3615 = vstv %s3614
    %v3616 = vmul.f32 %v3612, %v3615
    %v3617 = vmul.f32 %v3613, %v3615
    %s3618 = sld [smem:[#allocation2 + $0xe]]
    %v3619 = vstv %s3618
    %v3620 = vadd.f32 %v3616, %v3619
    %v3621 = vadd.f32 %v3617, %v3619
    %v3622 = vsub.f32 0.0, %v3620
    %v3623 = vsub.f32 0.0, %v3621
    %v3624 = vmul.f32 %v3622, 1.442695
    %v3625 = vpow.pop %v3624
    %v3626 = vmul.f32 %v3623, 1.442695
    %v3627 = vpow.pop %v3626
    %v3628 = vadd.f32 %v3625, 1.0
    %v3629 = vadd.f32 %v3627, 1.0
    %v3630 = vrcp.pop %v3628
    %v3631 = vmul.f32 1.0, %v3630
    %v3632 = vrcp.pop %v3629
    %v3633 = vmul.f32 1.0, %v3632
    %v3634 = vmul.f32 %v3631, %v2760
    %v3635 = vmul.f32 %v3633, %v2763
    %v3636 = vpack.c.bf16 %v3635, %v3634
    %v3637 = vpack.c.bf16 %v3190, %v3189
    %3639 = vrot.lane.b32.xlu0 %v3637, 127
    %v3640 = vpop.permute.xlu0 %3639
    %v3642 = vsel %vm2462, %v3636, 0
    %v3645 = vsel %vm3114, %v3640, 0
    %3647 = vmatprep.subr.bf16.mxu0 0
    %3648 = vmatpush1.bf16.msra.mxu0 %v3645
    %3649 = vmatprep.subr.bf16.mxu0 0
    %3650 = vmatpush1.bf16.msra.mxu0 0
    %3651 = vmatprep.subr.bf16.mxu0 0
    %3652 = vmatpush1.bf16.msra.mxu0 0
    %3653 = vmatprep.subr.bf16.mxu0 0
    %3654 = vmatpush1.bf16.msra.mxu0 0
    %3655 = vmatprep.subr.bf16.mxu0 0
    %3656 = vmatpush1.bf16.msra.mxu0 0
    %3657 = vmatprep.subr.bf16.mxu0 0
    %3658 = vmatpush1.bf16.msra.mxu0 0
    %3659 = vmatprep.subr.bf16.mxu0 0
    %3660 = vmatpush1.bf16.msra.mxu0 0
    %3661 = vmatprep.subr.bf16.mxu0 0
    %3662 = vmatpush1.bf16.msra.mxu0 0
    %3663 = vmatprep.subr.bf16.mxu0 0
    %3664 = vmatpush1.bf16.msra.mxu0 0
    %3665 = vmatprep.subr.bf16.mxu0 0
    %3666 = vmatpush1.bf16.msra.mxu0 0
    %3667 = vmatprep.subr.bf16.mxu0 0
    %3668 = vmatpush1.bf16.msra.mxu0 0
    %3669 = vmatprep.subr.bf16.mxu0 0
    %3670 = vmatpush1.bf16.msra.mxu0 0
    %3671 = vmatprep.subr.bf16.mxu0 0
    %3672 = vmatpush1.bf16.msra.mxu0 0
    %3673 = vmatprep.subr.bf16.mxu0 0
    %3674 = vmatpush1.bf16.msra.mxu0 0
    %3675 = vmatprep.subr.bf16.mxu0 0
    %3676 = vmatpush1.bf16.msra.mxu0 0
    %3677 = vmatprep.subr.bf16.mxu0 0
    %3678 = vmatpush1.bf16.msra.mxu0 0
    %3679 = vmatprep.mubr.bf16.mxu0 0
    %3680 = vmatmul.mubr.bf16.gmra.mrb[0].mxu0 %v3642
    %v3681 = vpop.f32.mrb[0].mxu0
    %v3682 = vadd.f32 0.0, %v3681
    %v3683 = vpop.f32.mrb[0].mxu0
    %v3684 = vpop.f32.mrb[0].mxu0
    %v3685 = vadd.f32 0.0, %v3684
    %v3686 = vpop.f32.mrb[0].mxu0
    %3687 = vdwg.mxu0
    %v3688 = vmul.f32 %v3682, 10.0
    %v3689 = vmul.f32 %v3685, 10.0
    %vm3690 = vcmask 23552
    %v3691 = vsel %vm3690, %v3688, -inf
    %3692 = vmax.xlane.f32.xlu0 %v3691
    %v3693 = vpop.xlane.xlu0 %3692
    %vm3694 = vcmask 17408
    %v3695 = vsel %vm3694, %v3689, -inf
    %3696 = vmax.xlane.f32.xlu0 %v3695
    %v3697 = vpop.xlane.xlu0 %3696
    %v3698 = vsub.f32 %v3688, %v3693
    %v3699 = vsub.f32 %v3689, %v3697
    %v3700 = vmul.f32 %v3698, 1.442695
    %v3701 = vpow.pop %v3700
    %v3702 = vmul.f32 %v3699, 1.442695
    %v3703 = vpow.pop %v3702
    %v3704 = vsel %vm3690, %v3701, 0.0
    %3705 = vadd.xlane.f32.xlu0 %v3704
    %v3706 = vpop.xlane.xlu0 %3705
    %v3707 = vsel %vm3694, %v3703, 0.0
    %3708 = vadd.xlane.f32.xlu0 %v3707
    %v3709 = vpop.xlane.xlu0 %3708
    %v3710 = vrcp.pop %v3706
    %v3711 = vrcp.pop %v3709
    %v3712 = vmul.f32 %v3701, %v3710
    %v3713 = vmul.f32 %v3703, %v3711
    %3714 = vxpose.xlu0.b32.start [1/16] %v3712, 128
    %3715 = vxpose.xlu0.b32.cont [2/16] %v3713, 128
    %3716 = vxpose.xlu0.b32.cont [3/16] 0.0, 128
    %3717 = vxpose.xlu0.b32.cont [4/16] 0.0, 128
    %3718 = vxpose.xlu0.b32.cont [5/16] 0.0, 128
    %3719 = vxpose.xlu0.b32.cont [6/16] 0.0, 128
    %3720 = vxpose.xlu0.b32.cont [7/16] 0.0, 128
    %3721 = vxpose.xlu0.b32.cont [8/16] 0.0, 128
    %3722 = vxpose.xlu0.b32.cont [9/16] 0.0, 128
    %3723 = vxpose.xlu0.b32.cont [10/16] 0.0, 128
    %3724 = vxpose.xlu0.b32.cont [11/16] 0.0, 128
    %3725 = vxpose.xlu0.b32.cont [12/16] 0.0, 128
    %3726 = vxpose.xlu0.b32.cont [13/16] 0.0, 128
    %3727 = vxpose.xlu0.b32.cont [14/16] 0.0, 128
    %3728 = vxpose.xlu0.b32.cont [15/16] 0.0, 128
    %3729 = vxpose.xlu0.b32.end [16/16] 0.0, 128
    %v3730 = vpop.trf.xlu0
    %v3731 = vpop.trf.xlu0
    %v3732 = vpop.trf.xlu0
    %v3733 = vpop.trf.xlu0
    %v3734 = vpop.trf.xlu0
    %v3735 = vpop.trf.xlu0
    %v3736 = vpop.trf.xlu0
    %v3737 = vpop.trf.xlu0
    %v3738 = vpop.trf.xlu0
    %v3739 = vpop.trf.xlu0
    %v3740 = vpop.trf.xlu0
    %v3741 = vpop.trf.xlu0
    %v3742 = vpop.trf.xlu0
    %v3743 = vpop.trf.xlu0
    %v3744 = vpop.trf.xlu0
    %v3745 = vpop.trf.xlu0
    %v3747 = vsel %vm2462, %v3730, 0
    %vm3749 = vcmask 1041408
    %v3750 = vsel %vm3749, %v2652, 0
    %3752 = vmatprep.subr.mxu0 0.0
    %3753 = vmatpush1.msra.mxu0 %v2651
    %3754 = vmatprep.subr.mxu0 0.0
    %3755 = vmatpush1.msra.mxu0 %v3750
    %3756 = vmatprep.subr.mxu0 0.0
    %3757 = vmatpush1.msra.mxu0 0.0
    %3758 = vmatprep.subr.mxu0 0.0
    %3759 = vmatpush1.msra.mxu0 0.0
    %3760 = vmatprep.subr.mxu0 0.0
    %3761 = vmatpush1.msra.mxu0 0.0
    %3762 = vmatprep.subr.mxu0 0.0
    %3763 = vmatpush1.msra.mxu0 0.0
    %3764 = vmatprep.subr.mxu0 0.0
    %3765 = vmatpush1.msra.mxu0 0.0
    %3766 = vmatprep.subr.mxu0 0.0
    %3767 = vmatpush1.msra.mxu0 0.0
    %3768 = vmatprep.subr.mxu0 0.0
    %3769 = vmatpush1.msra.mxu0 0.0
    %3770 = vmatprep.subr.mxu0 0.0
    %3771 = vmatpush1.msra.mxu0 0.0
    %3772 = vmatprep.subr.mxu0 0.0
    %3773 = vmatpush1.msra.mxu0 0.0
    %3774 = vmatprep.subr.mxu0 0.0
    %3775 = vmatpush1.msra.mxu0 0.0
    %3776 = vmatprep.subr.mxu0 0.0
    %3777 = vmatpush1.msra.mxu0 0.0
    %3778 = vmatprep.subr.mxu0 0.0
    %3779 = vmatpush1.msra.mxu0 0.0
    %3780 = vmatprep.subr.mxu0 0.0
    %3781 = vmatpush1.msra.mxu0 0.0
    %3782 = vmatprep.subr.mxu0 0.0
    %3783 = vmatpush1.msra.mxu0 0.0
    %3784 = vmatprep.subr.mxu0 0.0
    %3785 = vmatpush1.msra.mxu0 0.0
    %3786 = vmatprep.subr.mxu0 0.0
    %3787 = vmatpush1.msra.mxu0 0.0
    %3788 = vmatprep.subr.mxu0 0.0
    %3789 = vmatpush1.msra.mxu0 0.0
    %3790 = vmatprep.subr.mxu0 0.0
    %3791 = vmatpush1.msra.mxu0 0.0
    %3792 = vmatprep.subr.mxu0 0.0
    %3793 = vmatpush1.msra.mxu0 0.0
    %3794 = vmatprep.subr.mxu0 0.0
    %3795 = vmatpush1.msra.mxu0 0.0
    %3796 = vmatprep.subr.mxu0 0.0
    %3797 = vmatpush1.msra.mxu0 0.0
    %3798 = vmatprep.subr.mxu0 0.0
    %3799 = vmatpush1.msra.mxu0 0.0
    %3800 = vmatprep.subr.mxu0 0.0
    %3801 = vmatpush1.msra.mxu0 0.0
    %3802 = vmatprep.subr.mxu0 0.0
    %3803 = vmatpush1.msra.mxu0 0.0
    %3804 = vmatprep.subr.mxu0 0.0
    %3805 = vmatpush1.msra.mxu0 0.0
    %3806 = vmatprep.subr.mxu0 0.0
    %3807 = vmatpush1.msra.mxu0 0.0
    %3808 = vmatprep.subr.mxu0 0.0
    %3809 = vmatpush1.msra.mxu0 0.0
    %3810 = vmatprep.subr.mxu0 0.0
    %3811 = vmatpush1.msra.mxu0 0.0
    %3812 = vmatprep.subr.mxu0 0.0
    %3813 = vmatpush1.msra.mxu0 0.0
    %3814 = vmatprep.subr.mxu0 0.0
    %3815 = vmatpush1.msra.mxu0 0.0
    %3816 = vmatprep.mubr.f32.mxu0 0.0
    %3817 = vmatmul.mubr.f32.gmra.mrb[0].mxu0 %v3747
    %v3818 = vpop.f32.mrb[0].mxu0
    %v3819 = vadd.f32 0.0, %v3818
    %v3820 = vpop.f32.mrb[0].mxu0
    %3821 = vdwg.mxu0
    %v3822 = vmul.f32 %v3819, %v3819
    %vm3823 = vcmask 133120
    %v3824 = vsel %vm3823, %v3822, 0.0
    %3825 = vadd.xlane.f32.xlu0 %v3824
    %v3826 = vpop.xlane.xlu0 %3825
    %v3827 = vmul.f32 %v3819, 2.0
    %v3828 = vmul.f32 %v3827, %v3819
    %v3829 = vsub.f32 %v3826, %v3828
    %v3830 = vand.u32 2147483647, %v3829
    %v3831 = vmax.f32 %v3830, 1e-08
    %v3832 = vrsqrt.pop %v3831
    %3834 = vset.pattern.permute.xlu0 0
    %3835 = vperm.xlu0 %3834, %v3832
    %v3836 = vpop.permute.xlu0 %3835
    %v3838 = vmul.f32 %v3819, %v3836
    %3839 = vst.msk [vmem:[#allocation10] sm:$0x7] %vm3823, %v3838
    %3840 = vst.msk [vmem:[%s28] sm:$0xff] %vm3690, %v3712
    %3841 = vst.msk [vmem:[%s28 + $0x8] sm:$0x3] %vm3694, %v3713
    %v3842 = vsel %vm3823, %v3838, 0.0
    %v3843 = vrot.slane %v3842, 4
    %v3844 = vadd.f32 %v3842, %v3843
    %v3845 = vrot.slane %v3844, 2
    %v3846 = vadd.f32 %v3844, %v3845
    %v3847 = vrot.slane %v3846, 1
    %v3848 = vadd.f32 %v3846, %v3847
    %v3849 = vmul.f32 %v3848, %v3848
    %v3850 = vsel %vm131, %v3849, 0.0
    %3851 = vadd.xlane.f32.xlu0 %v3850
    %v3852 = vpop.xlane.xlu0 %3851
    %v3853 = vmul.f32 %v3848, 2.0
    %v3854 = vmul.f32 %v3853, %v3848
    %v3855 = vsub.f32 %v3852, %v3854
    %v3856 = vand.u32 2147483647, %v3855
    %v3857 = vmax.f32 %v3856, 1e-08
    %v3858 = vrsqrt.pop %v3857
    %3860 = vset.pattern.permute.xlu0 0
    %3861 = vperm.xlu0 %3860, %v3858
    %v3862 = vpop.permute.xlu0 %3861
    %v3864 = vmul.f32 %v3848, %v3862
    %vm3865 = vcmask 131072
    %3866 = vst.msk [vmem:[#allocation12] sm:$0x1] %vm3865, %v3864
    // Predicated region
    $region106: #{tpu_custom_call.1} parent=1 // pred_check
      _
    $region107: #{tpu_custom_call.1} parent=1 // pred_check_branch
      %3868 = sbr.rel (0) target = $region109
    $region108: #{tpu_custom_call.1} parent=1 // pred_region
      _
    $region109: #{tpu_custom_call.1} parent=1 // pred_fallthru
      _
    // Predicated region
    $region110: #{tpu_custom_call.1} parent=1 // pred_check
      _
    $region111: #{tpu_custom_call.1} parent=1 // pred_check_branch
      %3870 = sbr.rel (0) target = $region113
    $region112: #{tpu_custom_call.1} parent=1 // pred_region
      %s3872 = ssub.s32 256, 256
      %3873 = vsyncadd [#allocation4], %s3872
      %s3874 = sshll.u32 [#allocation9], 4
      %s3875 = int_to_ptr.vmem [resolvable:$true] %s3874
      %3880 = dma.vmem_to_hbm [thread:$0]  %s3875, 256, %s24, [#allocation4], 128, 128, 8
    $region113: #{tpu_custom_call.1} parent=1 // pred_fallthru
      _
    // Predicated region
    $region114: #{tpu_custom_call.1} parent=1 // pred_check
      _
    $region115: #{tpu_custom_call.1} parent=1 // pred_check_branch
      %3882 = sbr.rel (0) target = $region117
    $region116: #{tpu_custom_call.1} parent=1 // pred_region
      %s3884 = ssub.s32 64, 64
      %3885 = vsyncadd [#allocation11], %s3884
      %s3887 = sshll.u32 [#allocation10], 4
      %s3888 = int_to_ptr.vmem [resolvable:$true] %s3887
      %3890 = dma.vmem_to_hbm [thread:$0]  %s3888, 64, %s25, [#allocation11]
    $region117: #{tpu_custom_call.1} parent=1 // pred_fallthru
      _
    // Predicated region
    $region118: #{tpu_custom_call.1} parent=1 // pred_check
      _
    $region119: #{tpu_custom_call.1} parent=1 // pred_check_branch
      %3892 = sbr.rel (0) target = $region121
    $region120: #{tpu_custom_call.1} parent=1 // pred_region
      %s3894 = ssub.s32 16, 16
      %3895 = vsyncadd [#allocation11], %s3894
      %s3897 = sshll.u32 [#allocation12], 4
      %s3898 = int_to_ptr.vmem [resolvable:$true] %s3897
      %3900 = dma.vmem_to_hbm [thread:$0]  %s3898, 16, %s26, [#allocation11]
    $region121: #{tpu_custom_call.1} parent=1 // pred_fallthru
      _
    // Predicated region
    $region122: #{tpu_custom_call.1} parent=1 // pred_check
      _
    $region123: #{tpu_custom_call.1} parent=1 // pred_check_branch
      %3902 = sbr.rel (0) target = $region125
    $region124: #{tpu_custom_call.1} parent=1 // pred_region
      _
    $region125: #{tpu_custom_call.1} parent=1 // pred_fallthru
      _
    // Predicated region
    $region126: #{tpu_custom_call.1} parent=1 // pred_check
      _
    $region127: #{tpu_custom_call.1} parent=1 // pred_check_branch
      %3904 = sbr.rel (0) target = $region129
    $region128: #{tpu_custom_call.1} parent=1 // pred_region
      _
    $region129: #{tpu_custom_call.1} parent=1 // pred_fallthru
      _
    // Predicated region
    $region130: #{tpu_custom_call.1} parent=1 // pred_check
      _
    $region131: #{tpu_custom_call.1} parent=1 // pred_check_branch
      %3906 = sbr.rel (0) target = $region133
    $region132: #{tpu_custom_call.1} parent=1 // pred_region
      _
    $region133: #{tpu_custom_call.1} parent=1 // pred_fallthru
      _
    // Predicated region
    $region134: #{tpu_custom_call.1} parent=1 // pred_check
      _
    $region135: #{tpu_custom_call.1} parent=1 // pred_check_branch
      %3908 = sbr.rel (0) target = $region137
    $region136: #{tpu_custom_call.1} parent=1 // pred_region
      %3909 = dma.done [#allocation4], 256
    $region137: #{tpu_custom_call.1} parent=1 // pred_fallthru
      _
    // Predicated region
    $region138: #{tpu_custom_call.1} parent=1 // pred_check
      _
    $region139: #{tpu_custom_call.1} parent=1 // pred_check_branch
      %3911 = sbr.rel (0) target = $region141
    $region140: #{tpu_custom_call.1} parent=1 // pred_region
      %3912 = dma.done [#allocation11], 64
    $region141: #{tpu_custom_call.1} parent=1 // pred_fallthru
      _
    // Predicated region
    $region142: #{tpu_custom_call.1} parent=1 // pred_check
      _
    $region143: #{tpu_custom_call.1} parent=1 // pred_check_branch
      %3914 = sbr.rel (0) target = $region145
    $region144: #{tpu_custom_call.1} parent=1 // pred_region
      %3915 = dma.done [#allocation11], 16
    $region145: #{tpu_custom_call.1} parent=1 // pred_fallthru
      _
    // Predicated region
    $region146: #{tpu_custom_call.1} parent=1 // pred_check
      _
    $region147: #{tpu_custom_call.1} parent=1 // pred_check_branch
      %3917 = sbr.rel (0) target = $region149
    $region148: #{tpu_custom_call.1} parent=1 // pred_region
      _
    $region149: #{tpu_custom_call.1} parent=1 // pred_fallthru
      _
    // Predicated region
    $region150: #{tpu_custom_call.1} parent=1 // pred_check
      _
    $region151: #{tpu_custom_call.1} parent=1 // pred_check_branch
      %3919 = sbr.rel (0) target = $region153
    $region152: #{tpu_custom_call.1} parent=1 // pred_region
      _
    $region153: #{tpu_custom_call.1} parent=1 // pred_fallthru
      _
    %3920 = vsyncpa [#allocation3], 1
    %3921 = vsyncpa [#allocation8], 1
    %3922 = vsyncpa [#allocation4], 1
    %3923 = vsyncpa [#allocation11], 1
    %3924 = vsyncpa [#allocation5], 1

</llo_original>
